<compile_context>
chip_gen: v7x
topology: tpu7x:2x2x1
jax: 0.10.0
libtpu: 0.0.40
codegen_flags: <defaults>
</compile_context>

<pallas_src>
import math
from functools import partial

import jax
import jax.numpy as jnp
from jax.experimental import pallas as pl
from jax.experimental.pallas import tpu as pltpu

# --- small, forward-consistent hyper-parameters ----------------------------
LOOKBACK_W = 32      # embed_dim of the MultiheadAttention
NUM_SERIES = 4
FORECAST_H = 8       # unused in forward
NUM_ENCODERS = 2
NUM_HEADS = 4
D_MODEL = 16         # unused in forward (fc_pca / fc_pc_inv never called)
FF_DIM = 64          # unused in forward (fc_1 / fc_2 never called)
BATCH = 8

HEAD_DIM = LOOKBACK_W // NUM_HEADS


# --- single fused Pallas kernel: layout handling + both encoder layers ------
def _fused_transformer_kernel(x_ref, eye_s_ref, bias_ref, wqkv_ref, bqkv_ref,
                              wlast_ref, blast_ref, o_ref,
                              q_st_ref, k_st_ref, v_st_ref, attn_ref,
                              *, num_encoders, num_heads, head_dim):
    B, W, S = x_ref.shape
    H, Dh = num_heads, head_dim
    R = B * S                      # rows of the 2-D activation layout, ordered (b, s)

    x = x_ref[...]                                     # (B, W, S)  module layout
    seq_last = x[:, W - 1:W, :]                        # (B, 1, S)
    h3d = x - seq_last                                 # (B, W, S)

    # (B, W, S) -> (B*S, W) relayout on the MXU via a batched identity matmul:
    # out[b, s, w] = sum_j eye[s, j] * h3d[b, w, j] == h3d[b, w, s].
    # TODO(synk): replace with jnp.swapaxes(x, 1, 2) once Mosaic lowers batched
    # minor-dim transposes for these tiny shapes.
    h_bsw = jnp.einsum("bij,bkj->bik", eye_s_ref[...], h3d,
                       preferred_element_type=jnp.float32)      # (B, S, W)
    h2d = h_bsw.reshape(R, W)                                   # rows (b, s)

    neg_bias = bias_ref[...]       # (H*R, H*R) additive mask: same (head, series) groups

    # 1/sqrt(head_dim) is pre-folded into the q columns of wqkv (init_params).
    qkv = jnp.dot(h2d, wqkv_ref[0], preferred_element_type=jnp.float32) + bqkv_ref[0]

    attn2d = None
    for l in range(num_encoders):                      # static unroll over layers
        # Stack heads along rows via scratch stores -> lane-dense (H*R, Dh)
        # operands; replaces the old 4-iteration per-head einsum loop.
        for h in range(H):
            q_st_ref[h * R:(h + 1) * R, :] = qkv[:, h * Dh:(h + 1) * Dh]
            k_st_ref[h * R:(h + 1) * R, :] = qkv[:, W + h * Dh:W + (h + 1) * Dh]
            v_st_ref[h * R:(h + 1) * R, :] = qkv[:, 2 * W + h * Dh:2 * W + (h + 1) * Dh]
        q_st = q_st_ref[...]
        k_st = k_st_ref[...]
        v_st = v_st_ref[...]

        # One 128-wide MXU pass for every (head, series) group; cross-group
        # pairs are masked to -1e30 (exp -> 0), which costs the same number of
        # vregs as the old per-group softmaxes but 8x fewer MXU pushes.
        s_mat = jnp.einsum("id,jd->ij", q_st, k_st,
                           preferred_element_type=jnp.float32) + neg_bias
        m = jnp.max(s_mat, axis=-1, keepdims=True)
        p = jnp.exp(s_mat - m)
        denom = jnp.sum(p, axis=-1, keepdims=True)
        inv = pl.reciprocal(denom, approx=True)        # EUP slot
        inv = inv * (2.0 - denom * inv)                # one Newton step -> f32-exact
        p = p * inv
        o_st = jnp.dot(p, v_st, preferred_element_type=jnp.float32)   # (H*R, Dh)

        # Un-stack heads back onto the feature (lane) dim via scratch stores.
        for h in range(H):
            attn_ref[:, h * Dh:(h + 1) * Dh] = o_st[h * R:(h + 1) * R, :]
        attn2d = attn_ref[...]                         # (R, W)

        if l + 1 < num_encoders:
            # out_proj[l] fused with in_proj[l+1] (precomputed in init_params),
            # so the intermediate (W, W) matmul is skipped entirely.
            qkv = (jnp.dot(attn2d, wqkv_ref[l + 1],
                           preferred_element_type=jnp.float32) + bqkv_ref[l + 1])

    # Final out-projection fused with the (B*S, W) -> (B, W, S) relayout:
    # out[b, w, s] = sum_j out_w[w, j] * attn[b, s, j]   (+ bias + seq_last).
    attn3d = attn2d.reshape(B, S, W)
    out3d = jnp.einsum("bij,bkj->bik", wlast_ref[...], attn3d,
                       preferred_element_type=jnp.float32)      # (B, W, S)
    o_ref[...] = (out3d + blast_ref[...] + seq_last).astype(o_ref.dtype)


# --- full Transformers forward ----------------------------------------------
def transformers_forward(x, params):
    """x: (batch, lookback_w, num_series) -- matches the PyTorch module input."""
    B, W, S = x.shape
    H, Dh = NUM_HEADS, HEAD_DIM
    R, G = B * S, NUM_HEADS * B * S

    kernel = partial(_fused_transformer_kernel,
                     num_encoders=NUM_ENCODERS, num_heads=H, head_dim=Dh)
    vmem = lambda: pl.BlockSpec(memory_space=pltpu.MemorySpace.VMEM)

    return pl.pallas_call(
        kernel,
        out_shape=jax.ShapeDtypeStruct((B, W, S), x.dtype),
        in_specs=[vmem()] * 7,
        out_specs=vmem(),
        scratch_shapes=[pltpu.VMEM((G, Dh), jnp.float32),   # stacked q
                        pltpu.VMEM((G, Dh), jnp.float32),   # stacked k
                        pltpu.VMEM((G, Dh), jnp.float32),   # stacked v
                        pltpu.VMEM((R, W), jnp.float32)],   # merged attn heads
        compiler_params=pltpu.CompilerParams(vmem_limit_bytes=4 * 1024 * 1024),
    )(x, params["eye_s_b"], params["attn_bias"], params["w_qkv"],
      params["b_qkv"], params["w_out_last_b"], params["b_out_last"])


# --- deterministic parameter init (nn.MultiheadAttention shapes) -------------
def init_params(key):
    W, B, S, H, L = LOOKBACK_W, BATCH, NUM_SERIES, NUM_HEADS, NUM_ENCODERS
    R, G = B * S, H * B * S
    scale = 1.0 / math.sqrt(HEAD_DIM)

    in_w, in_b, out_w, out_b = [], [], [], []
    for _ in range(L):
        key, k0, k1, k2, k3 = jax.random.split(key, 5)
        in_w.append(jax.random.normal(k0, (3 * W, W), jnp.float32) * 0.05)   # in_proj_weight
        in_b.append(jax.random.normal(k1, (3 * W,), jnp.float32) * 0.05)     # in_proj_bias
        out_w.append(jax.random.normal(k2, (W, W), jnp.float32) * 0.05)      # out_proj.weight
        out_b.append(jax.random.normal(k3, (W,), jnp.float32) * 0.05)        # out_proj.bias

    # Per-layer "qkv-producing" weights; layer l>0 has the previous layer's
    # out_proj fused in (exact: no nonlinearity / norm / used residual between).
    w_qkv, b_qkv = [], []
    for l in range(L):
        if l == 0:
            w = in_w[0].T                                             # (W, 3W)
            b = in_b[0].reshape(1, 3 * W)
        else:
            w = out_w[l - 1].T @ in_w[l].T                            # (W, 3W)
            b = out_b[l - 1].reshape(1, W) @ in_w[l].T + in_b[l].reshape(1, 3 * W)
        # fold the 1/sqrt(head_dim) attention scale into the q columns
        w = w.at[:, :W].multiply(scale)
        b = b.at[:, :W].multiply(scale)
        w_qkv.append(w)
        b_qkv.append(b)

    # Additive attention mask for the head-stacked layout.  Rows are ordered
    # (head, batch_pos, series); attention only mixes rows sharing
    # (head, series) -- i.e. PyTorch MHA over the batch dim, batched per series.
    r = jnp.arange(G)
    grp = (r // R) * S + (r % S)
    attn_bias = jnp.where(grp[:, None] == grp[None, :], 0.0, -1e30).astype(jnp.float32)

    return dict(
        w_qkv=jnp.stack(w_qkv),                                       # (L, W, 3W)
        b_qkv=jnp.stack(b_qkv),                                       # (L, 1, 3W)
        w_out_last_b=jnp.broadcast_to(out_w[L - 1][None], (B, W, W)), # (B, W, W) nn.Linear (out,in)
        b_out_last=out_b[L - 1].reshape(1, W, 1),                     # (1, W, 1)
        eye_s_b=jnp.broadcast_to(jnp.eye(S, dtype=jnp.float32)[None], (B, S, S)),
        attn_bias=attn_bias,                                          # (G, G)
        # raw (unfused) weights, used only by the pure-JAX reference below
        in_w=jnp.stack(in_w), in_b=jnp.stack(in_b),
        out_w=jnp.stack(out_w), out_b=jnp.stack(out_b),
    )


# --- plain-JAX reference for correctness check --------------------------------
def _ref_forward(x, params):
    W, H, Dh = LOOKBACK_W, NUM_HEADS, HEAD_DIM
    seq_last = x[:, -1:, :]
    xk = jnp.transpose(x - seq_last, (2, 0, 1))        # (S, B, W): MHA batch = series
    S, B, _ = xk.shape
    for l in range(NUM_ENCODERS):
        qkv = xk @ params["in_w"][l].T + params["in_b"][l]
        q, k, v = qkv[..., :W], qkv[..., W:2 * W], qkv[..., 2 * W:]
        q = q.reshape(S, B, H, Dh)
        k = k.reshape(S, B, H, Dh)
        v = v.reshape(S, B, H, Dh)
        s = jnp.einsum("sihd,sjhd->shij", q, k) / math.sqrt(Dh)
        a = jax.nn.softmax(s, axis=-1)
        o = jnp.einsum("shij,sjhd->sihd", a, v).reshape(S, B, W)
        xk = o @ params["out_w"][l].T + params["out_b"][l]
    return jnp.transpose(xk, (1, 2, 0)) + seq_last


if __name__ == "__main__":
    key = jax.random.PRNGKey(0)
    kx, kp = jax.random.split(key)
    # input: (batch, lookback_w, num_series) like the PyTorch module expects
    x = jax.random.normal(kx, (BATCH, LOOKBACK_W, NUM_SERIES), jnp.float32)
    params = init_params(kp)

    fwd = jax.jit(transformers_forward)
    out = jax.block_until_ready(fwd(x, params))

    ref = jax.block_until_ready(_ref_forward(x, params))
    assert out.shape == (BATCH, LOOKBACK_W, NUM_SERIES)
    # 2e-4 absorbs the (review-sanctioned) fp reassociation from fusing
    # out_proj[l] @ in_proj[l+1] and folding the 1/sqrt(head_dim) scale.
    assert jnp.allclose(out, ref, atol=2e-4, rtol=2e-4), "mismatch vs JAX reference"

    # TODO(synk): fc_1 / fc_2 / fc_pca / fc_pc_inv and the Dropout layers are not
    # in the PyTorch forward path (or are identity in eval mode), so they are
    # intentionally not implemented.
    print("KERNEL_OK")
</pallas_src>

<mosaic_0001>
module attributes {stable_mosaic.version = 11 : i64} {
  func.func @_fused_transformer_kernel(%arg0: memref<8x32x4xf32, #tpu.memory_space<vmem>>, %arg1: memref<8x4x4xf32, #tpu.memory_space<vmem>>, %arg2: memref<128x128xf32, #tpu.memory_space<vmem>>, %arg3: memref<2x32x96xf32, #tpu.memory_space<vmem>>, %arg4: memref<2x1x96xf32, #tpu.memory_space<vmem>>, %arg5: memref<8x32x32xf32, #tpu.memory_space<vmem>>, %arg6: memref<1x32x1xf32, #tpu.memory_space<vmem>>, %arg7: memref<8x32x4xf32, #tpu.memory_space<vmem>>, %arg8: memref<128x8xf32, #tpu.memory_space<vmem>>, %arg9: memref<128x8xf32, #tpu.memory_space<vmem>>, %arg10: memref<128x8xf32, #tpu.memory_space<vmem>>, %arg11: memref<32x32xf32, #tpu.memory_space<vmem>>) attributes {dimension_semantics = [], scalar_prefetch = 0 : i64, scratch_operands = 4 : i64, tpu.core_type = #tpu.core_type<tc>} {
    %c0 = arith.constant 0 : index
    %c0_0 = arith.constant 0 : index
    %c0_1 = arith.constant 0 : index
    %0 = vector.load %arg0[%c0, %c0_0, %c0_1] : memref<8x32x4xf32, #tpu.memory_space<vmem>>, vector<8x32x4xf32>
    %1 = vector.extract_strided_slice %0 {offsets = [0, 31, 0], sizes = [8, 1, 4], strides = [1, 1, 1]} : vector<8x32x4xf32> to vector<8x1x4xf32>
    %2 = vector.broadcast %1 : vector<8x1x4xf32> to vector<8x32x4xf32>
    %3 = arith.subf %0, %2 : vector<8x32x4xf32>
    %c0_2 = arith.constant 0 : index
    %c0_3 = arith.constant 0 : index
    %c0_4 = arith.constant 0 : index
    %4 = vector.load %arg1[%c0_2, %c0_3, %c0_4] : memref<8x4x4xf32, #tpu.memory_space<vmem>>, vector<8x4x4xf32>
    "tpu.trace_start"() <{level = 10 : i32, message = "bij,bkj->bik"}> : () -> ()
    %cst = arith.constant dense<0.000000e+00> : vector<8x4x32xf32>
    %5 = tpu.matmul %4, %3, %cst {dimension_numbers = #tpu.dot_dimension_numbers<[2], [2], [1], [1], [0, 0, 0, 1, 1, 1], [0], [0]>} : vector<8x4x4xf32>, vector<8x32x4xf32>, vector<8x4x32xf32> -> vector<8x4x32xf32>
    "tpu.trace_stop"() : () -> ()
    %6 = vector.shape_cast %5 : vector<8x4x32xf32> to vector<32x32xf32>
    %c0_5 = arith.constant 0 : index
    %c0_6 = arith.constant 0 : index
    %7 = vector.load %arg2[%c0_5, %c0_6] : memref<128x128xf32, #tpu.memory_space<vmem>>, vector<128x128xf32>
    %c0_7 = arith.constant 0 : index
    %c0_8 = arith.constant 0 : index
    %c0_9 = arith.constant 0 : index
    %8 = vector.load %arg3[%c0_7, %c0_8, %c0_9] : memref<2x32x96xf32, #tpu.memory_space<vmem>>, vector<1x32x96xf32>
    %9 = vector.shape_cast %8 : vector<1x32x96xf32> to vector<32x96xf32>
    %cst_10 = arith.constant dense<0.000000e+00> : vector<32x96xf32>
    %10 = tpu.matmul %6, %9, %cst_10 {dimension_numbers = #tpu.dot_dimension_numbers<[1], [0], [0], [1], [0, 0, 1, 1], [], []>} : vector<32x32xf32>, vector<32x96xf32>, vector<32x96xf32> -> vector<32x96xf32>
    %c0_11 = arith.constant 0 : index
    %c0_12 = arith.constant 0 : index
    %c0_13 = arith.constant 0 : index
    %11 = vector.load %arg4[%c0_11, %c0_12, %c0_13] : memref<2x1x96xf32, #tpu.memory_space<vmem>>, vector<1x1x96xf32>
    %12 = vector.shape_cast %11 : vector<1x1x96xf32> to vector<1x96xf32>
    %13 = vector.broadcast %12 : vector<1x96xf32> to vector<32x96xf32>
    %14 = arith.addf %10, %13 : vector<32x96xf32>
    %15 = vector.extract_strided_slice %14 {offsets = [0, 0], sizes = [32, 8], strides = [1, 1]} : vector<32x96xf32> to vector<32x8xf32>
    %c0_14 = arith.constant 0 : index
    %c0_15 = arith.constant 0 : index
    %16 = vector.load %arg8[%c0_14, %c0_15] : memref<128x8xf32, #tpu.memory_space<vmem>>, vector<32x8xf32>
    tpu.vector_store %arg8[%c0_14, %c0_15], %15 {strides = array<i32>} : memref<128x8xf32, #tpu.memory_space<vmem>>, vector<32x8xf32>,
    %17 = vector.extract_strided_slice %14 {offsets = [0, 32], sizes = [32, 8], strides = [1, 1]} : vector<32x96xf32> to vector<32x8xf32>
    %c0_16 = arith.constant 0 : index
    %c0_17 = arith.constant 0 : index
    %18 = vector.load %arg9[%c0_16, %c0_17] : memref<128x8xf32, #tpu.memory_space<vmem>>, vector<32x8xf32>
    tpu.vector_store %arg9[%c0_16, %c0_17], %17 {strides = array<i32>} : memref<128x8xf32, #tpu.memory_space<vmem>>, vector<32x8xf32>,
    %19 = vector.extract_strided_slice %14 {offsets = [0, 64], sizes = [32, 8], strides = [1, 1]} : vector<32x96xf32> to vector<32x8xf32>
    %c0_18 = arith.constant 0 : index
    %c0_19 = arith.constant 0 : index
    %20 = vector.load %arg10[%c0_18, %c0_19] : memref<128x8xf32, #tpu.memory_space<vmem>>, vector<32x8xf32>
    tpu.vector_store %arg10[%c0_18, %c0_19], %19 {strides = array<i32>} : memref<128x8xf32, #tpu.memory_space<vmem>>, vector<32x8xf32>,
    %21 = vector.extract_strided_slice %14 {offsets = [0, 8], sizes = [32, 8], strides = [1, 1]} : vector<32x96xf32> to vector<32x8xf32>
    %c32 = arith.constant 32 : index
    %c0_20 = arith.constant 0 : index
    %22 = vector.load %arg8[%c32, %c0_20] : memref<128x8xf32, #tpu.memory_space<vmem>>, vector<32x8xf32>
    tpu.vector_store %arg8[%c32, %c0_20], %21 {strides = array<i32>} : memref<128x8xf32, #tpu.memory_space<vmem>>, vector<32x8xf32>,
    %23 = vector.extract_strided_slice %14 {offsets = [0, 40], sizes = [32, 8], strides = [1, 1]} : vector<32x96xf32> to vector<32x8xf32>
    %c32_21 = arith.constant 32 : index
    %c0_22 = arith.constant 0 : index
    %24 = vector.load %arg9[%c32_21, %c0_22] : memref<128x8xf32, #tpu.memory_space<vmem>>, vector<32x8xf32>
    tpu.vector_store %arg9[%c32_21, %c0_22], %23 {strides = array<i32>} : memref<128x8xf32, #tpu.memory_space<vmem>>, vector<32x8xf32>,
    %25 = vector.extract_strided_slice %14 {offsets = [0, 72], sizes = [32, 8], strides = [1, 1]} : vector<32x96xf32> to vector<32x8xf32>
    %c32_23 = arith.constant 32 : index
    %c0_24 = arith.constant 0 : index
    %26 = vector.load %arg10[%c32_23, %c0_24] : memref<128x8xf32, #tpu.memory_space<vmem>>, vector<32x8xf32>
    tpu.vector_store %arg10[%c32_23, %c0_24], %25 {strides = array<i32>} : memref<128x8xf32, #tpu.memory_space<vmem>>, vector<32x8xf32>,
    %27 = vector.extract_strided_slice %14 {offsets = [0, 16], sizes = [32, 8], strides = [1, 1]} : vector<32x96xf32> to vector<32x8xf32>
    %c64 = arith.constant 64 : index
    %c0_25 = arith.constant 0 : index
    %28 = vector.load %arg8[%c64, %c0_25] : memref<128x8xf32, #tpu.memory_space<vmem>>, vector<32x8xf32>
    tpu.vector_store %arg8[%c64, %c0_25], %27 {strides = array<i32>} : memref<128x8xf32, #tpu.memory_space<vmem>>, vector<32x8xf32>,
    %29 = vector.extract_strided_slice %14 {offsets = [0, 48], sizes = [32, 8], strides = [1, 1]} : vector<32x96xf32> to vector<32x8xf32>
    %c64_26 = arith.constant 64 : index
    %c0_27 = arith.constant 0 : index
    %30 = vector.load %arg9[%c64_26, %c0_27] : memref<128x8xf32, #tpu.memory_space<vmem>>, vector<32x8xf32>
    tpu.vector_store %arg9[%c64_26, %c0_27], %29 {strides = array<i32>} : memref<128x8xf32, #tpu.memory_space<vmem>>, vector<32x8xf32>,
    %31 = vector.extract_strided_slice %14 {offsets = [0, 80], sizes = [32, 8], strides = [1, 1]} : vector<32x96xf32> to vector<32x8xf32>
    %c64_28 = arith.constant 64 : index
    %c0_29 = arith.constant 0 : index
    %32 = vector.load %arg10[%c64_28, %c0_29] : memref<128x8xf32, #tpu.memory_space<vmem>>, vector<32x8xf32>
    tpu.vector_store %arg10[%c64_28, %c0_29], %31 {strides = array<i32>} : memref<128x8xf32, #tpu.memory_space<vmem>>, vector<32x8xf32>,
    %33 = vector.extract_strided_slice %14 {offsets = [0, 24], sizes = [32, 8], strides = [1, 1]} : vector<32x96xf32> to vector<32x8xf32>
    %c96 = arith.constant 96 : index
    %c0_30 = arith.constant 0 : index
    %34 = vector.load %arg8[%c96, %c0_30] : memref<128x8xf32, #tpu.memory_space<vmem>>, vector<32x8xf32>
    tpu.vector_store %arg8[%c96, %c0_30], %33 {strides = array<i32>} : memref<128x8xf32, #tpu.memory_space<vmem>>, vector<32x8xf32>,
    %35 = vector.extract_strided_slice %14 {offsets = [0, 56], sizes = [32, 8], strides = [1, 1]} : vector<32x96xf32> to vector<32x8xf32>
    %c96_31 = arith.constant 96 : index
    %c0_32 = arith.constant 0 : index
    %36 = vector.load %arg9[%c96_31, %c0_32] : memref<128x8xf32, #tpu.memory_space<vmem>>, vector<32x8xf32>
    tpu.vector_store %arg9[%c96_31, %c0_32], %35 {strides = array<i32>} : memref<128x8xf32, #tpu.memory_space<vmem>>, vector<32x8xf32>,
    %37 = vector.extract_strided_slice %14 {offsets = [0, 88], sizes = [32, 8], strides = [1, 1]} : vector<32x96xf32> to vector<32x8xf32>
    %c96_33 = arith.constant 96 : index
    %c0_34 = arith.constant 0 : index
    %38 = vector.load %arg10[%c96_33, %c0_34] : memref<128x8xf32, #tpu.memory_space<vmem>>, vector<32x8xf32>
    tpu.vector_store %arg10[%c96_33, %c0_34], %37 {strides = array<i32>} : memref<128x8xf32, #tpu.memory_space<vmem>>, vector<32x8xf32>,
    %c0_35 = arith.constant 0 : index
    %c0_36 = arith.constant 0 : index
    %39 = vector.load %arg8[%c0_35, %c0_36] : memref<128x8xf32, #tpu.memory_space<vmem>>, vector<128x8xf32>
    %c0_37 = arith.constant 0 : index
    %c0_38 = arith.constant 0 : index
    %40 = vector.load %arg9[%c0_37, %c0_38] : memref<128x8xf32, #tpu.memory_space<vmem>>, vector<128x8xf32>
    %c0_39 = arith.constant 0 : index
    %c0_40 = arith.constant 0 : index
    %41 = vector.load %arg10[%c0_39, %c0_40] : memref<128x8xf32, #tpu.memory_space<vmem>>, vector<128x8xf32>
    "tpu.trace_start"() <{level = 10 : i32, message = "id,jd->ij"}> : () -> ()
    %cst_41 = arith.constant dense<0.000000e+00> : vector<128x128xf32>
    %42 = tpu.matmul %39, %40, %cst_41 {dimension_numbers = #tpu.dot_dimension_numbers<[1], [1], [0], [0], [0, 0, 1, 0], [], []>} : vector<128x8xf32>, vector<128x8xf32>, vector<128x128xf32> -> vector<128x128xf32>
    "tpu.trace_stop"() : () -> ()
    %43 = arith.addf %42, %7 : vector<128x128xf32>
    %cst_42 = arith.constant dense<0xFF800000> : vector<128xf32>
    %44 = vector.multi_reduction <maximumf>, %43, %cst_42 [1] : vector<128x128xf32> to vector<128xf32>
    %45 = vector.shape_cast %44 : vector<128xf32> to vector<128x1xf32>
    %46 = vector.broadcast %45 : vector<128x1xf32> to vector<128x128xf32>
    %47 = arith.subf %43, %46 : vector<128x128xf32>
    %48 = math.exp %47 : vector<128x128xf32>
    %cst_43 = arith.constant dense<0.000000e+00> : vector<128xf32>
    %49 = vector.multi_reduction <add>, %48, %cst_43 [1] : vector<128x128xf32> to vector<128xf32>
    %50 = vector.shape_cast %49 : vector<128xf32> to vector<128x1xf32>
    %51 = tpu.reciprocal %50 {approx = true} : vector<128x1xf32> -> vector<128x1xf32>
    %52 = arith.mulf %50, %51 : vector<128x1xf32>
    %cst_44 = arith.constant 2.000000e+00 : f32
    %53 = vector.broadcast %cst_44 : f32 to vector<128x1xf32>
    %54 = arith.subf %53, %52 : vector<128x1xf32>
    %55 = arith.mulf %51, %54 : vector<128x1xf32>
    %56 = vector.broadcast %55 : vector<128x1xf32> to vector<128x128xf32>
    %57 = arith.mulf %48, %56 : vector<128x128xf32>
    %cst_45 = arith.constant dense<0.000000e+00> : vector<128x8xf32>
    %58 = tpu.matmul %57, %41, %cst_45 {dimension_numbers = #tpu.dot_dimension_numbers<[1], [0], [0], [1], [0, 0, 1, 1], [], []>} : vector<128x128xf32>, vector<128x8xf32>, vector<128x8xf32> -> vector<128x8xf32>
    %59 = vector.extract_strided_slice %58 {offsets = [0, 0], sizes = [32, 8], strides = [1, 1]} : vector<128x8xf32> to vector<32x8xf32>
    %c0_46 = arith.constant 0 : index
    %c0_47 = arith.constant 0 : index
    %60 = vector.load %arg11[%c0_46, %c0_47] : memref<32x32xf32, #tpu.memory_space<vmem>>, vector<32x8xf32>
    tpu.vector_store %arg11[%c0_46, %c0_47], %59 {strides = array<i32>} : memref<32x32xf32, #tpu.memory_space<vmem>>, vector<32x8xf32>,
    %61 = vector.extract_strided_slice %58 {offsets = [32, 0], sizes = [32, 8], strides = [1, 1]} : vector<128x8xf32> to vector<32x8xf32>
    %c0_48 = arith.constant 0 : index
    %c8 = arith.constant 8 : index
    %62 = vector.load %arg11[%c0_48, %c8] : memref<32x32xf32, #tpu.memory_space<vmem>>, vector<32x8xf32>
    tpu.vector_store %arg11[%c0_48, %c8], %61 {strides = array<i32>} : memref<32x32xf32, #tpu.memory_space<vmem>>, vector<32x8xf32>,
    %63 = vector.extract_strided_slice %58 {offsets = [64, 0], sizes = [32, 8], strides = [1, 1]} : vector<128x8xf32> to vector<32x8xf32>
    %c0_49 = arith.constant 0 : index
    %c16 = arith.constant 16 : index
    %64 = vector.load %arg11[%c0_49, %c16] : memref<32x32xf32, #tpu.memory_space<vmem>>, vector<32x8xf32>
    tpu.vector_store %arg11[%c0_49, %c16], %63 {strides = array<i32>} : memref<32x32xf32, #tpu.memory_space<vmem>>, vector<32x8xf32>,
    %65 = vector.extract_strided_slice %58 {offsets = [96, 0], sizes = [32, 8], strides = [1, 1]} : vector<128x8xf32> to vector<32x8xf32>
    %c0_50 = arith.constant 0 : index
    %c24 = arith.constant 24 : index
    %66 = vector.load %arg11[%c0_50, %c24] : memref<32x32xf32, #tpu.memory_space<vmem>>, vector<32x8xf32>
    tpu.vector_store %arg11[%c0_50, %c24], %65 {strides = array<i32>} : memref<32x32xf32, #tpu.memory_space<vmem>>, vector<32x8xf32>,
    %c0_51 = arith.constant 0 : index
    %c0_52 = arith.constant 0 : index
    %67 = vector.load %arg11[%c0_51, %c0_52] : memref<32x32xf32, #tpu.memory_space<vmem>>, vector<32x32xf32>
    %c1 = arith.constant 1 : index
    %c0_53 = arith.constant 0 : index
    %c0_54 = arith.constant 0 : index
    %68 = vector.load %arg3[%c1, %c0_53, %c0_54] : memref<2x32x96xf32, #tpu.memory_space<vmem>>, vector<1x32x96xf32>
    %69 = vector.shape_cast %68 : vector<1x32x96xf32> to vector<32x96xf32>
    %cst_55 = arith.constant dense<0.000000e+00> : vector<32x96xf32>
    %70 = tpu.matmul %67, %69, %cst_55 {dimension_numbers = #tpu.dot_dimension_numbers<[1], [0], [0], [1], [0, 0, 1, 1], [], []>} : vector<32x32xf32>, vector<32x96xf32>, vector<32x96xf32> -> vector<32x96xf32>
    %c1_56 = arith.constant 1 : index
    %c0_57 = arith.constant 0 : index
    %c0_58 = arith.constant 0 : index
    %71 = vector.load %arg4[%c1_56, %c0_57, %c0_58] : memref<2x1x96xf32, #tpu.memory_space<vmem>>, vector<1x1x96xf32>
    %72 = vector.shape_cast %71 : vector<1x1x96xf32> to vector<1x96xf32>
    %73 = vector.broadcast %72 : vector<1x96xf32> to vector<32x96xf32>
    %74 = arith.addf %70, %73 : vector<32x96xf32>
    %75 = vector.extract_strided_slice %74 {offsets = [0, 0], sizes = [32, 8], strides = [1, 1]} : vector<32x96xf32> to vector<32x8xf32>
    %c0_59 = arith.constant 0 : index
    %c0_60 = arith.constant 0 : index
    %76 = vector.load %arg8[%c0_59, %c0_60] : memref<128x8xf32, #tpu.memory_space<vmem>>, vector<32x8xf32>
    tpu.vector_store %arg8[%c0_59, %c0_60], %75 {strides = array<i32>} : memref<128x8xf32, #tpu.memory_space<vmem>>, vector<32x8xf32>,
    %77 = vector.extract_strided_slice %74 {offsets = [0, 32], sizes = [32, 8], strides = [1, 1]} : vector<32x96xf32> to vector<32x8xf32>
    %c0_61 = arith.constant 0 : index
    %c0_62 = arith.constant 0 : index
    %78 = vector.load %arg9[%c0_61, %c0_62] : memref<128x8xf32, #tpu.memory_space<vmem>>, vector<32x8xf32>
    tpu.vector_store %arg9[%c0_61, %c0_62], %77 {strides = array<i32>} : memref<128x8xf32, #tpu.memory_space<vmem>>, vector<32x8xf32>,
    %79 = vector.extract_strided_slice %74 {offsets = [0, 64], sizes = [32, 8], strides = [1, 1]} : vector<32x96xf32> to vector<32x8xf32>
    %c0_63 = arith.constant 0 : index
    %c0_64 = arith.constant 0 : index
    %80 = vector.load %arg10[%c0_63, %c0_64] : memref<128x8xf32, #tpu.memory_space<vmem>>, vector<32x8xf32>
    tpu.vector_store %arg10[%c0_63, %c0_64], %79 {strides = array<i32>} : memref<128x8xf32, #tpu.memory_space<vmem>>, vector<32x8xf32>,
    %81 = vector.extract_strided_slice %74 {offsets = [0, 8], sizes = [32, 8], strides = [1, 1]} : vector<32x96xf32> to vector<32x8xf32>
    %c32_65 = arith.constant 32 : index
    %c0_66 = arith.constant 0 : index
    %82 = vector.load %arg8[%c32_65, %c0_66] : memref<128x8xf32, #tpu.memory_space<vmem>>, vector<32x8xf32>
    tpu.vector_store %arg8[%c32_65, %c0_66], %81 {strides = array<i32>} : memref<128x8xf32, #tpu.memory_space<vmem>>, vector<32x8xf32>,
    %83 = vector.extract_strided_slice %74 {offsets = [0, 40], sizes = [32, 8], strides = [1, 1]} : vector<32x96xf32> to vector<32x8xf32>
    %c32_67 = arith.constant 32 : index
    %c0_68 = arith.constant 0 : index
    %84 = vector.load %arg9[%c32_67, %c0_68] : memref<128x8xf32, #tpu.memory_space<vmem>>, vector<32x8xf32>
    tpu.vector_store %arg9[%c32_67, %c0_68], %83 {strides = array<i32>} : memref<128x8xf32, #tpu.memory_space<vmem>>, vector<32x8xf32>,
    %85 = vector.extract_strided_slice %74 {offsets = [0, 72], sizes = [32, 8], strides = [1, 1]} : vector<32x96xf32> to vector<32x8xf32>
    %c32_69 = arith.constant 32 : index
    %c0_70 = arith.constant 0 : index
    %86 = vector.load %arg10[%c32_69, %c0_70] : memref<128x8xf32, #tpu.memory_space<vmem>>, vector<32x8xf32>
    tpu.vector_store %arg10[%c32_69, %c0_70], %85 {strides = array<i32>} : memref<128x8xf32, #tpu.memory_space<vmem>>, vector<32x8xf32>,
    %87 = vector.extract_strided_slice %74 {offsets = [0, 16], sizes = [32, 8], strides = [1, 1]} : vector<32x96xf32> to vector<32x8xf32>
    %c64_71 = arith.constant 64 : index
    %c0_72 = arith.constant 0 : index
    %88 = vector.load %arg8[%c64_71, %c0_72] : memref<128x8xf32, #tpu.memory_space<vmem>>, vector<32x8xf32>
    tpu.vector_store %arg8[%c64_71, %c0_72], %87 {strides = array<i32>} : memref<128x8xf32, #tpu.memory_space<vmem>>, vector<32x8xf32>,
    %89 = vector.extract_strided_slice %74 {offsets = [0, 48], sizes = [32, 8], strides = [1, 1]} : vector<32x96xf32> to vector<32x8xf32>
    %c64_73 = arith.constant 64 : index
    %c0_74 = arith.constant 0 : index
    %90 = vector.load %arg9[%c64_73, %c0_74] : memref<128x8xf32, #tpu.memory_space<vmem>>, vector<32x8xf32>
    tpu.vector_store %arg9[%c64_73, %c0_74], %89 {strides = array<i32>} : memref<128x8xf32, #tpu.memory_space<vmem>>, vector<32x8xf32>,
    %91 = vector.extract_strided_slice %74 {offsets = [0, 80], sizes = [32, 8], strides = [1, 1]} : vector<32x96xf32> to vector<32x8xf32>
    %c64_75 = arith.constant 64 : index
    %c0_76 = arith.constant 0 : index
    %92 = vector.load %arg10[%c64_75, %c0_76] : memref<128x8xf32, #tpu.memory_space<vmem>>, vector<32x8xf32>
    tpu.vector_store %arg10[%c64_75, %c0_76], %91 {strides = array<i32>} : memref<128x8xf32, #tpu.memory_space<vmem>>, vector<32x8xf32>,
    %93 = vector.extract_strided_slice %74 {offsets = [0, 24], sizes = [32, 8], strides = [1, 1]} : vector<32x96xf32> to vector<32x8xf32>
    %c96_77 = arith.constant 96 : index
    %c0_78 = arith.constant 0 : index
    %94 = vector.load %arg8[%c96_77, %c0_78] : memref<128x8xf32, #tpu.memory_space<vmem>>, vector<32x8xf32>
    tpu.vector_store %arg8[%c96_77, %c0_78], %93 {strides = array<i32>} : memref<128x8xf32, #tpu.memory_space<vmem>>, vector<32x8xf32>,
    %95 = vector.extract_strided_slice %74 {offsets = [0, 56], sizes = [32, 8], strides = [1, 1]} : vector<32x96xf32> to vector<32x8xf32>
    %c96_79 = arith.constant 96 : index
    %c0_80 = arith.constant 0 : index
    %96 = vector.load %arg9[%c96_79, %c0_80] : memref<128x8xf32, #tpu.memory_space<vmem>>, vector<32x8xf32>
    tpu.vector_store %arg9[%c96_79, %c0_80], %95 {strides = array<i32>} : memref<128x8xf32, #tpu.memory_space<vmem>>, vector<32x8xf32>,
    %97 = vector.extract_strided_slice %74 {offsets = [0, 88], sizes = [32, 8], strides = [1, 1]} : vector<32x96xf32> to vector<32x8xf32>
    %c96_81 = arith.constant 96 : index
    %c0_82 = arith.constant 0 : index
    %98 = vector.load %arg10[%c96_81, %c0_82] : memref<128x8xf32, #tpu.memory_space<vmem>>, vector<32x8xf32>
    tpu.vector_store %arg10[%c96_81, %c0_82], %97 {strides = array<i32>} : memref<128x8xf32, #tpu.memory_space<vmem>>, vector<32x8xf32>,
    %c0_83 = arith.constant 0 : index
    %c0_84 = arith.constant 0 : index
    %99 = vector.load %arg8[%c0_83, %c0_84] : memref<128x8xf32, #tpu.memory_space<vmem>>, vector<128x8xf32>
    %c0_85 = arith.constant 0 : index
    %c0_86 = arith.constant 0 : index
    %100 = vector.load %arg9[%c0_85, %c0_86] : memref<128x8xf32, #tpu.memory_space<vmem>>, vector<128x8xf32>
    %c0_87 = arith.constant 0 : index
    %c0_88 = arith.constant 0 : index
    %101 = vector.load %arg10[%c0_87, %c0_88] : memref<128x8xf32, #tpu.memory_space<vmem>>, vector<128x8xf32>
    "tpu.trace_start"() <{level = 10 : i32, message = "id,jd->ij"}> : () -> ()
    %cst_89 = arith.constant dense<0.000000e+00> : vector<128x128xf32>
    %102 = tpu.matmul %99, %100, %cst_89 {dimension_numbers = #tpu.dot_dimension_numbers<[1], [1], [0], [0], [0, 0, 1, 0], [], []>} : vector<128x8xf32>, vector<128x8xf32>, vector<128x128xf32> -> vector<128x128xf32>
    "tpu.trace_stop"() : () -> ()
    %103 = arith.addf %102, %7 : vector<128x128xf32>
    %cst_90 = arith.constant dense<0xFF800000> : vector<128xf32>
    %104 = vector.multi_reduction <maximumf>, %103, %cst_90 [1] : vector<128x128xf32> to vector<128xf32>
    %105 = vector.shape_cast %104 : vector<128xf32> to vector<128x1xf32>
    %106 = vector.broadcast %105 : vector<128x1xf32> to vector<128x128xf32>
    %107 = arith.subf %103, %106 : vector<128x128xf32>
    %108 = math.exp %107 : vector<128x128xf32>
    %cst_91 = arith.constant dense<0.000000e+00> : vector<128xf32>
    %109 = vector.multi_reduction <add>, %108, %cst_91 [1] : vector<128x128xf32> to vector<128xf32>
    %110 = vector.shape_cast %109 : vector<128xf32> to vector<128x1xf32>
    %111 = tpu.reciprocal %110 {approx = true} : vector<128x1xf32> -> vector<128x1xf32>
    %112 = arith.mulf %110, %111 : vector<128x1xf32>
    %cst_92 = arith.constant 2.000000e+00 : f32
    %113 = vector.broadcast %cst_92 : f32 to vector<128x1xf32>
    %114 = arith.subf %113, %112 : vector<128x1xf32>
    %115 = arith.mulf %111, %114 : vector<128x1xf32>
    %116 = vector.broadcast %115 : vector<128x1xf32> to vector<128x128xf32>
    %117 = arith.mulf %108, %116 : vector<128x128xf32>
    %cst_93 = arith.constant dense<0.000000e+00> : vector<128x8xf32>
    %118 = tpu.matmul %117, %101, %cst_93 {dimension_numbers = #tpu.dot_dimension_numbers<[1], [0], [0], [1], [0, 0, 1, 1], [], []>} : vector<128x128xf32>, vector<128x8xf32>, vector<128x8xf32> -> vector<128x8xf32>
    %119 = vector.extract_strided_slice %118 {offsets = [0, 0], sizes = [32, 8], strides = [1, 1]} : vector<128x8xf32> to vector<32x8xf32>
    %c0_94 = arith.constant 0 : index
    %c0_95 = arith.constant 0 : index
    %120 = vector.load %arg11[%c0_94, %c0_95] : memref<32x32xf32, #tpu.memory_space<vmem>>, vector<32x8xf32>
    tpu.vector_store %arg11[%c0_94, %c0_95], %119 {strides = array<i32>} : memref<32x32xf32, #tpu.memory_space<vmem>>, vector<32x8xf32>,
    %121 = vector.extract_strided_slice %118 {offsets = [32, 0], sizes = [32, 8], strides = [1, 1]} : vector<128x8xf32> to vector<32x8xf32>
    %c0_96 = arith.constant 0 : index
    %c8_97 = arith.constant 8 : index
    %122 = vector.load %arg11[%c0_96, %c8_97] : memref<32x32xf32, #tpu.memory_space<vmem>>, vector<32x8xf32>
    tpu.vector_store %arg11[%c0_96, %c8_97], %121 {strides = array<i32>} : memref<32x32xf32, #tpu.memory_space<vmem>>, vector<32x8xf32>,
    %123 = vector.extract_strided_slice %118 {offsets = [64, 0], sizes = [32, 8], strides = [1, 1]} : vector<128x8xf32> to vector<32x8xf32>
    %c0_98 = arith.constant 0 : index
    %c16_99 = arith.constant 16 : index
    %124 = vector.load %arg11[%c0_98, %c16_99] : memref<32x32xf32, #tpu.memory_space<vmem>>, vector<32x8xf32>
    tpu.vector_store %arg11[%c0_98, %c16_99], %123 {strides = array<i32>} : memref<32x32xf32, #tpu.memory_space<vmem>>, vector<32x8xf32>,
    %125 = vector.extract_strided_slice %118 {offsets = [96, 0], sizes = [32, 8], strides = [1, 1]} : vector<128x8xf32> to vector<32x8xf32>
    %c0_100 = arith.constant 0 : index
    %c24_101 = arith.constant 24 : index
    %126 = vector.load %arg11[%c0_100, %c24_101] : memref<32x32xf32, #tpu.memory_space<vmem>>, vector<32x8xf32>
    tpu.vector_store %arg11[%c0_100, %c24_101], %125 {strides = array<i32>} : memref<32x32xf32, #tpu.memory_space<vmem>>, vector<32x8xf32>,
    %c0_102 = arith.constant 0 : index
    %c0_103 = arith.constant 0 : index
    %127 = vector.load %arg11[%c0_102, %c0_103] : memref<32x32xf32, #tpu.memory_space<vmem>>, vector<32x32xf32>
    %128 = vector.shape_cast %127 : vector<32x32xf32> to vector<8x4x32xf32>
    %c0_104 = arith.constant 0 : index
    %c0_105 = arith.constant 0 : index
    %c0_106 = arith.constant 0 : index
    %129 = vector.load %arg5[%c0_104, %c0_105, %c0_106] : memref<8x32x32xf32, #tpu.memory_space<vmem>>, vector<8x32x32xf32>
    "tpu.trace_start"() <{level = 10 : i32, message = "bij,bkj->bik"}> : () -> ()
    %cst_107 = arith.constant dense<0.000000e+00> : vector<8x32x4xf32>
    %130 = tpu.matmul %129, %128, %cst_107 {dimension_numbers = #tpu.dot_dimension_numbers<[2], [2], [1], [1], [0, 0, 0, 1, 1, 1], [0], [0]>} : vector<8x32x32xf32>, vector<8x4x32xf32>, vector<8x32x4xf32> -> vector<8x32x4xf32>
    "tpu.trace_stop"() : () -> ()
    %c0_108 = arith.constant 0 : index
    %c0_109 = arith.constant 0 : index
    %c0_110 = arith.constant 0 : index
    %131 = vector.load %arg6[%c0_108, %c0_109, %c0_110] : memref<1x32x1xf32, #tpu.memory_space<vmem>>, vector<1x32x1xf32>
    %132 = vector.broadcast %131 : vector<1x32x1xf32> to vector<8x32x4xf32>
    %133 = arith.addf %130, %132 : vector<8x32x4xf32>
    %134 = vector.broadcast %1 : vector<8x1x4xf32> to vector<8x32x4xf32>
    %135 = arith.addf %133, %134 : vector<8x32x4xf32>
    %c0_111 = arith.constant 0 : index
    %c0_112 = arith.constant 0 : index
    %c0_113 = arith.constant 0 : index
    %136 = vector.load %arg7[%c0_111, %c0_112, %c0_113] : memref<8x32x4xf32, #tpu.memory_space<vmem>>, vector<8x32x4xf32>
    tpu.vector_store %arg7[%c0_111, %c0_112, %c0_113], %135 {strides = array<i32>} : memref<8x32x4xf32, #tpu.memory_space<vmem>>, vector<8x32x4xf32>,
    return
  }
}

</mosaic_0001>

<llo_original>
// kernel: transformers_forward.1
$region0: #{transformers_forward.1}
  #allocation0 [shape = 'u32[]', space=smem, size = 0x4, offset = 0x4, fixed_abs, tag = 'smem constant byte address 0x4 - core index']
  #allocation1 [shape = 'u32[144,128]{1,0:T(1,128)}', space=vmem, size = 0x12000, scoped, tag = 'internal scratch']
  #allocation2 [shape = 'f32[128,8]{1,0:T(8,128)}', space=vmem, size = 0x10000, scoped, tag = 'scratch operand']
  #allocation3 [shape = 'f32[128,8]{1,0:T(8,128)}', space=vmem, size = 0x10000, scoped, tag = 'scratch operand']
  #allocation4 [shape = 'f32[128,8]{1,0:T(8,128)}', space=vmem, size = 0x10000, scoped, tag = 'scratch operand']
  #allocation5 [shape = 'f32[32,32]{1,0:T(8,128)}', space=vmem, size = 0x4000, scoped, tag = 'scratch operand']
  %s0 = inlined_call_operand.vmem [shape: f32[8,32,4], index: 0, kind: input, shape index: {}]
  %s1 = inlined_call_operand.vmem [shape: f32[8,4,4], index: 1, kind: input, shape index: {}]
  %s2 = inlined_call_operand.vmem [shape: f32[128,128], index: 2, kind: input, shape index: {}]
  %s3 = inlined_call_operand.hbm [shape: f32[2,32,96], index: 3, kind: input, shape index: {}]
  %s4 = inlined_call_operand.vmem [shape: f32[2,1,96], index: 4, kind: input, shape index: {}]
  %s5 = inlined_call_operand.vmem [shape: f32[8,32,32], index: 5, kind: input, shape index: {}]
  %s6 = inlined_call_operand.vmem [shape: f32[1,32,1], index: 6, kind: input, shape index: {}]
  %s7 = inlined_call_operand.vmem [shape: f32[8,32,4], index: 7, kind: output, shape index: {}]
  %s8 = sld [smem:[#allocation0]]
  $region42: #{transformers_forward.1} parent=0
    _
  %s10 = ssub.s32 1, %s8
  %s11 = scalar_select 0, %s10, %s8
  $region1: #{transformers_forward.1} parent=0
    #allocation6 [shape = 'u8[32768]{0}', space=vmem, size = 0x8000, scoped, tag = 'input window, operand 3, single buffered']
    #allocation7 [shape = 's32[1]{0}', space=sflag, size = 0x4, scoped, tag = 'scoped memory for transformers_forward.1']
    %12 = vsyncpa [#allocation7], 0
    // Predicated region
    $region2: #{transformers_forward.1} parent=1 // pred_check
      _
    $region3: #{transformers_forward.1} parent=1 // pred_check_branch
      %14 = sbr.rel (0) target = $region5
    $region4: #{transformers_forward.1} parent=1 // pred_region
      _
    $region5: #{transformers_forward.1} parent=1 // pred_fallthru
      _
    // Predicated region
    $region6: #{transformers_forward.1} parent=1 // pred_check
      _
    $region7: #{transformers_forward.1} parent=1 // pred_check_branch
      %16 = sbr.rel (0) target = $region9
    $region8: #{transformers_forward.1} parent=1 // pred_region
      _
    $region9: #{transformers_forward.1} parent=1 // pred_fallthru
      _
    // Predicated region
    $region10: #{transformers_forward.1} parent=1 // pred_check
      _
    $region11: #{transformers_forward.1} parent=1 // pred_check_branch
      %18 = sbr.rel (0) target = $region13
    $region12: #{transformers_forward.1} parent=1 // pred_region
      _
    $region13: #{transformers_forward.1} parent=1 // pred_fallthru
      _
    // Predicated region
    $region14: #{transformers_forward.1} parent=1 // pred_check
      _
    $region15: #{transformers_forward.1} parent=1 // pred_check_branch
      %20 = sbr.rel (0) target = $region17
    $region16: #{transformers_forward.1} parent=1 // pred_region
      %s22 = ssub.s32 1024, 1024
      %23 = vsyncadd [#allocation7], %s22
      %s24 = sshll.u32 [#allocation6], 4
      %s25 = int_to_ptr.vmem [resolvable:$true] %s24
      %30 = dma.hbm_to_vmem [thread:$0]  %s3, 1024, %s25, [#allocation7], 128, 128, 8
    $region17: #{transformers_forward.1} parent=1 // pred_fallthru
      _
    // Predicated region
    $region18: #{transformers_forward.1} parent=1 // pred_check
      _
    $region19: #{transformers_forward.1} parent=1 // pred_check_branch
      %32 = sbr.rel (0) target = $region21
    $region20: #{transformers_forward.1} parent=1 // pred_region
      _
    $region21: #{transformers_forward.1} parent=1 // pred_fallthru
      _
    // Predicated region
    $region22: #{transformers_forward.1} parent=1 // pred_check
      _
    $region23: #{transformers_forward.1} parent=1 // pred_check_branch
      %34 = sbr.rel (0) target = $region25
    $region24: #{transformers_forward.1} parent=1 // pred_region
      _
    $region25: #{transformers_forward.1} parent=1 // pred_fallthru
      _
    // Predicated region
    $region26: #{transformers_forward.1} parent=1 // pred_check
      _
    $region27: #{transformers_forward.1} parent=1 // pred_check_branch
      %36 = sbr.rel (0) target = $region29
    $region28: #{transformers_forward.1} parent=1 // pred_region
      _
    $region29: #{transformers_forward.1} parent=1 // pred_fallthru
      _
    // Predicated region
    $region30: #{transformers_forward.1} parent=1 // pred_check
      _
    $region31: #{transformers_forward.1} parent=1 // pred_check_branch
      %38 = sbr.rel (0) target = $region33
    $region32: #{transformers_forward.1} parent=1 // pred_region
      %39 = dma.done [#allocation7], 1024
    $region33: #{transformers_forward.1} parent=1 // pred_fallthru
      _
    %v40 = vld [vmem:[%s0] sm:$0xff]
    %v41 = vld [vmem:[%s0 + $0x8] sm:$0xff]
    %v42 = vld [vmem:[%s0 + $0x10] sm:$0xff]
    %v43 = vld [vmem:[%s0 + $0x18] sm:$0xff]
    %v44 = vld [vmem:[%s0 + $0x20] sm:$0xff]
    %v45 = vld [vmem:[%s0 + $0x28] sm:$0xff]
    %v46 = vld [vmem:[%s0 + $0x30] sm:$0xff]
    %v47 = vld [vmem:[%s0 + $0x38] sm:$0xff]
    %v48 = vld [vmem:[%s0 + $0x40] sm:$0xff]
    %v49 = vld [vmem:[%s0 + $0x48] sm:$0xff]
    %v50 = vld [vmem:[%s0 + $0x50] sm:$0xff]
    %v51 = vld [vmem:[%s0 + $0x58] sm:$0xff]
    %v52 = vld [vmem:[%s0 + $0x60] sm:$0xff]
    %v53 = vld [vmem:[%s0 + $0x68] sm:$0xff]
    %v54 = vld [vmem:[%s0 + $0x70] sm:$0xff]
    %v55 = vld [vmem:[%s0 + $0x78] sm:$0xff]
    %v56 = vld [vmem:[%s0 + $0x80] sm:$0xff]
    %v57 = vld [vmem:[%s0 + $0x88] sm:$0xff]
    %v58 = vld [vmem:[%s0 + $0x90] sm:$0xff]
    %v59 = vld [vmem:[%s0 + $0x98] sm:$0xff]
    %v60 = vld [vmem:[%s0 + $0xa0] sm:$0xff]
    %v61 = vld [vmem:[%s0 + $0xa8] sm:$0xff]
    %v62 = vld [vmem:[%s0 + $0xb0] sm:$0xff]
    %v63 = vld [vmem:[%s0 + $0xb8] sm:$0xff]
    %v64 = vld [vmem:[%s0 + $0xc0] sm:$0xff]
    %v65 = vld [vmem:[%s0 + $0xc8] sm:$0xff]
    %v66 = vld [vmem:[%s0 + $0xd0] sm:$0xff]
    %v67 = vld [vmem:[%s0 + $0xd8] sm:$0xff]
    %v68 = vld [vmem:[%s0 + $0xe0] sm:$0xff]
    %v69 = vld [vmem:[%s0 + $0xe8] sm:$0xff]
    %v70 = vld [vmem:[%s0 + $0xf0] sm:$0xff]
    %v71 = vld [vmem:[%s0 + $0xf8] sm:$0xff]
    %v72 = vlaneseq
    %v73 = vshrl.u32 %v72, 7
    %v74 = vsub.s32 7, %v73
    %v75 = vrot.slane %v43, %v74
    %v76 = vlaneseq
    %v77 = vshrl.u32 %v76, 7
    %v78 = vsub.s32 7, %v77
    %v79 = vrot.slane %v47, %v78
    %v80 = vlaneseq
    %v81 = vshrl.u32 %v80, 7
    %v82 = vsub.s32 7, %v81
    %v83 = vrot.slane %v51, %v82
    %v84 = vlaneseq
    %v85 = vshrl.u32 %v84, 7
    %v86 = vsub.s32 7, %v85
    %v87 = vrot.slane %v55, %v86
    %v88 = vlaneseq
    %v89 = vshrl.u32 %v88, 7
    %v90 = vsub.s32 7, %v89
    %v91 = vrot.slane %v59, %v90
    %v92 = vlaneseq
    %v93 = vshrl.u32 %v92, 7
    %v94 = vsub.s32 7, %v93
    %v95 = vrot.slane %v63, %v94
    %v96 = vlaneseq
    %v97 = vshrl.u32 %v96, 7
    %v98 = vsub.s32 7, %v97
    %v99 = vrot.slane %v67, %v98
    %v100 = vlaneseq
    %v101 = vshrl.u32 %v100, 7
    %v102 = vsub.s32 7, %v101
    %v103 = vrot.slane %v71, %v102
    %v104 = vsub.f32 %v40, %v75
    %v105 = vsub.f32 %v41, %v75
    %v106 = vsub.f32 %v42, %v75
    %v107 = vsub.f32 %v43, %v75
    %v108 = vsub.f32 %v44, %v79
    %v109 = vsub.f32 %v45, %v79
    %v110 = vsub.f32 %v46, %v79
    %v111 = vsub.f32 %v47, %v79
    %v112 = vsub.f32 %v48, %v83
    %v113 = vsub.f32 %v49, %v83
    %v114 = vsub.f32 %v50, %v83
    %v115 = vsub.f32 %v51, %v83
    %v116 = vsub.f32 %v52, %v87
    %v117 = vsub.f32 %v53, %v87
    %v118 = vsub.f32 %v54, %v87
    %v119 = vsub.f32 %v55, %v87
    %v120 = vsub.f32 %v56, %v91
    %v121 = vsub.f32 %v57, %v91
    %v122 = vsub.f32 %v58, %v91
    %v123 = vsub.f32 %v59, %v91
    %v124 = vsub.f32 %v60, %v95
    %v125 = vsub.f32 %v61, %v95
    %v126 = vsub.f32 %v62, %v95
    %v127 = vsub.f32 %v63, %v95
    %v128 = vsub.f32 %v64, %v99
    %v129 = vsub.f32 %v65, %v99
    %v130 = vsub.f32 %v66, %v99
    %v131 = vsub.f32 %v67, %v99
    %v132 = vsub.f32 %v68, %v103
    %v133 = vsub.f32 %v69, %v103
    %v134 = vsub.f32 %v70, %v103
    %v135 = vsub.f32 %v71, %v103
    %v136 = vld [vmem:[%s1] sm:$0xf]
    %v137 = vld [vmem:[%s1 + $0x4] sm:$0xf]
    %v138 = vld [vmem:[%s1 + $0x8] sm:$0xf]
    %v139 = vld [vmem:[%s1 + $0xc] sm:$0xf]
    %v140 = vld [vmem:[%s1 + $0x10] sm:$0xf]
    %v141 = vld [vmem:[%s1 + $0x14] sm:$0xf]
    %v142 = vld [vmem:[%s1 + $0x18] sm:$0xf]
    %v143 = vld [vmem:[%s1 + $0x1c] sm:$0xf]
    %vm144 = vcmask 31744
    %v146 = vsel %vm144, %v136, 0
    %v149 = vsel %vm144, %v104, 0
    %v152 = vsel %vm144, %v105, 0
    %v155 = vsel %vm144, %v106, 0
    %v158 = vsel %vm144, %v107, 0
    %160 = vmatprep.subr.mxu0 0.0
    %161 = vmatpush1.xpose.msra.mxu0 %v149
    %162 = vmatprep.subr.mxu0 0.0
    %163 = vmatpush1.xpose.msra.mxu0 %v152
    %164 = vmatprep.subr.mxu0 0.0
    %165 = vmatpush1.xpose.msra.mxu0 %v155
    %166 = vmatprep.subr.mxu0 0.0
    %167 = vmatpush1.xpose.msra.mxu0 %v158
    %168 = vmatprep.subr.mxu0 0.0
    %169 = vmatpush1.xpose.msra.mxu0 0.0
    %170 = vmatprep.subr.mxu0 0.0
    %171 = vmatpush1.xpose.msra.mxu0 0.0
    %172 = vmatprep.subr.mxu0 0.0
    %173 = vmatpush1.xpose.msra.mxu0 0.0
    %174 = vmatprep.subr.mxu0 0.0
    %175 = vmatpush1.xpose.msra.mxu0 0.0
    %176 = vmatprep.subr.mxu0 0.0
    %177 = vmatpush1.xpose.msra.mxu0 0.0
    %178 = vmatprep.subr.mxu0 0.0
    %179 = vmatpush1.xpose.msra.mxu0 0.0
    %180 = vmatprep.subr.mxu0 0.0
    %181 = vmatpush1.xpose.msra.mxu0 0.0
    %182 = vmatprep.subr.mxu0 0.0
    %183 = vmatpush1.xpose.msra.mxu0 0.0
    %184 = vmatprep.subr.mxu0 0.0
    %185 = vmatpush1.xpose.msra.mxu0 0.0
    %186 = vmatprep.subr.mxu0 0.0
    %187 = vmatpush1.xpose.msra.mxu0 0.0
    %188 = vmatprep.subr.mxu0 0.0
    %189 = vmatpush1.xpose.msra.mxu0 0.0
    %190 = vmatprep.subr.mxu0 0.0
    %191 = vmatpush1.xpose.msra.mxu0 0.0
    %192 = vmatprep.subr.mxu0 0.0
    %193 = vmatpush1.xpose.msra.mxu0 0.0
    %194 = vmatprep.subr.mxu0 0.0
    %195 = vmatpush1.xpose.msra.mxu0 0.0
    %196 = vmatprep.subr.mxu0 0.0
    %197 = vmatpush1.xpose.msra.mxu0 0.0
    %198 = vmatprep.subr.mxu0 0.0
    %199 = vmatpush1.xpose.msra.mxu0 0.0
    %200 = vmatprep.subr.mxu0 0.0
    %201 = vmatpush1.xpose.msra.mxu0 0.0
    %202 = vmatprep.subr.mxu0 0.0
    %203 = vmatpush1.xpose.msra.mxu0 0.0
    %204 = vmatprep.subr.mxu0 0.0
    %205 = vmatpush1.xpose.msra.mxu0 0.0
    %206 = vmatprep.subr.mxu0 0.0
    %207 = vmatpush1.xpose.msra.mxu0 0.0
    %208 = vmatprep.subr.mxu0 0.0
    %209 = vmatpush1.xpose.msra.mxu0 0.0
    %210 = vmatprep.subr.mxu0 0.0
    %211 = vmatpush1.xpose.msra.mxu0 0.0
    %212 = vmatprep.subr.mxu0 0.0
    %213 = vmatpush1.xpose.msra.mxu0 0.0
    %214 = vmatprep.subr.mxu0 0.0
    %215 = vmatpush1.xpose.msra.mxu0 0.0
    %216 = vmatprep.subr.mxu0 0.0
    %217 = vmatpush1.xpose.msra.mxu0 0.0
    %218 = vmatprep.subr.mxu0 0.0
    %219 = vmatpush1.xpose.msra.mxu0 0.0
    %220 = vmatprep.subr.mxu0 0.0
    %221 = vmatpush1.xpose.msra.mxu0 0.0
    %222 = vmatprep.subr.mxu0 0.0
    %223 = vmatpush1.xpose.msra.mxu0 0.0
    %224 = vmatprep.mubr.f32.mxu0 0.0
    %225 = vmatmul.mubr.f32.gmra.mrb[0].mxu0 %v146
    %v226 = vpop.f32.mrb[0].mxu0
    %v227 = vadd.f32 0.0, %v226
    %v228 = vpop.f32.mrb[0].mxu0
    %229 = vdwg.mxu0
    %v231 = vsel %vm144, %v137, 0
    %v234 = vsel %vm144, %v108, 0
    %v237 = vsel %vm144, %v109, 0
    %v240 = vsel %vm144, %v110, 0
    %v243 = vsel %vm144, %v111, 0
    %245 = vmatprep.subr.mxu0 0.0
    %246 = vmatpush1.xpose.msra.mxu0 %v234
    %247 = vmatprep.subr.mxu0 0.0
    %248 = vmatpush1.xpose.msra.mxu0 %v237
    %249 = vmatprep.subr.mxu0 0.0
    %250 = vmatpush1.xpose.msra.mxu0 %v240
    %251 = vmatprep.subr.mxu0 0.0
    %252 = vmatpush1.xpose.msra.mxu0 %v243
    %253 = vmatprep.subr.mxu0 0.0
    %254 = vmatpush1.xpose.msra.mxu0 0.0
    %255 = vmatprep.subr.mxu0 0.0
    %256 = vmatpush1.xpose.msra.mxu0 0.0
    %257 = vmatprep.subr.mxu0 0.0
    %258 = vmatpush1.xpose.msra.mxu0 0.0
    %259 = vmatprep.subr.mxu0 0.0
    %260 = vmatpush1.xpose.msra.mxu0 0.0
    %261 = vmatprep.subr.mxu0 0.0
    %262 = vmatpush1.xpose.msra.mxu0 0.0
    %263 = vmatprep.subr.mxu0 0.0
    %264 = vmatpush1.xpose.msra.mxu0 0.0
    %265 = vmatprep.subr.mxu0 0.0
    %266 = vmatpush1.xpose.msra.mxu0 0.0
    %267 = vmatprep.subr.mxu0 0.0
    %268 = vmatpush1.xpose.msra.mxu0 0.0
    %269 = vmatprep.subr.mxu0 0.0
    %270 = vmatpush1.xpose.msra.mxu0 0.0
    %271 = vmatprep.subr.mxu0 0.0
    %272 = vmatpush1.xpose.msra.mxu0 0.0
    %273 = vmatprep.subr.mxu0 0.0
    %274 = vmatpush1.xpose.msra.mxu0 0.0
    %275 = vmatprep.subr.mxu0 0.0
    %276 = vmatpush1.xpose.msra.mxu0 0.0
    %277 = vmatprep.subr.mxu0 0.0
    %278 = vmatpush1.xpose.msra.mxu0 0.0
    %279 = vmatprep.subr.mxu0 0.0
    %280 = vmatpush1.xpose.msra.mxu0 0.0
    %281 = vmatprep.subr.mxu0 0.0
    %282 = vmatpush1.xpose.msra.mxu0 0.0
    %283 = vmatprep.subr.mxu0 0.0
    %284 = vmatpush1.xpose.msra.mxu0 0.0
    %285 = vmatprep.subr.mxu0 0.0
    %286 = vmatpush1.xpose.msra.mxu0 0.0
    %287 = vmatprep.subr.mxu0 0.0
    %288 = vmatpush1.xpose.msra.mxu0 0.0
    %289 = vmatprep.subr.mxu0 0.0
    %290 = vmatpush1.xpose.msra.mxu0 0.0
    %291 = vmatprep.subr.mxu0 0.0
    %292 = vmatpush1.xpose.msra.mxu0 0.0
    %293 = vmatprep.subr.mxu0 0.0
    %294 = vmatpush1.xpose.msra.mxu0 0.0
    %295 = vmatprep.subr.mxu0 0.0
    %296 = vmatpush1.xpose.msra.mxu0 0.0
    %297 = vmatprep.subr.mxu0 0.0
    %298 = vmatpush1.xpose.msra.mxu0 0.0
    %299 = vmatprep.subr.mxu0 0.0
    %300 = vmatpush1.xpose.msra.mxu0 0.0
    %301 = vmatprep.subr.mxu0 0.0
    %302 = vmatpush1.xpose.msra.mxu0 0.0
    %303 = vmatprep.subr.mxu0 0.0
    %304 = vmatpush1.xpose.msra.mxu0 0.0
    %305 = vmatprep.subr.mxu0 0.0
    %306 = vmatpush1.xpose.msra.mxu0 0.0
    %307 = vmatprep.subr.mxu0 0.0
    %308 = vmatpush1.xpose.msra.mxu0 0.0
    %309 = vmatprep.mubr.f32.mxu0 0.0
    %310 = vmatmul.mubr.f32.gmra.mrb[0].mxu0 %v231
    %v311 = vpop.f32.mrb[0].mxu0
    %v312 = vadd.f32 0.0, %v311
    %v313 = vpop.f32.mrb[0].mxu0
    %314 = vdwg.mxu0
    %v316 = vsel %vm144, %v138, 0
    %v319 = vsel %vm144, %v112, 0
    %v322 = vsel %vm144, %v113, 0
    %v325 = vsel %vm144, %v114, 0
    %v328 = vsel %vm144, %v115, 0
    %330 = vmatprep.subr.mxu0 0.0
    %331 = vmatpush1.xpose.msra.mxu0 %v319
    %332 = vmatprep.subr.mxu0 0.0
    %333 = vmatpush1.xpose.msra.mxu0 %v322
    %334 = vmatprep.subr.mxu0 0.0
    %335 = vmatpush1.xpose.msra.mxu0 %v325
    %336 = vmatprep.subr.mxu0 0.0
    %337 = vmatpush1.xpose.msra.mxu0 %v328
    %338 = vmatprep.subr.mxu0 0.0
    %339 = vmatpush1.xpose.msra.mxu0 0.0
    %340 = vmatprep.subr.mxu0 0.0
    %341 = vmatpush1.xpose.msra.mxu0 0.0
    %342 = vmatprep.subr.mxu0 0.0
    %343 = vmatpush1.xpose.msra.mxu0 0.0
    %344 = vmatprep.subr.mxu0 0.0
    %345 = vmatpush1.xpose.msra.mxu0 0.0
    %346 = vmatprep.subr.mxu0 0.0
    %347 = vmatpush1.xpose.msra.mxu0 0.0
    %348 = vmatprep.subr.mxu0 0.0
    %349 = vmatpush1.xpose.msra.mxu0 0.0
    %350 = vmatprep.subr.mxu0 0.0
    %351 = vmatpush1.xpose.msra.mxu0 0.0
    %352 = vmatprep.subr.mxu0 0.0
    %353 = vmatpush1.xpose.msra.mxu0 0.0
    %354 = vmatprep.subr.mxu0 0.0
    %355 = vmatpush1.xpose.msra.mxu0 0.0
    %356 = vmatprep.subr.mxu0 0.0
    %357 = vmatpush1.xpose.msra.mxu0 0.0
    %358 = vmatprep.subr.mxu0 0.0
    %359 = vmatpush1.xpose.msra.mxu0 0.0
    %360 = vmatprep.subr.mxu0 0.0
    %361 = vmatpush1.xpose.msra.mxu0 0.0
    %362 = vmatprep.subr.mxu0 0.0
    %363 = vmatpush1.xpose.msra.mxu0 0.0
    %364 = vmatprep.subr.mxu0 0.0
    %365 = vmatpush1.xpose.msra.mxu0 0.0
    %366 = vmatprep.subr.mxu0 0.0
    %367 = vmatpush1.xpose.msra.mxu0 0.0
    %368 = vmatprep.subr.mxu0 0.0
    %369 = vmatpush1.xpose.msra.mxu0 0.0
    %370 = vmatprep.subr.mxu0 0.0
    %371 = vmatpush1.xpose.msra.mxu0 0.0
    %372 = vmatprep.subr.mxu0 0.0
    %373 = vmatpush1.xpose.msra.mxu0 0.0
    %374 = vmatprep.subr.mxu0 0.0
    %375 = vmatpush1.xpose.msra.mxu0 0.0
    %376 = vmatprep.subr.mxu0 0.0
    %377 = vmatpush1.xpose.msra.mxu0 0.0
    %378 = vmatprep.subr.mxu0 0.0
    %379 = vmatpush1.xpose.msra.mxu0 0.0
    %380 = vmatprep.subr.mxu0 0.0
    %381 = vmatpush1.xpose.msra.mxu0 0.0
    %382 = vmatprep.subr.mxu0 0.0
    %383 = vmatpush1.xpose.msra.mxu0 0.0
    %384 = vmatprep.subr.mxu0 0.0
    %385 = vmatpush1.xpose.msra.mxu0 0.0
    %386 = vmatprep.subr.mxu0 0.0
    %387 = vmatpush1.xpose.msra.mxu0 0.0
    %388 = vmatprep.subr.mxu0 0.0
    %389 = vmatpush1.xpose.msra.mxu0 0.0
    %390 = vmatprep.subr.mxu0 0.0
    %391 = vmatpush1.xpose.msra.mxu0 0.0
    %392 = vmatprep.subr.mxu0 0.0
    %393 = vmatpush1.xpose.msra.mxu0 0.0
    %394 = vmatprep.mubr.f32.mxu0 0.0
    %395 = vmatmul.mubr.f32.gmra.mrb[0].mxu0 %v316
    %v396 = vpop.f32.mrb[0].mxu0
    %v397 = vadd.f32 0.0, %v396
    %v398 = vpop.f32.mrb[0].mxu0
    %399 = vdwg.mxu0
    %v401 = vsel %vm144, %v139, 0
    %v404 = vsel %vm144, %v116, 0
    %v407 = vsel %vm144, %v117, 0
    %v410 = vsel %vm144, %v118, 0
    %v413 = vsel %vm144, %v119, 0
    %415 = vmatprep.subr.mxu0 0.0
    %416 = vmatpush1.xpose.msra.mxu0 %v404
    %417 = vmatprep.subr.mxu0 0.0
    %418 = vmatpush1.xpose.msra.mxu0 %v407
    %419 = vmatprep.subr.mxu0 0.0
    %420 = vmatpush1.xpose.msra.mxu0 %v410
    %421 = vmatprep.subr.mxu0 0.0
    %422 = vmatpush1.xpose.msra.mxu0 %v413
    %423 = vmatprep.subr.mxu0 0.0
    %424 = vmatpush1.xpose.msra.mxu0 0.0
    %425 = vmatprep.subr.mxu0 0.0
    %426 = vmatpush1.xpose.msra.mxu0 0.0
    %427 = vmatprep.subr.mxu0 0.0
    %428 = vmatpush1.xpose.msra.mxu0 0.0
    %429 = vmatprep.subr.mxu0 0.0
    %430 = vmatpush1.xpose.msra.mxu0 0.0
    %431 = vmatprep.subr.mxu0 0.0
    %432 = vmatpush1.xpose.msra.mxu0 0.0
    %433 = vmatprep.subr.mxu0 0.0
    %434 = vmatpush1.xpose.msra.mxu0 0.0
    %435 = vmatprep.subr.mxu0 0.0
    %436 = vmatpush1.xpose.msra.mxu0 0.0
    %437 = vmatprep.subr.mxu0 0.0
    %438 = vmatpush1.xpose.msra.mxu0 0.0
    %439 = vmatprep.subr.mxu0 0.0
    %440 = vmatpush1.xpose.msra.mxu0 0.0
    %441 = vmatprep.subr.mxu0 0.0
    %442 = vmatpush1.xpose.msra.mxu0 0.0
    %443 = vmatprep.subr.mxu0 0.0
    %444 = vmatpush1.xpose.msra.mxu0 0.0
    %445 = vmatprep.subr.mxu0 0.0
    %446 = vmatpush1.xpose.msra.mxu0 0.0
    %447 = vmatprep.subr.mxu0 0.0
    %448 = vmatpush1.xpose.msra.mxu0 0.0
    %449 = vmatprep.subr.mxu0 0.0
    %450 = vmatpush1.xpose.msra.mxu0 0.0
    %451 = vmatprep.subr.mxu0 0.0
    %452 = vmatpush1.xpose.msra.mxu0 0.0
    %453 = vmatprep.subr.mxu0 0.0
    %454 = vmatpush1.xpose.msra.mxu0 0.0
    %455 = vmatprep.subr.mxu0 0.0
    %456 = vmatpush1.xpose.msra.mxu0 0.0
    %457 = vmatprep.subr.mxu0 0.0
    %458 = vmatpush1.xpose.msra.mxu0 0.0
    %459 = vmatprep.subr.mxu0 0.0
    %460 = vmatpush1.xpose.msra.mxu0 0.0
    %461 = vmatprep.subr.mxu0 0.0
    %462 = vmatpush1.xpose.msra.mxu0 0.0
    %463 = vmatprep.subr.mxu0 0.0
    %464 = vmatpush1.xpose.msra.mxu0 0.0
    %465 = vmatprep.subr.mxu0 0.0
    %466 = vmatpush1.xpose.msra.mxu0 0.0
    %467 = vmatprep.subr.mxu0 0.0
    %468 = vmatpush1.xpose.msra.mxu0 0.0
    %469 = vmatprep.subr.mxu0 0.0
    %470 = vmatpush1.xpose.msra.mxu0 0.0
    %471 = vmatprep.subr.mxu0 0.0
    %472 = vmatpush1.xpose.msra.mxu0 0.0
    %473 = vmatprep.subr.mxu0 0.0
    %474 = vmatpush1.xpose.msra.mxu0 0.0
    %475 = vmatprep.subr.mxu0 0.0
    %476 = vmatpush1.xpose.msra.mxu0 0.0
    %477 = vmatprep.subr.mxu0 0.0
    %478 = vmatpush1.xpose.msra.mxu0 0.0
    %479 = vmatprep.mubr.f32.mxu0 0.0
    %480 = vmatmul.mubr.f32.gmra.mrb[0].mxu0 %v401
    %v481 = vpop.f32.mrb[0].mxu0
    %v482 = vadd.f32 0.0, %v481
    %v483 = vpop.f32.mrb[0].mxu0
    %484 = vdwg.mxu0
    %v486 = vsel %vm144, %v140, 0
    %v489 = vsel %vm144, %v120, 0
    %v492 = vsel %vm144, %v121, 0
    %v495 = vsel %vm144, %v122, 0
    %v498 = vsel %vm144, %v123, 0
    %500 = vmatprep.subr.mxu0 0.0
    %501 = vmatpush1.xpose.msra.mxu0 %v489
    %502 = vmatprep.subr.mxu0 0.0
    %503 = vmatpush1.xpose.msra.mxu0 %v492
    %504 = vmatprep.subr.mxu0 0.0
    %505 = vmatpush1.xpose.msra.mxu0 %v495
    %506 = vmatprep.subr.mxu0 0.0
    %507 = vmatpush1.xpose.msra.mxu0 %v498
    %508 = vmatprep.subr.mxu0 0.0
    %509 = vmatpush1.xpose.msra.mxu0 0.0
    %510 = vmatprep.subr.mxu0 0.0
    %511 = vmatpush1.xpose.msra.mxu0 0.0
    %512 = vmatprep.subr.mxu0 0.0
    %513 = vmatpush1.xpose.msra.mxu0 0.0
    %514 = vmatprep.subr.mxu0 0.0
    %515 = vmatpush1.xpose.msra.mxu0 0.0
    %516 = vmatprep.subr.mxu0 0.0
    %517 = vmatpush1.xpose.msra.mxu0 0.0
    %518 = vmatprep.subr.mxu0 0.0
    %519 = vmatpush1.xpose.msra.mxu0 0.0
    %520 = vmatprep.subr.mxu0 0.0
    %521 = vmatpush1.xpose.msra.mxu0 0.0
    %522 = vmatprep.subr.mxu0 0.0
    %523 = vmatpush1.xpose.msra.mxu0 0.0
    %524 = vmatprep.subr.mxu0 0.0
    %525 = vmatpush1.xpose.msra.mxu0 0.0
    %526 = vmatprep.subr.mxu0 0.0
    %527 = vmatpush1.xpose.msra.mxu0 0.0
    %528 = vmatprep.subr.mxu0 0.0
    %529 = vmatpush1.xpose.msra.mxu0 0.0
    %530 = vmatprep.subr.mxu0 0.0
    %531 = vmatpush1.xpose.msra.mxu0 0.0
    %532 = vmatprep.subr.mxu0 0.0
    %533 = vmatpush1.xpose.msra.mxu0 0.0
    %534 = vmatprep.subr.mxu0 0.0
    %535 = vmatpush1.xpose.msra.mxu0 0.0
    %536 = vmatprep.subr.mxu0 0.0
    %537 = vmatpush1.xpose.msra.mxu0 0.0
    %538 = vmatprep.subr.mxu0 0.0
    %539 = vmatpush1.xpose.msra.mxu0 0.0
    %540 = vmatprep.subr.mxu0 0.0
    %541 = vmatpush1.xpose.msra.mxu0 0.0
    %542 = vmatprep.subr.mxu0 0.0
    %543 = vmatpush1.xpose.msra.mxu0 0.0
    %544 = vmatprep.subr.mxu0 0.0
    %545 = vmatpush1.xpose.msra.mxu0 0.0
    %546 = vmatprep.subr.mxu0 0.0
    %547 = vmatpush1.xpose.msra.mxu0 0.0
    %548 = vmatprep.subr.mxu0 0.0
    %549 = vmatpush1.xpose.msra.mxu0 0.0
    %550 = vmatprep.subr.mxu0 0.0
    %551 = vmatpush1.xpose.msra.mxu0 0.0
    %552 = vmatprep.subr.mxu0 0.0
    %553 = vmatpush1.xpose.msra.mxu0 0.0
    %554 = vmatprep.subr.mxu0 0.0
    %555 = vmatpush1.xpose.msra.mxu0 0.0
    %556 = vmatprep.subr.mxu0 0.0
    %557 = vmatpush1.xpose.msra.mxu0 0.0
    %558 = vmatprep.subr.mxu0 0.0
    %559 = vmatpush1.xpose.msra.mxu0 0.0
    %560 = vmatprep.subr.mxu0 0.0
    %561 = vmatpush1.xpose.msra.mxu0 0.0
    %562 = vmatprep.subr.mxu0 0.0
    %563 = vmatpush1.xpose.msra.mxu0 0.0
    %564 = vmatprep.mubr.f32.mxu0 0.0
    %565 = vmatmul.mubr.f32.gmra.mrb[0].mxu0 %v486
    %v566 = vpop.f32.mrb[0].mxu0
    %v567 = vadd.f32 0.0, %v566
    %v568 = vpop.f32.mrb[0].mxu0
    %569 = vdwg.mxu0
    %v571 = vsel %vm144, %v141, 0
    %v574 = vsel %vm144, %v124, 0
    %v577 = vsel %vm144, %v125, 0
    %v580 = vsel %vm144, %v126, 0
    %v583 = vsel %vm144, %v127, 0
    %585 = vmatprep.subr.mxu0 0.0
    %586 = vmatpush1.xpose.msra.mxu0 %v574
    %587 = vmatprep.subr.mxu0 0.0
    %588 = vmatpush1.xpose.msra.mxu0 %v577
    %589 = vmatprep.subr.mxu0 0.0
    %590 = vmatpush1.xpose.msra.mxu0 %v580
    %591 = vmatprep.subr.mxu0 0.0
    %592 = vmatpush1.xpose.msra.mxu0 %v583
    %593 = vmatprep.subr.mxu0 0.0
    %594 = vmatpush1.xpose.msra.mxu0 0.0
    %595 = vmatprep.subr.mxu0 0.0
    %596 = vmatpush1.xpose.msra.mxu0 0.0
    %597 = vmatprep.subr.mxu0 0.0
    %598 = vmatpush1.xpose.msra.mxu0 0.0
    %599 = vmatprep.subr.mxu0 0.0
    %600 = vmatpush1.xpose.msra.mxu0 0.0
    %601 = vmatprep.subr.mxu0 0.0
    %602 = vmatpush1.xpose.msra.mxu0 0.0
    %603 = vmatprep.subr.mxu0 0.0
    %604 = vmatpush1.xpose.msra.mxu0 0.0
    %605 = vmatprep.subr.mxu0 0.0
    %606 = vmatpush1.xpose.msra.mxu0 0.0
    %607 = vmatprep.subr.mxu0 0.0
    %608 = vmatpush1.xpose.msra.mxu0 0.0
    %609 = vmatprep.subr.mxu0 0.0
    %610 = vmatpush1.xpose.msra.mxu0 0.0
    %611 = vmatprep.subr.mxu0 0.0
    %612 = vmatpush1.xpose.msra.mxu0 0.0
    %613 = vmatprep.subr.mxu0 0.0
    %614 = vmatpush1.xpose.msra.mxu0 0.0
    %615 = vmatprep.subr.mxu0 0.0
    %616 = vmatpush1.xpose.msra.mxu0 0.0
    %617 = vmatprep.subr.mxu0 0.0
    %618 = vmatpush1.xpose.msra.mxu0 0.0
    %619 = vmatprep.subr.mxu0 0.0
    %620 = vmatpush1.xpose.msra.mxu0 0.0
    %621 = vmatprep.subr.mxu0 0.0
    %622 = vmatpush1.xpose.msra.mxu0 0.0
    %623 = vmatprep.subr.mxu0 0.0
    %624 = vmatpush1.xpose.msra.mxu0 0.0
    %625 = vmatprep.subr.mxu0 0.0
    %626 = vmatpush1.xpose.msra.mxu0 0.0
    %627 = vmatprep.subr.mxu0 0.0
    %628 = vmatpush1.xpose.msra.mxu0 0.0
    %629 = vmatprep.subr.mxu0 0.0
    %630 = vmatpush1.xpose.msra.mxu0 0.0
    %631 = vmatprep.subr.mxu0 0.0
    %632 = vmatpush1.xpose.msra.mxu0 0.0
    %633 = vmatprep.subr.mxu0 0.0
    %634 = vmatpush1.xpose.msra.mxu0 0.0
    %635 = vmatprep.subr.mxu0 0.0
    %636 = vmatpush1.xpose.msra.mxu0 0.0
    %637 = vmatprep.subr.mxu0 0.0
    %638 = vmatpush1.xpose.msra.mxu0 0.0
    %639 = vmatprep.subr.mxu0 0.0
    %640 = vmatpush1.xpose.msra.mxu0 0.0
    %641 = vmatprep.subr.mxu0 0.0
    %642 = vmatpush1.xpose.msra.mxu0 0.0
    %643 = vmatprep.subr.mxu0 0.0
    %644 = vmatpush1.xpose.msra.mxu0 0.0
    %645 = vmatprep.subr.mxu0 0.0
    %646 = vmatpush1.xpose.msra.mxu0 0.0
    %647 = vmatprep.subr.mxu0 0.0
    %648 = vmatpush1.xpose.msra.mxu0 0.0
    %649 = vmatprep.mubr.f32.mxu0 0.0
    %650 = vmatmul.mubr.f32.gmra.mrb[0].mxu0 %v571
    %v651 = vpop.f32.mrb[0].mxu0
    %v652 = vadd.f32 0.0, %v651
    %v653 = vpop.f32.mrb[0].mxu0
    %654 = vdwg.mxu0
    %v656 = vsel %vm144, %v142, 0
    %v659 = vsel %vm144, %v128, 0
    %v662 = vsel %vm144, %v129, 0
    %v665 = vsel %vm144, %v130, 0
    %v668 = vsel %vm144, %v131, 0
    %670 = vmatprep.subr.mxu0 0.0
    %671 = vmatpush1.xpose.msra.mxu0 %v659
    %672 = vmatprep.subr.mxu0 0.0
    %673 = vmatpush1.xpose.msra.mxu0 %v662
    %674 = vmatprep.subr.mxu0 0.0
    %675 = vmatpush1.xpose.msra.mxu0 %v665
    %676 = vmatprep.subr.mxu0 0.0
    %677 = vmatpush1.xpose.msra.mxu0 %v668
    %678 = vmatprep.subr.mxu0 0.0
    %679 = vmatpush1.xpose.msra.mxu0 0.0
    %680 = vmatprep.subr.mxu0 0.0
    %681 = vmatpush1.xpose.msra.mxu0 0.0
    %682 = vmatprep.subr.mxu0 0.0
    %683 = vmatpush1.xpose.msra.mxu0 0.0
    %684 = vmatprep.subr.mxu0 0.0
    %685 = vmatpush1.xpose.msra.mxu0 0.0
    %686 = vmatprep.subr.mxu0 0.0
    %687 = vmatpush1.xpose.msra.mxu0 0.0
    %688 = vmatprep.subr.mxu0 0.0
    %689 = vmatpush1.xpose.msra.mxu0 0.0
    %690 = vmatprep.subr.mxu0 0.0
    %691 = vmatpush1.xpose.msra.mxu0 0.0
    %692 = vmatprep.subr.mxu0 0.0
    %693 = vmatpush1.xpose.msra.mxu0 0.0
    %694 = vmatprep.subr.mxu0 0.0
    %695 = vmatpush1.xpose.msra.mxu0 0.0
    %696 = vmatprep.subr.mxu0 0.0
    %697 = vmatpush1.xpose.msra.mxu0 0.0
    %698 = vmatprep.subr.mxu0 0.0
    %699 = vmatpush1.xpose.msra.mxu0 0.0
    %700 = vmatprep.subr.mxu0 0.0
    %701 = vmatpush1.xpose.msra.mxu0 0.0
    %702 = vmatprep.subr.mxu0 0.0
    %703 = vmatpush1.xpose.msra.mxu0 0.0
    %704 = vmatprep.subr.mxu0 0.0
    %705 = vmatpush1.xpose.msra.mxu0 0.0
    %706 = vmatprep.subr.mxu0 0.0
    %707 = vmatpush1.xpose.msra.mxu0 0.0
    %708 = vmatprep.subr.mxu0 0.0
    %709 = vmatpush1.xpose.msra.mxu0 0.0
    %710 = vmatprep.subr.mxu0 0.0
    %711 = vmatpush1.xpose.msra.mxu0 0.0
    %712 = vmatprep.subr.mxu0 0.0
    %713 = vmatpush1.xpose.msra.mxu0 0.0
    %714 = vmatprep.subr.mxu0 0.0
    %715 = vmatpush1.xpose.msra.mxu0 0.0
    %716 = vmatprep.subr.mxu0 0.0
    %717 = vmatpush1.xpose.msra.mxu0 0.0
    %718 = vmatprep.subr.mxu0 0.0
    %719 = vmatpush1.xpose.msra.mxu0 0.0
    %720 = vmatprep.subr.mxu0 0.0
    %721 = vmatpush1.xpose.msra.mxu0 0.0
    %722 = vmatprep.subr.mxu0 0.0
    %723 = vmatpush1.xpose.msra.mxu0 0.0
    %724 = vmatprep.subr.mxu0 0.0
    %725 = vmatpush1.xpose.msra.mxu0 0.0
    %726 = vmatprep.subr.mxu0 0.0
    %727 = vmatpush1.xpose.msra.mxu0 0.0
    %728 = vmatprep.subr.mxu0 0.0
    %729 = vmatpush1.xpose.msra.mxu0 0.0
    %730 = vmatprep.subr.mxu0 0.0
    %731 = vmatpush1.xpose.msra.mxu0 0.0
    %732 = vmatprep.subr.mxu0 0.0
    %733 = vmatpush1.xpose.msra.mxu0 0.0
    %734 = vmatprep.mubr.f32.mxu0 0.0
    %735 = vmatmul.mubr.f32.gmra.mrb[0].mxu0 %v656
    %v736 = vpop.f32.mrb[0].mxu0
    %v737 = vadd.f32 0.0, %v736
    %v738 = vpop.f32.mrb[0].mxu0
    %739 = vdwg.mxu0
    %v741 = vsel %vm144, %v143, 0
    %v744 = vsel %vm144, %v132, 0
    %v747 = vsel %vm144, %v133, 0
    %v750 = vsel %vm144, %v134, 0
    %v753 = vsel %vm144, %v135, 0
    %755 = vmatprep.subr.mxu0 0.0
    %756 = vmatpush1.xpose.msra.mxu0 %v744
    %757 = vmatprep.subr.mxu0 0.0
    %758 = vmatpush1.xpose.msra.mxu0 %v747
    %759 = vmatprep.subr.mxu0 0.0
    %760 = vmatpush1.xpose.msra.mxu0 %v750
    %761 = vmatprep.subr.mxu0 0.0
    %762 = vmatpush1.xpose.msra.mxu0 %v753
    %763 = vmatprep.subr.mxu0 0.0
    %764 = vmatpush1.xpose.msra.mxu0 0.0
    %765 = vmatprep.subr.mxu0 0.0
    %766 = vmatpush1.xpose.msra.mxu0 0.0
    %767 = vmatprep.subr.mxu0 0.0
    %768 = vmatpush1.xpose.msra.mxu0 0.0
    %769 = vmatprep.subr.mxu0 0.0
    %770 = vmatpush1.xpose.msra.mxu0 0.0
    %771 = vmatprep.subr.mxu0 0.0
    %772 = vmatpush1.xpose.msra.mxu0 0.0
    %773 = vmatprep.subr.mxu0 0.0
    %774 = vmatpush1.xpose.msra.mxu0 0.0
    %775 = vmatprep.subr.mxu0 0.0
    %776 = vmatpush1.xpose.msra.mxu0 0.0
    %777 = vmatprep.subr.mxu0 0.0
    %778 = vmatpush1.xpose.msra.mxu0 0.0
    %779 = vmatprep.subr.mxu0 0.0
    %780 = vmatpush1.xpose.msra.mxu0 0.0
    %781 = vmatprep.subr.mxu0 0.0
    %782 = vmatpush1.xpose.msra.mxu0 0.0
    %783 = vmatprep.subr.mxu0 0.0
    %784 = vmatpush1.xpose.msra.mxu0 0.0
    %785 = vmatprep.subr.mxu0 0.0
    %786 = vmatpush1.xpose.msra.mxu0 0.0
    %787 = vmatprep.subr.mxu0 0.0
    %788 = vmatpush1.xpose.msra.mxu0 0.0
    %789 = vmatprep.subr.mxu0 0.0
    %790 = vmatpush1.xpose.msra.mxu0 0.0
    %791 = vmatprep.subr.mxu0 0.0
    %792 = vmatpush1.xpose.msra.mxu0 0.0
    %793 = vmatprep.subr.mxu0 0.0
    %794 = vmatpush1.xpose.msra.mxu0 0.0
    %795 = vmatprep.subr.mxu0 0.0
    %796 = vmatpush1.xpose.msra.mxu0 0.0
    %797 = vmatprep.subr.mxu0 0.0
    %798 = vmatpush1.xpose.msra.mxu0 0.0
    %799 = vmatprep.subr.mxu0 0.0
    %800 = vmatpush1.xpose.msra.mxu0 0.0
    %801 = vmatprep.subr.mxu0 0.0
    %802 = vmatpush1.xpose.msra.mxu0 0.0
    %803 = vmatprep.subr.mxu0 0.0
    %804 = vmatpush1.xpose.msra.mxu0 0.0
    %805 = vmatprep.subr.mxu0 0.0
    %806 = vmatpush1.xpose.msra.mxu0 0.0
    %807 = vmatprep.subr.mxu0 0.0
    %808 = vmatpush1.xpose.msra.mxu0 0.0
    %809 = vmatprep.subr.mxu0 0.0
    %810 = vmatpush1.xpose.msra.mxu0 0.0
    %811 = vmatprep.subr.mxu0 0.0
    %812 = vmatpush1.xpose.msra.mxu0 0.0
    %813 = vmatprep.subr.mxu0 0.0
    %814 = vmatpush1.xpose.msra.mxu0 0.0
    %815 = vmatprep.subr.mxu0 0.0
    %816 = vmatpush1.xpose.msra.mxu0 0.0
    %817 = vmatprep.subr.mxu0 0.0
    %818 = vmatpush1.xpose.msra.mxu0 0.0
    %819 = vmatprep.mubr.f32.mxu0 0.0
    %820 = vmatmul.mubr.f32.gmra.mrb[0].mxu0 %v741
    %v821 = vpop.f32.mrb[0].mxu0
    %v822 = vadd.f32 0.0, %v821
    %v823 = vpop.f32.mrb[0].mxu0
    %824 = vdwg.mxu0
    %v825 = vld [vmem:[%s2] sm:$0xff]
    %v826 = vld [vmem:[%s2 + $0x8] sm:$0xff]
    %v827 = vld [vmem:[%s2 + $0x10] sm:$0xff]
    %v828 = vld [vmem:[%s2 + $0x18] sm:$0xff]
    %v829 = vld [vmem:[%s2 + $0x20] sm:$0xff]
    %v830 = vld [vmem:[%s2 + $0x28] sm:$0xff]
    %v831 = vld [vmem:[%s2 + $0x30] sm:$0xff]
    %v832 = vld [vmem:[%s2 + $0x38] sm:$0xff]
    %v833 = vld [vmem:[%s2 + $0x40] sm:$0xff]
    %v834 = vld [vmem:[%s2 + $0x48] sm:$0xff]
    %v835 = vld [vmem:[%s2 + $0x50] sm:$0xff]
    %v836 = vld [vmem:[%s2 + $0x58] sm:$0xff]
    %v837 = vld [vmem:[%s2 + $0x60] sm:$0xff]
    %v838 = vld [vmem:[%s2 + $0x68] sm:$0xff]
    %v839 = vld [vmem:[%s2 + $0x70] sm:$0xff]
    %v840 = vld [vmem:[%s2 + $0x78] sm:$0xff]
    %v841 = vld [vmem:[#allocation6] sm:$0xff]
    %v842 = vld [vmem:[#allocation6 + $0x8] sm:$0xff]
    %v843 = vld [vmem:[#allocation6 + $0x10] sm:$0xff]
    %v844 = vld [vmem:[#allocation6 + $0x18] sm:$0xff]
    %v845 = vld [vmem:[%s4] sm:$0x1]
    %v847 = vlaneseq
    %v848 = vshrl.u32 %v847, 7
    %v849 = vsub.s32 0, %v848
    %v850 = vrot.slane %v845, %v849
    %v860 = vcombine.low %v227, %v312
    %v861 = vcombine.low %v397, %v482
    %v862 = vcombine.low %v567, %v652
    %v863 = vcombine.low %v737, %v822
    %vm864 = vcmask 261120
    %v865 = vsel %vm864, %v860, 0
    %v867 = vsel %vm864, %v861, 0
    %v869 = vsel %vm864, %v862, 0
    %v871 = vsel %vm864, %v863, 0
    %873 = vmatprep.subr.mxu0 0.0
    %874 = vmatpush1.msra.mxu0 %v841
    %875 = vmatprep.subr.mxu0 0.0
    %876 = vmatpush1.msra.mxu0 %v842
    %877 = vmatprep.subr.mxu0 0.0
    %878 = vmatpush1.msra.mxu0 %v843
    %879 = vmatprep.subr.mxu0 0.0
    %880 = vmatpush1.msra.mxu0 %v844
    %881 = vmatprep.subr.mxu0 0.0
    %882 = vmatpush1.msra.mxu0 0.0
    %883 = vmatprep.subr.mxu0 0.0
    %884 = vmatpush1.msra.mxu0 0.0
    %885 = vmatprep.subr.mxu0 0.0
    %886 = vmatpush1.msra.mxu0 0.0
    %887 = vmatprep.subr.mxu0 0.0
    %888 = vmatpush1.msra.mxu0 0.0
    %889 = vmatprep.subr.mxu0 0.0
    %890 = vmatpush1.msra.mxu0 0.0
    %891 = vmatprep.subr.mxu0 0.0
    %892 = vmatpush1.msra.mxu0 0.0
    %893 = vmatprep.subr.mxu0 0.0
    %894 = vmatpush1.msra.mxu0 0.0
    %895 = vmatprep.subr.mxu0 0.0
    %896 = vmatpush1.msra.mxu0 0.0
    %897 = vmatprep.subr.mxu0 0.0
    %898 = vmatpush1.msra.mxu0 0.0
    %899 = vmatprep.subr.mxu0 0.0
    %900 = vmatpush1.msra.mxu0 0.0
    %901 = vmatprep.subr.mxu0 0.0
    %902 = vmatpush1.msra.mxu0 0.0
    %903 = vmatprep.subr.mxu0 0.0
    %904 = vmatpush1.msra.mxu0 0.0
    %905 = vmatprep.subr.mxu0 0.0
    %906 = vmatpush1.msra.mxu0 0.0
    %907 = vmatprep.subr.mxu0 0.0
    %908 = vmatpush1.msra.mxu0 0.0
    %909 = vmatprep.subr.mxu0 0.0
    %910 = vmatpush1.msra.mxu0 0.0
    %911 = vmatprep.subr.mxu0 0.0
    %912 = vmatpush1.msra.mxu0 0.0
    %913 = vmatprep.subr.mxu0 0.0
    %914 = vmatpush1.msra.mxu0 0.0
    %915 = vmatprep.subr.mxu0 0.0
    %916 = vmatpush1.msra.mxu0 0.0
    %917 = vmatprep.subr.mxu0 0.0
    %918 = vmatpush1.msra.mxu0 0.0
    %919 = vmatprep.subr.mxu0 0.0
    %920 = vmatpush1.msra.mxu0 0.0
    %921 = vmatprep.subr.mxu0 0.0
    %922 = vmatpush1.msra.mxu0 0.0
    %923 = vmatprep.subr.mxu0 0.0
    %924 = vmatpush1.msra.mxu0 0.0
    %925 = vmatprep.subr.mxu0 0.0
    %926 = vmatpush1.msra.mxu0 0.0
    %927 = vmatprep.subr.mxu0 0.0
    %928 = vmatpush1.msra.mxu0 0.0
    %929 = vmatprep.subr.mxu0 0.0
    %930 = vmatpush1.msra.mxu0 0.0
    %931 = vmatprep.subr.mxu0 0.0
    %932 = vmatpush1.msra.mxu0 0.0
    %933 = vmatprep.subr.mxu0 0.0
    %934 = vmatpush1.msra.mxu0 0.0
    %935 = vmatprep.subr.mxu0 0.0
    %936 = vmatpush1.msra.mxu0 0.0
    %937 = vmatprep.mubr.f32.mxu0 0.0
    %938 = vmatmul.mubr.f32.gmra.mrb[0].mxu0 %v865
    %v939 = vpop.f32.mrb[0].mxu0
    %v940 = vadd.f32 %v850, %v939
    %v941 = vpop.f32.mrb[0].mxu0
    %942 = vmatprep.mubr.f32.mxu0 0.0
    %943 = vmatmul.mubr.f32.gmra.mrb[0].mxu0 %v867
    %v944 = vpop.f32.mrb[0].mxu0
    %v945 = vadd.f32 %v850, %v944
    %v946 = vpop.f32.mrb[0].mxu0
    %947 = vmatprep.mubr.f32.mxu0 0.0
    %948 = vmatmul.mubr.f32.gmra.mrb[0].mxu0 %v869
    %v949 = vpop.f32.mrb[0].mxu0
    %v950 = vadd.f32 %v850, %v949
    %v951 = vpop.f32.mrb[0].mxu0
    %952 = vmatprep.mubr.f32.mxu0 0.0
    %953 = vmatmul.mubr.f32.gmra.mrb[0].mxu0 %v871
    %v954 = vpop.f32.mrb[0].mxu0
    %v955 = vadd.f32 %v850, %v954
    %v956 = vpop.f32.mrb[0].mxu0
    %957 = vdwg.mxu0
    %vm958 = vcmask 64512
    %959 = vst.msk [vmem:[#allocation2] sm:$0xff] %vm958, %v940
    %960 = vst.msk [vmem:[#allocation2 + $0x8] sm:$0xff] %vm958, %v945
    %961 = vst.msk [vmem:[#allocation2 + $0x10] sm:$0xff] %vm958, %v950
    %962 = vst.msk [vmem:[#allocation2 + $0x18] sm:$0xff] %vm958, %v955
    %967 = vrot.lane.b32.xlu0 %v940, 96
    %v968 = vpop.permute.xlu0 %967
    %969 = vrot.lane.b32.xlu0 %v945, 96
    %v970 = vpop.permute.xlu0 %969
    %971 = vrot.lane.b32.xlu0 %v950, 96
    %v972 = vpop.permute.xlu0 %971
    %973 = vrot.lane.b32.xlu0 %v955, 96
    %v974 = vpop.permute.xlu0 %973
    %979 = vst.msk [vmem:[#allocation3] sm:$0xff] %vm958, %v968
    %980 = vst.msk [vmem:[#allocation3 + $0x8] sm:$0xff] %vm958, %v970
    %981 = vst.msk [vmem:[#allocation3 + $0x10] sm:$0xff] %vm958, %v972
    %982 = vst.msk [vmem:[#allocation3 + $0x18] sm:$0xff] %vm958, %v974
    %983 = vrot.lane.b32.xlu0 %v940, 64
    %v984 = vpop.permute.xlu0 %983
    %985 = vrot.lane.b32.xlu0 %v945, 64
    %v986 = vpop.permute.xlu0 %985
    %987 = vrot.lane.b32.xlu0 %v950, 64
    %v988 = vpop.permute.xlu0 %987
    %989 = vrot.lane.b32.xlu0 %v955, 64
    %v990 = vpop.permute.xlu0 %989
    %995 = vst.msk [vmem:[#allocation4] sm:$0xff] %vm958, %v984
    %996 = vst.msk [vmem:[#allocation4 + $0x8] sm:$0xff] %vm958, %v986
    %997 = vst.msk [vmem:[#allocation4 + $0x10] sm:$0xff] %vm958, %v988
    %998 = vst.msk [vmem:[#allocation4 + $0x18] sm:$0xff] %vm958, %v990
    %999 = vrot.lane.b32.xlu0 %v940, 120
    %v1000 = vpop.permute.xlu0 %999
    %1001 = vrot.lane.b32.xlu0 %v945, 120
    %v1002 = vpop.permute.xlu0 %1001
    %1003 = vrot.lane.b32.xlu0 %v950, 120
    %v1004 = vpop.permute.xlu0 %1003
    %1005 = vrot.lane.b32.xlu0 %v955, 120
    %v1006 = vpop.permute.xlu0 %1005
    %1011 = vst.msk [vmem:[#allocation2 + $0x20] sm:$0xff] %vm958, %v1000
    %1012 = vst.msk [vmem:[#allocation2 + $0x28] sm:$0xff] %vm958, %v1002
    %1013 = vst.msk [vmem:[#allocation2 + $0x30] sm:$0xff] %vm958, %v1004
    %1014 = vst.msk [vmem:[#allocation2 + $0x38] sm:$0xff] %vm958, %v1006
    %1015 = vrot.lane.b32.xlu0 %v940, 88
    %v1016 = vpop.permute.xlu0 %1015
    %1017 = vrot.lane.b32.xlu0 %v945, 88
    %v1018 = vpop.permute.xlu0 %1017
    %1019 = vrot.lane.b32.xlu0 %v950, 88
    %v1020 = vpop.permute.xlu0 %1019
    %1021 = vrot.lane.b32.xlu0 %v955, 88
    %v1022 = vpop.permute.xlu0 %1021
    %1027 = vst.msk [vmem:[#allocation3 + $0x20] sm:$0xff] %vm958, %v1016
    %1028 = vst.msk [vmem:[#allocation3 + $0x28] sm:$0xff] %vm958, %v1018
    %1029 = vst.msk [vmem:[#allocation3 + $0x30] sm:$0xff] %vm958, %v1020
    %1030 = vst.msk [vmem:[#allocation3 + $0x38] sm:$0xff] %vm958, %v1022
    %1031 = vrot.lane.b32.xlu0 %v940, 56
    %v1032 = vpop.permute.xlu0 %1031
    %1033 = vrot.lane.b32.xlu0 %v945, 56
    %v1034 = vpop.permute.xlu0 %1033
    %1035 = vrot.lane.b32.xlu0 %v950, 56
    %v1036 = vpop.permute.xlu0 %1035
    %1037 = vrot.lane.b32.xlu0 %v955, 56
    %v1038 = vpop.permute.xlu0 %1037
    %1043 = vst.msk [vmem:[#allocation4 + $0x20] sm:$0xff] %vm958, %v1032
    %1044 = vst.msk [vmem:[#allocation4 + $0x28] sm:$0xff] %vm958, %v1034
    %1045 = vst.msk [vmem:[#allocation4 + $0x30] sm:$0xff] %vm958, %v1036
    %1046 = vst.msk [vmem:[#allocation4 + $0x38] sm:$0xff] %vm958, %v1038
    %1047 = vrot.lane.b32.xlu0 %v940, 112
    %v1048 = vpop.permute.xlu0 %1047
    %1049 = vrot.lane.b32.xlu0 %v945, 112
    %v1050 = vpop.permute.xlu0 %1049
    %1051 = vrot.lane.b32.xlu0 %v950, 112
    %v1052 = vpop.permute.xlu0 %1051
    %1053 = vrot.lane.b32.xlu0 %v955, 112
    %v1054 = vpop.permute.xlu0 %1053
    %1059 = vst.msk [vmem:[#allocation2 + $0x40] sm:$0xff] %vm958, %v1048
    %1060 = vst.msk [vmem:[#allocation2 + $0x48] sm:$0xff] %vm958, %v1050
    %1061 = vst.msk [vmem:[#allocation2 + $0x50] sm:$0xff] %vm958, %v1052
    %1062 = vst.msk [vmem:[#allocation2 + $0x58] sm:$0xff] %vm958, %v1054
    %1063 = vrot.lane.b32.xlu0 %v940, 80
    %v1064 = vpop.permute.xlu0 %1063
    %1065 = vrot.lane.b32.xlu0 %v945, 80
    %v1066 = vpop.permute.xlu0 %1065
    %1067 = vrot.lane.b32.xlu0 %v950, 80
    %v1068 = vpop.permute.xlu0 %1067
    %1069 = vrot.lane.b32.xlu0 %v955, 80
    %v1070 = vpop.permute.xlu0 %1069
    %1075 = vst.msk [vmem:[#allocation3 + $0x40] sm:$0xff] %vm958, %v1064
    %1076 = vst.msk [vmem:[#allocation3 + $0x48] sm:$0xff] %vm958, %v1066
    %1077 = vst.msk [vmem:[#allocation3 + $0x50] sm:$0xff] %vm958, %v1068
    %1078 = vst.msk [vmem:[#allocation3 + $0x58] sm:$0xff] %vm958, %v1070
    %1079 = vrot.lane.b32.xlu0 %v940, 48
    %v1080 = vpop.permute.xlu0 %1079
    %1081 = vrot.lane.b32.xlu0 %v945, 48
    %v1082 = vpop.permute.xlu0 %1081
    %1083 = vrot.lane.b32.xlu0 %v950, 48
    %v1084 = vpop.permute.xlu0 %1083
    %1085 = vrot.lane.b32.xlu0 %v955, 48
    %v1086 = vpop.permute.xlu0 %1085
    %1091 = vst.msk [vmem:[#allocation4 + $0x40] sm:$0xff] %vm958, %v1080
    %1092 = vst.msk [vmem:[#allocation4 + $0x48] sm:$0xff] %vm958, %v1082
    %1093 = vst.msk [vmem:[#allocation4 + $0x50] sm:$0xff] %vm958, %v1084
    %1094 = vst.msk [vmem:[#allocation4 + $0x58] sm:$0xff] %vm958, %v1086
    %1095 = vrot.lane.b32.xlu0 %v940, 104
    %v1096 = vpop.permute.xlu0 %1095
    %1097 = vrot.lane.b32.xlu0 %v945, 104
    %v1098 = vpop.permute.xlu0 %1097
    %1099 = vrot.lane.b32.xlu0 %v950, 104
    %v1100 = vpop.permute.xlu0 %1099
    %1101 = vrot.lane.b32.xlu0 %v955, 104
    %v1102 = vpop.permute.xlu0 %1101
    %1107 = vst.msk [vmem:[#allocation2 + $0x60] sm:$0xff] %vm958, %v1096
    %1108 = vst.msk [vmem:[#allocation2 + $0x68] sm:$0xff] %vm958, %v1098
    %1109 = vst.msk [vmem:[#allocation2 + $0x70] sm:$0xff] %vm958, %v1100
    %1110 = vst.msk [vmem:[#allocation2 + $0x78] sm:$0xff] %vm958, %v1102
    %1111 = vrot.lane.b32.xlu0 %v940, 72
    %v1112 = vpop.permute.xlu0 %1111
    %1113 = vrot.lane.b32.xlu0 %v945, 72
    %v1114 = vpop.permute.xlu0 %1113
    %1115 = vrot.lane.b32.xlu0 %v950, 72
    %v1116 = vpop.permute.xlu0 %1115
    %1117 = vrot.lane.b32.xlu0 %v955, 72
    %v1118 = vpop.permute.xlu0 %1117
    %1123 = vst.msk [vmem:[#allocation3 + $0x60] sm:$0xff] %vm958, %v1112
    %1124 = vst.msk [vmem:[#allocation3 + $0x68] sm:$0xff] %vm958, %v1114
    %1125 = vst.msk [vmem:[#allocation3 + $0x70] sm:$0xff] %vm958, %v1116
    %1126 = vst.msk [vmem:[#allocation3 + $0x78] sm:$0xff] %vm958, %v1118
    %1127 = vrot.lane.b32.xlu0 %v940, 40
    %v1128 = vpop.permute.xlu0 %1127
    %1129 = vrot.lane.b32.xlu0 %v945, 40
    %v1130 = vpop.permute.xlu0 %1129
    %1131 = vrot.lane.b32.xlu0 %v950, 40
    %v1132 = vpop.permute.xlu0 %1131
    %1133 = vrot.lane.b32.xlu0 %v955, 40
    %v1134 = vpop.permute.xlu0 %1133
    %1139 = vst.msk [vmem:[#allocation4 + $0x60] sm:$0xff] %vm958, %v1128
    %1140 = vst.msk [vmem:[#allocation4 + $0x68] sm:$0xff] %vm958, %v1130
    %1141 = vst.msk [vmem:[#allocation4 + $0x70] sm:$0xff] %vm958, %v1132
    %1142 = vst.msk [vmem:[#allocation4 + $0x78] sm:$0xff] %vm958, %v1134
    %v1143 = vld [vmem:[#allocation2] sm:$0xff]
    %v1144 = vld [vmem:[#allocation2 + $0x8] sm:$0xff]
    %v1145 = vld [vmem:[#allocation2 + $0x10] sm:$0xff]
    %v1146 = vld [vmem:[#allocation2 + $0x18] sm:$0xff]
    %v1147 = vld [vmem:[#allocation2 + $0x20] sm:$0xff]
    %v1148 = vld [vmem:[#allocation2 + $0x28] sm:$0xff]
    %v1149 = vld [vmem:[#allocation2 + $0x30] sm:$0xff]
    %v1150 = vld [vmem:[#allocation2 + $0x38] sm:$0xff]
    %v1151 = vld [vmem:[#allocation2 + $0x40] sm:$0xff]
    %v1152 = vld [vmem:[#allocation2 + $0x48] sm:$0xff]
    %v1153 = vld [vmem:[#allocation2 + $0x50] sm:$0xff]
    %v1154 = vld [vmem:[#allocation2 + $0x58] sm:$0xff]
    %v1155 = vld [vmem:[#allocation2 + $0x60] sm:$0xff]
    %v1156 = vld [vmem:[#allocation2 + $0x68] sm:$0xff]
    %v1157 = vld [vmem:[#allocation2 + $0x70] sm:$0xff]
    %v1158 = vld [vmem:[#allocation2 + $0x78] sm:$0xff]
    %v1159 = vld [vmem:[#allocation3] sm:$0xff]
    %v1160 = vld [vmem:[#allocation3 + $0x8] sm:$0xff]
    %v1161 = vld [vmem:[#allocation3 + $0x10] sm:$0xff]
    %v1162 = vld [vmem:[#allocation3 + $0x18] sm:$0xff]
    %v1163 = vld [vmem:[#allocation3 + $0x20] sm:$0xff]
    %v1164 = vld [vmem:[#allocation3 + $0x28] sm:$0xff]
    %v1165 = vld [vmem:[#allocation3 + $0x30] sm:$0xff]
    %v1166 = vld [vmem:[#allocation3 + $0x38] sm:$0xff]
    %v1167 = vld [vmem:[#allocation3 + $0x40] sm:$0xff]
    %v1168 = vld [vmem:[#allocation3 + $0x48] sm:$0xff]
    %v1169 = vld [vmem:[#allocation3 + $0x50] sm:$0xff]
    %v1170 = vld [vmem:[#allocation3 + $0x58] sm:$0xff]
    %v1171 = vld [vmem:[#allocation3 + $0x60] sm:$0xff]
    %v1172 = vld [vmem:[#allocation3 + $0x68] sm:$0xff]
    %v1173 = vld [vmem:[#allocation3 + $0x70] sm:$0xff]
    %v1174 = vld [vmem:[#allocation3 + $0x78] sm:$0xff]
    %v1175 = vld [vmem:[#allocation4] sm:$0xff]
    %v1176 = vld [vmem:[#allocation4 + $0x8] sm:$0xff]
    %v1177 = vld [vmem:[#allocation4 + $0x10] sm:$0xff]
    %v1178 = vld [vmem:[#allocation4 + $0x18] sm:$0xff]
    %v1179 = vld [vmem:[#allocation4 + $0x20] sm:$0xff]
    %v1180 = vld [vmem:[#allocation4 + $0x28] sm:$0xff]
    %v1181 = vld [vmem:[#allocation4 + $0x30] sm:$0xff]
    %v1182 = vld [vmem:[#allocation4 + $0x38] sm:$0xff]
    %v1183 = vld [vmem:[#allocation4 + $0x40] sm:$0xff]
    %v1184 = vld [vmem:[#allocation4 + $0x48] sm:$0xff]
    %v1185 = vld [vmem:[#allocation4 + $0x50] sm:$0xff]
    %v1186 = vld [vmem:[#allocation4 + $0x58] sm:$0xff]
    %v1187 = vld [vmem:[#allocation4 + $0x60] sm:$0xff]
    %v1188 = vld [vmem:[#allocation4 + $0x68] sm:$0xff]
    %v1189 = vld [vmem:[#allocation4 + $0x70] sm:$0xff]
    %v1190 = vld [vmem:[#allocation4 + $0x78] sm:$0xff]
    %v1192 = vsel %vm958, %v1143, 0
    %v1195 = vsel %vm958, %v1144, 0
    %v1198 = vsel %vm958, %v1145, 0
    %v1201 = vsel %vm958, %v1146, 0
    %v1204 = vsel %vm958, %v1147, 0
    %v1207 = vsel %vm958, %v1148, 0
    %v1210 = vsel %vm958, %v1149, 0
    %v1213 = vsel %vm958, %v1150, 0
    %v1216 = vsel %vm958, %v1151, 0
    %v1219 = vsel %vm958, %v1152, 0
    %v1222 = vsel %vm958, %v1153, 0
    %v1225 = vsel %vm958, %v1154, 0
    %v1228 = vsel %vm958, %v1155, 0
    %v1231 = vsel %vm958, %v1156, 0
    %v1234 = vsel %vm958, %v1157, 0
    %v1237 = vsel %vm958, %v1158, 0
    %v1240 = vsel %vm958, %v1159, 0
    %v1243 = vsel %vm958, %v1160, 0
    %v1246 = vsel %vm958, %v1161, 0
    %v1249 = vsel %vm958, %v1162, 0
    %v1252 = vsel %vm958, %v1163, 0
    %v1255 = vsel %vm958, %v1164, 0
    %v1258 = vsel %vm958, %v1165, 0
    %v1261 = vsel %vm958, %v1166, 0
    %v1264 = vsel %vm958, %v1167, 0
    %v1267 = vsel %vm958, %v1168, 0
    %v1270 = vsel %vm958, %v1169, 0
    %v1273 = vsel %vm958, %v1170, 0
    %v1276 = vsel %vm958, %v1171, 0
    %v1279 = vsel %vm958, %v1172, 0
    %v1282 = vsel %vm958, %v1173, 0
    %v1285 = vsel %vm958, %v1174, 0
    %1287 = vmatprep.subr.mxu0 0.0
    %1288 = vmatpush1.xpose.msra.mxu0 %v1240
    %1289 = vmatprep.subr.mxu0 0.0
    %1290 = vmatpush1.xpose.msra.mxu0 %v1243
    %1291 = vmatprep.subr.mxu0 0.0
    %1292 = vmatpush1.xpose.msra.mxu0 %v1246
    %1293 = vmatprep.subr.mxu0 0.0
    %1294 = vmatpush1.xpose.msra.mxu0 %v1249
    %1295 = vmatprep.subr.mxu0 0.0
    %1296 = vmatpush1.xpose.msra.mxu0 %v1252
    %1297 = vmatprep.subr.mxu0 0.0
    %1298 = vmatpush1.xpose.msra.mxu0 %v1255
    %1299 = vmatprep.subr.mxu0 0.0
    %1300 = vmatpush1.xpose.msra.mxu0 %v1258
    %1301 = vmatprep.subr.mxu0 0.0
    %1302 = vmatpush1.xpose.msra.mxu0 %v1261
    %1303 = vmatprep.subr.mxu0 0.0
    %1304 = vmatpush1.xpose.msra.mxu0 %v1264
    %1305 = vmatprep.subr.mxu0 0.0
    %1306 = vmatpush1.xpose.msra.mxu0 %v1267
    %1307 = vmatprep.subr.mxu0 0.0
    %1308 = vmatpush1.xpose.msra.mxu0 %v1270
    %1309 = vmatprep.subr.mxu0 0.0
    %1310 = vmatpush1.xpose.msra.mxu0 %v1273
    %1311 = vmatprep.subr.mxu0 0.0
    %1312 = vmatpush1.xpose.msra.mxu0 %v1276
    %1313 = vmatprep.subr.mxu0 0.0
    %1314 = vmatpush1.xpose.msra.mxu0 %v1279
    %1315 = vmatprep.subr.mxu0 0.0
    %1316 = vmatpush1.xpose.msra.mxu0 %v1282
    %1317 = vmatprep.subr.mxu0 0.0
    %1318 = vmatpush1.xpose.msra.mxu0 %v1285
    %1319 = vmatprep.subr.mxu0 0.0
    %1320 = vmatpush1.xpose.msra.mxu0 0.0
    %1321 = vmatprep.subr.mxu0 0.0
    %1322 = vmatpush1.xpose.msra.mxu0 0.0
    %1323 = vmatprep.subr.mxu0 0.0
    %1324 = vmatpush1.xpose.msra.mxu0 0.0
    %1325 = vmatprep.subr.mxu0 0.0
    %1326 = vmatpush1.xpose.msra.mxu0 0.0
    %1327 = vmatprep.subr.mxu0 0.0
    %1328 = vmatpush1.xpose.msra.mxu0 0.0
    %1329 = vmatprep.subr.mxu0 0.0
    %1330 = vmatpush1.xpose.msra.mxu0 0.0
    %1331 = vmatprep.subr.mxu0 0.0
    %1332 = vmatpush1.xpose.msra.mxu0 0.0
    %1333 = vmatprep.subr.mxu0 0.0
    %1334 = vmatpush1.xpose.msra.mxu0 0.0
    %1335 = vmatprep.subr.mxu0 0.0
    %1336 = vmatpush1.xpose.msra.mxu0 0.0
    %1337 = vmatprep.subr.mxu0 0.0
    %1338 = vmatpush1.xpose.msra.mxu0 0.0
    %1339 = vmatprep.subr.mxu0 0.0
    %1340 = vmatpush1.xpose.msra.mxu0 0.0
    %1341 = vmatprep.subr.mxu0 0.0
    %1342 = vmatpush1.xpose.msra.mxu0 0.0
    %1343 = vmatprep.subr.mxu0 0.0
    %1344 = vmatpush1.xpose.msra.mxu0 0.0
    %1345 = vmatprep.subr.mxu0 0.0
    %1346 = vmatpush1.xpose.msra.mxu0 0.0
    %1347 = vmatprep.subr.mxu0 0.0
    %1348 = vmatpush1.xpose.msra.mxu0 0.0
    %1349 = vmatprep.subr.mxu0 0.0
    %1350 = vmatpush1.xpose.msra.mxu0 0.0
    %1351 = vmatprep.mubr.f32.mxu0 0.0
    %1352 = vmatmul.mubr.f32.gmra.mrb[0].mxu0 %v1192
    %v1353 = vpop.f32.mrb[0].mxu0
    %v1354 = vadd.f32 %v825, %v1353
    %v1355 = vpop.f32.mrb[0].mxu0
    %1356 = vmatprep.mubr.f32.mxu0 0.0
    %1357 = vmatmul.mubr.f32.gmra.mrb[0].mxu0 %v1195
    %v1358 = vpop.f32.mrb[0].mxu0
    %v1359 = vadd.f32 %v826, %v1358
    %v1360 = vpop.f32.mrb[0].mxu0
    %1361 = vmatprep.mubr.f32.mxu0 0.0
    %1362 = vmatmul.mubr.f32.gmra.mrb[0].mxu0 %v1198
    %v1363 = vpop.f32.mrb[0].mxu0
    %v1364 = vadd.f32 %v827, %v1363
    %v1365 = vpop.f32.mrb[0].mxu0
    %1366 = vmatprep.mubr.f32.mxu0 0.0
    %1367 = vmatmul.mubr.f32.gmra.mrb[0].mxu0 %v1201
    %v1368 = vpop.f32.mrb[0].mxu0
    %v1369 = vadd.f32 %v828, %v1368
    %v1370 = vpop.f32.mrb[0].mxu0
    %1371 = vmatprep.mubr.f32.mxu0 0.0
    %1372 = vmatmul.mubr.f32.gmra.mrb[0].mxu0 %v1204
    %v1373 = vpop.f32.mrb[0].mxu0
    %v1374 = vadd.f32 %v829, %v1373
    %v1375 = vpop.f32.mrb[0].mxu0
    %1376 = vmatprep.mubr.f32.mxu0 0.0
    %1377 = vmatmul.mubr.f32.gmra.mrb[0].mxu0 %v1207
    %v1378 = vpop.f32.mrb[0].mxu0
    %v1379 = vadd.f32 %v830, %v1378
    %v1380 = vpop.f32.mrb[0].mxu0
    %1381 = vmatprep.mubr.f32.mxu0 0.0
    %1382 = vmatmul.mubr.f32.gmra.mrb[0].mxu0 %v1210
    %v1383 = vpop.f32.mrb[0].mxu0
    %v1384 = vadd.f32 %v831, %v1383
    %v1385 = vpop.f32.mrb[0].mxu0
    %1386 = vmatprep.mubr.f32.mxu0 0.0
    %1387 = vmatmul.mubr.f32.gmra.mrb[0].mxu0 %v1213
    %v1388 = vpop.f32.mrb[0].mxu0
    %v1389 = vadd.f32 %v832, %v1388
    %v1390 = vpop.f32.mrb[0].mxu0
    %1391 = vmatprep.mubr.f32.mxu0 0.0
    %1392 = vmatmul.mubr.f32.gmra.mrb[0].mxu0 %v1216
    %v1393 = vpop.f32.mrb[0].mxu0
    %v1394 = vadd.f32 %v833, %v1393
    %v1395 = vpop.f32.mrb[0].mxu0
    %1396 = vmatprep.mubr.f32.mxu0 0.0
    %1397 = vmatmul.mubr.f32.gmra.mrb[0].mxu0 %v1219
    %v1398 = vpop.f32.mrb[0].mxu0
    %v1399 = vadd.f32 %v834, %v1398
    %v1400 = vpop.f32.mrb[0].mxu0
    %1401 = vmatprep.mubr.f32.mxu0 0.0
    %1402 = vmatmul.mubr.f32.gmra.mrb[0].mxu0 %v1222
    %v1403 = vpop.f32.mrb[0].mxu0
    %v1404 = vadd.f32 %v835, %v1403
    %v1405 = vpop.f32.mrb[0].mxu0
    %1406 = vmatprep.mubr.f32.mxu0 0.0
    %1407 = vmatmul.mubr.f32.gmra.mrb[0].mxu0 %v1225
    %v1408 = vpop.f32.mrb[0].mxu0
    %v1409 = vadd.f32 %v836, %v1408
    %v1410 = vpop.f32.mrb[0].mxu0
    %1411 = vmatprep.mubr.f32.mxu0 0.0
    %1412 = vmatmul.mubr.f32.gmra.mrb[0].mxu0 %v1228
    %v1413 = vpop.f32.mrb[0].mxu0
    %v1414 = vadd.f32 %v837, %v1413
    %v1415 = vpop.f32.mrb[0].mxu0
    %1416 = vmatprep.mubr.f32.mxu0 0.0
    %1417 = vmatmul.mubr.f32.gmra.mrb[0].mxu0 %v1231
    %v1418 = vpop.f32.mrb[0].mxu0
    %v1419 = vadd.f32 %v838, %v1418
    %v1420 = vpop.f32.mrb[0].mxu0
    %1421 = vmatprep.mubr.f32.mxu0 0.0
    %1422 = vmatmul.mubr.f32.gmra.mrb[0].mxu0 %v1234
    %v1423 = vpop.f32.mrb[0].mxu0
    %v1424 = vadd.f32 %v839, %v1423
    %v1425 = vpop.f32.mrb[0].mxu0
    %1426 = vmatprep.mubr.f32.mxu0 0.0
    %1427 = vmatmul.mubr.f32.gmra.mrb[0].mxu0 %v1237
    %v1428 = vpop.f32.mrb[0].mxu0
    %v1429 = vadd.f32 %v840, %v1428
    %v1430 = vpop.f32.mrb[0].mxu0
    %1431 = vdwg.mxu0
    %1432 = vmax.xlane.f32.xlu0 %v1354
    %v1433 = vpop.xlane.xlu0 %1432
    %1434 = vmax.xlane.f32.xlu0 %v1359
    %v1435 = vpop.xlane.xlu0 %1434
    %1436 = vmax.xlane.f32.xlu0 %v1364
    %v1437 = vpop.xlane.xlu0 %1436
    %1438 = vmax.xlane.f32.xlu0 %v1369
    %v1439 = vpop.xlane.xlu0 %1438
    %1440 = vmax.xlane.f32.xlu0 %v1374
    %v1441 = vpop.xlane.xlu0 %1440
    %1442 = vmax.xlane.f32.xlu0 %v1379
    %v1443 = vpop.xlane.xlu0 %1442
    %1444 = vmax.xlane.f32.xlu0 %v1384
    %v1445 = vpop.xlane.xlu0 %1444
    %1446 = vmax.xlane.f32.xlu0 %v1389
    %v1447 = vpop.xlane.xlu0 %1446
    %1448 = vmax.xlane.f32.xlu0 %v1394
    %v1449 = vpop.xlane.xlu0 %1448
    %1450 = vmax.xlane.f32.xlu0 %v1399
    %v1451 = vpop.xlane.xlu0 %1450
    %1452 = vmax.xlane.f32.xlu0 %v1404
    %v1453 = vpop.xlane.xlu0 %1452
    %1454 = vmax.xlane.f32.xlu0 %v1409
    %v1455 = vpop.xlane.xlu0 %1454
    %1456 = vmax.xlane.f32.xlu0 %v1414
    %v1457 = vpop.xlane.xlu0 %1456
    %1458 = vmax.xlane.f32.xlu0 %v1419
    %v1459 = vpop.xlane.xlu0 %1458
    %1460 = vmax.xlane.f32.xlu0 %v1424
    %v1461 = vpop.xlane.xlu0 %1460
    %1462 = vmax.xlane.f32.xlu0 %v1429
    %v1463 = vpop.xlane.xlu0 %1462
    %v1464 = vsub.f32 %v1354, %v1433
    %v1465 = vsub.f32 %v1359, %v1435
    %v1466 = vsub.f32 %v1364, %v1437
    %v1467 = vsub.f32 %v1369, %v1439
    %v1468 = vsub.f32 %v1374, %v1441
    %v1469 = vsub.f32 %v1379, %v1443
    %v1470 = vsub.f32 %v1384, %v1445
    %v1471 = vsub.f32 %v1389, %v1447
    %v1472 = vsub.f32 %v1394, %v1449
    %v1473 = vsub.f32 %v1399, %v1451
    %v1474 = vsub.f32 %v1404, %v1453
    %v1475 = vsub.f32 %v1409, %v1455
    %v1476 = vsub.f32 %v1414, %v1457
    %v1477 = vsub.f32 %v1419, %v1459
    %v1478 = vsub.f32 %v1424, %v1461
    %v1479 = vsub.f32 %v1429, %v1463
    %v1480 = vmul.f32 %v1464, 1.442695
    %v1481 = vpow.pop %v1480
    %v1482 = vmul.f32 %v1465, 1.442695
    %v1483 = vpow.pop %v1482
    %v1484 = vmul.f32 %v1466, 1.442695
    %v1485 = vpow.pop %v1484
    %v1486 = vmul.f32 %v1467, 1.442695
    %v1487 = vpow.pop %v1486
    %v1488 = vmul.f32 %v1468, 1.442695
    %v1489 = vpow.pop %v1488
    %v1490 = vmul.f32 %v1469, 1.442695
    %v1491 = vpow.pop %v1490
    %v1492 = vmul.f32 %v1470, 1.442695
    %v1493 = vpow.pop %v1492
    %v1494 = vmul.f32 %v1471, 1.442695
    %v1495 = vpow.pop %v1494
    %v1496 = vmul.f32 %v1472, 1.442695
    %v1497 = vpow.pop %v1496
    %v1498 = vmul.f32 %v1473, 1.442695
    %v1499 = vpow.pop %v1498
    %v1500 = vmul.f32 %v1474, 1.442695
    %v1501 = vpow.pop %v1500
    %v1502 = vmul.f32 %v1475, 1.442695
    %v1503 = vpow.pop %v1502
    %v1504 = vmul.f32 %v1476, 1.442695
    %v1505 = vpow.pop %v1504
    %v1506 = vmul.f32 %v1477, 1.442695
    %v1507 = vpow.pop %v1506
    %v1508 = vmul.f32 %v1478, 1.442695
    %v1509 = vpow.pop %v1508
    %v1510 = vmul.f32 %v1479, 1.442695
    %v1511 = vpow.pop %v1510
    %1512 = vadd.xlane.f32.xlu0 %v1481
    %v1513 = vpop.xlane.xlu0 %1512
    %1514 = vadd.xlane.f32.xlu0 %v1483
    %v1515 = vpop.xlane.xlu0 %1514
    %1516 = vadd.xlane.f32.xlu0 %v1485
    %v1517 = vpop.xlane.xlu0 %1516
    %1518 = vadd.xlane.f32.xlu0 %v1487
    %v1519 = vpop.xlane.xlu0 %1518
    %1520 = vadd.xlane.f32.xlu0 %v1489
    %v1521 = vpop.xlane.xlu0 %1520
    %1522 = vadd.xlane.f32.xlu0 %v1491
    %v1523 = vpop.xlane.xlu0 %1522
    %1524 = vadd.xlane.f32.xlu0 %v1493
    %v1525 = vpop.xlane.xlu0 %1524
    %1526 = vadd.xlane.f32.xlu0 %v1495
    %v1527 = vpop.xlane.xlu0 %1526
    %1528 = vadd.xlane.f32.xlu0 %v1497
    %v1529 = vpop.xlane.xlu0 %1528
    %1530 = vadd.xlane.f32.xlu0 %v1499
    %v1531 = vpop.xlane.xlu0 %1530
    %1532 = vadd.xlane.f32.xlu0 %v1501
    %v1533 = vpop.xlane.xlu0 %1532
    %1534 = vadd.xlane.f32.xlu0 %v1503
    %v1535 = vpop.xlane.xlu0 %1534
    %1536 = vadd.xlane.f32.xlu0 %v1505
    %v1537 = vpop.xlane.xlu0 %1536
    %1538 = vadd.xlane.f32.xlu0 %v1507
    %v1539 = vpop.xlane.xlu0 %1538
    %1540 = vadd.xlane.f32.xlu0 %v1509
    %v1541 = vpop.xlane.xlu0 %1540
    %1542 = vadd.xlane.f32.xlu0 %v1511
    %v1543 = vpop.xlane.xlu0 %1542
    %v1544 = vrcp.pop %v1513
    %v1545 = vrcp.pop %v1515
    %v1546 = vrcp.pop %v1517
    %v1547 = vrcp.pop %v1519
    %v1548 = vrcp.pop %v1521
    %v1549 = vrcp.pop %v1523
    %v1550 = vrcp.pop %v1525
    %v1551 = vrcp.pop %v1527
    %v1552 = vrcp.pop %v1529
    %v1553 = vrcp.pop %v1531
    %v1554 = vrcp.pop %v1533
    %v1555 = vrcp.pop %v1535
    %v1556 = vrcp.pop %v1537
    %v1557 = vrcp.pop %v1539
    %v1558 = vrcp.pop %v1541
    %v1559 = vrcp.pop %v1543
    %v1560 = vmul.f32 %v1513, %v1544
    %v1561 = vmul.f32 %v1515, %v1545
    %v1562 = vmul.f32 %v1517, %v1546
    %v1563 = vmul.f32 %v1519, %v1547
    %v1564 = vmul.f32 %v1521, %v1548
    %v1565 = vmul.f32 %v1523, %v1549
    %v1566 = vmul.f32 %v1525, %v1550
    %v1567 = vmul.f32 %v1527, %v1551
    %v1568 = vmul.f32 %v1529, %v1552
    %v1569 = vmul.f32 %v1531, %v1553
    %v1570 = vmul.f32 %v1533, %v1554
    %v1571 = vmul.f32 %v1535, %v1555
    %v1572 = vmul.f32 %v1537, %v1556
    %v1573 = vmul.f32 %v1539, %v1557
    %v1574 = vmul.f32 %v1541, %v1558
    %v1575 = vmul.f32 %v1543, %v1559
    %v1576 = vsub.f32 2.0, %v1560
    %v1577 = vsub.f32 2.0, %v1561
    %v1578 = vsub.f32 2.0, %v1562
    %v1579 = vsub.f32 2.0, %v1563
    %v1580 = vsub.f32 2.0, %v1564
    %v1581 = vsub.f32 2.0, %v1565
    %v1582 = vsub.f32 2.0, %v1566
    %v1583 = vsub.f32 2.0, %v1567
    %v1584 = vsub.f32 2.0, %v1568
    %v1585 = vsub.f32 2.0, %v1569
    %v1586 = vsub.f32 2.0, %v1570
    %v1587 = vsub.f32 2.0, %v1571
    %v1588 = vsub.f32 2.0, %v1572
    %v1589 = vsub.f32 2.0, %v1573
    %v1590 = vsub.f32 2.0, %v1574
    %v1591 = vsub.f32 2.0, %v1575
    %v1592 = vmul.f32 %v1544, %v1576
    %v1593 = vmul.f32 %v1545, %v1577
    %v1594 = vmul.f32 %v1546, %v1578
    %v1595 = vmul.f32 %v1547, %v1579
    %v1596 = vmul.f32 %v1548, %v1580
    %v1597 = vmul.f32 %v1549, %v1581
    %v1598 = vmul.f32 %v1550, %v1582
    %v1599 = vmul.f32 %v1551, %v1583
    %v1600 = vmul.f32 %v1552, %v1584
    %v1601 = vmul.f32 %v1553, %v1585
    %v1602 = vmul.f32 %v1554, %v1586
    %v1603 = vmul.f32 %v1555, %v1587
    %v1604 = vmul.f32 %v1556, %v1588
    %v1605 = vmul.f32 %v1557, %v1589
    %v1606 = vmul.f32 %v1558, %v1590
    %v1607 = vmul.f32 %v1559, %v1591
    %v1608 = vmul.f32 %v1481, %v1592
    %v1609 = vmul.f32 %v1483, %v1593
    %v1610 = vmul.f32 %v1485, %v1594
    %v1611 = vmul.f32 %v1487, %v1595
    %v1612 = vmul.f32 %v1489, %v1596
    %v1613 = vmul.f32 %v1491, %v1597
    %v1614 = vmul.f32 %v1493, %v1598
    %v1615 = vmul.f32 %v1495, %v1599
    %v1616 = vmul.f32 %v1497, %v1600
    %v1617 = vmul.f32 %v1499, %v1601
    %v1618 = vmul.f32 %v1501, %v1602
    %v1619 = vmul.f32 %v1503, %v1603
    %v1620 = vmul.f32 %v1505, %v1604
    %v1621 = vmul.f32 %v1507, %v1605
    %v1622 = vmul.f32 %v1509, %v1606
    %v1623 = vmul.f32 %v1511, %v1607
    %1624 = vmatprep.subr.mxu0 0.0
    %1625 = vmatpush1.msra.mxu0 %v1175
    %1626 = vmatprep.subr.mxu0 0.0
    %1627 = vmatpush1.msra.mxu0 %v1176
    %1628 = vmatprep.subr.mxu0 0.0
    %1629 = vmatpush1.msra.mxu0 %v1177
    %1630 = vmatprep.subr.mxu0 0.0
    %1631 = vmatpush1.msra.mxu0 %v1178
    %1632 = vmatprep.subr.mxu0 0.0
    %1633 = vmatpush1.msra.mxu0 %v1179
    %1634 = vmatprep.subr.mxu0 0.0
    %1635 = vmatpush1.msra.mxu0 %v1180
    %1636 = vmatprep.subr.mxu0 0.0
    %1637 = vmatpush1.msra.mxu0 %v1181
    %1638 = vmatprep.subr.mxu0 0.0
    %1639 = vmatpush1.msra.mxu0 %v1182
    %1640 = vmatprep.subr.mxu0 0.0
    %1641 = vmatpush1.msra.mxu0 %v1183
    %1642 = vmatprep.subr.mxu0 0.0
    %1643 = vmatpush1.msra.mxu0 %v1184
    %1644 = vmatprep.subr.mxu0 0.0
    %1645 = vmatpush1.msra.mxu0 %v1185
    %1646 = vmatprep.subr.mxu0 0.0
    %1647 = vmatpush1.msra.mxu0 %v1186
    %1648 = vmatprep.subr.mxu0 0.0
    %1649 = vmatpush1.msra.mxu0 %v1187
    %1650 = vmatprep.subr.mxu0 0.0
    %1651 = vmatpush1.msra.mxu0 %v1188
    %1652 = vmatprep.subr.mxu0 0.0
    %1653 = vmatpush1.msra.mxu0 %v1189
    %1654 = vmatprep.subr.mxu0 0.0
    %1655 = vmatpush1.msra.mxu0 %v1190
    %1656 = vmatprep.subr.mxu0 0.0
    %1657 = vmatpush1.msra.mxu0 0.0
    %1658 = vmatprep.subr.mxu0 0.0
    %1659 = vmatpush1.msra.mxu0 0.0
    %1660 = vmatprep.subr.mxu0 0.0
    %1661 = vmatpush1.msra.mxu0 0.0
    %1662 = vmatprep.subr.mxu0 0.0
    %1663 = vmatpush1.msra.mxu0 0.0
    %1664 = vmatprep.subr.mxu0 0.0
    %1665 = vmatpush1.msra.mxu0 0.0
    %1666 = vmatprep.subr.mxu0 0.0
    %1667 = vmatpush1.msra.mxu0 0.0
    %1668 = vmatprep.subr.mxu0 0.0
    %1669 = vmatpush1.msra.mxu0 0.0
    %1670 = vmatprep.subr.mxu0 0.0
    %1671 = vmatpush1.msra.mxu0 0.0
    %1672 = vmatprep.subr.mxu0 0.0
    %1673 = vmatpush1.msra.mxu0 0.0
    %1674 = vmatprep.subr.mxu0 0.0
    %1675 = vmatpush1.msra.mxu0 0.0
    %1676 = vmatprep.subr.mxu0 0.0
    %1677 = vmatpush1.msra.mxu0 0.0
    %1678 = vmatprep.subr.mxu0 0.0
    %1679 = vmatpush1.msra.mxu0 0.0
    %1680 = vmatprep.subr.mxu0 0.0
    %1681 = vmatpush1.msra.mxu0 0.0
    %1682 = vmatprep.subr.mxu0 0.0
    %1683 = vmatpush1.msra.mxu0 0.0
    %1684 = vmatprep.subr.mxu0 0.0
    %1685 = vmatpush1.msra.mxu0 0.0
    %1686 = vmatprep.subr.mxu0 0.0
    %1687 = vmatpush1.msra.mxu0 0.0
    %1688 = vmatprep.mubr.f32.mxu0 0.0
    %1689 = vmatmul.mubr.f32.gmra.mrb[0].mxu0 %v1608
    %v1690 = vpop.f32.mrb[0].mxu0
    %v1691 = vadd.f32 0.0, %v1690
    %v1692 = vpop.f32.mrb[0].mxu0
    %1693 = vmatprep.mubr.f32.mxu0 0.0
    %1694 = vmatmul.mubr.f32.gmra.mrb[0].mxu0 %v1609
    %v1695 = vpop.f32.mrb[0].mxu0
    %v1696 = vadd.f32 0.0, %v1695
    %v1697 = vpop.f32.mrb[0].mxu0
    %1698 = vmatprep.mubr.f32.mxu0 0.0
    %1699 = vmatmul.mubr.f32.gmra.mrb[0].mxu0 %v1610
    %v1700 = vpop.f32.mrb[0].mxu0
    %v1701 = vadd.f32 0.0, %v1700
    %v1702 = vpop.f32.mrb[0].mxu0
    %1703 = vmatprep.mubr.f32.mxu0 0.0
    %1704 = vmatmul.mubr.f32.gmra.mrb[0].mxu0 %v1611
    %v1705 = vpop.f32.mrb[0].mxu0
    %v1706 = vadd.f32 0.0, %v1705
    %v1707 = vpop.f32.mrb[0].mxu0
    %1708 = vmatprep.mubr.f32.mxu0 0.0
    %1709 = vmatmul.mubr.f32.gmra.mrb[0].mxu0 %v1612
    %v1710 = vpop.f32.mrb[0].mxu0
    %v1711 = vadd.f32 0.0, %v1710
    %v1712 = vpop.f32.mrb[0].mxu0
    %1713 = vmatprep.mubr.f32.mxu0 0.0
    %1714 = vmatmul.mubr.f32.gmra.mrb[0].mxu0 %v1613
    %v1715 = vpop.f32.mrb[0].mxu0
    %v1716 = vadd.f32 0.0, %v1715
    %v1717 = vpop.f32.mrb[0].mxu0
    %1718 = vmatprep.mubr.f32.mxu0 0.0
    %1719 = vmatmul.mubr.f32.gmra.mrb[0].mxu0 %v1614
    %v1720 = vpop.f32.mrb[0].mxu0
    %v1721 = vadd.f32 0.0, %v1720
    %v1722 = vpop.f32.mrb[0].mxu0
    %1723 = vmatprep.mubr.f32.mxu0 0.0
    %1724 = vmatmul.mubr.f32.gmra.mrb[0].mxu0 %v1615
    %v1725 = vpop.f32.mrb[0].mxu0
    %v1726 = vadd.f32 0.0, %v1725
    %v1727 = vpop.f32.mrb[0].mxu0
    %1728 = vmatprep.mubr.f32.mxu0 0.0
    %1729 = vmatmul.mubr.f32.gmra.mrb[0].mxu0 %v1616
    %v1730 = vpop.f32.mrb[0].mxu0
    %v1731 = vadd.f32 0.0, %v1730
    %v1732 = vpop.f32.mrb[0].mxu0
    %1733 = vmatprep.mubr.f32.mxu0 0.0
    %1734 = vmatmul.mubr.f32.gmra.mrb[0].mxu0 %v1617
    %v1735 = vpop.f32.mrb[0].mxu0
    %v1736 = vadd.f32 0.0, %v1735
    %v1737 = vpop.f32.mrb[0].mxu0
    %1738 = vmatprep.mubr.f32.mxu0 0.0
    %1739 = vmatmul.mubr.f32.gmra.mrb[0].mxu0 %v1618
    %v1740 = vpop.f32.mrb[0].mxu0
    %v1741 = vadd.f32 0.0, %v1740
    %v1742 = vpop.f32.mrb[0].mxu0
    %1743 = vmatprep.mubr.f32.mxu0 0.0
    %1744 = vmatmul.mubr.f32.gmra.mrb[0].mxu0 %v1619
    %v1745 = vpop.f32.mrb[0].mxu0
    %v1746 = vadd.f32 0.0, %v1745
    %v1747 = vpop.f32.mrb[0].mxu0
    %1748 = vmatprep.mubr.f32.mxu0 0.0
    %1749 = vmatmul.mubr.f32.gmra.mrb[0].mxu0 %v1620
    %v1750 = vpop.f32.mrb[0].mxu0
    %v1751 = vadd.f32 0.0, %v1750
    %v1752 = vpop.f32.mrb[0].mxu0
    %1753 = vmatprep.mubr.f32.mxu0 0.0
    %1754 = vmatmul.mubr.f32.gmra.mrb[0].mxu0 %v1621
    %v1755 = vpop.f32.mrb[0].mxu0
    %v1756 = vadd.f32 0.0, %v1755
    %v1757 = vpop.f32.mrb[0].mxu0
    %1758 = vmatprep.mubr.f32.mxu0 0.0
    %1759 = vmatmul.mubr.f32.gmra.mrb[0].mxu0 %v1622
    %v1760 = vpop.f32.mrb[0].mxu0
    %v1761 = vadd.f32 0.0, %v1760
    %v1762 = vpop.f32.mrb[0].mxu0
    %1763 = vmatprep.mubr.f32.mxu0 0.0
    %1764 = vmatmul.mubr.f32.gmra.mrb[0].mxu0 %v1623
    %v1765 = vpop.f32.mrb[0].mxu0
    %v1766 = vadd.f32 0.0, %v1765
    %v1767 = vpop.f32.mrb[0].mxu0
    %1768 = vdwg.mxu0
    %1769 = vst.msk [vmem:[#allocation5] sm:$0xff] %vm958, %v1691
    %1770 = vst.msk [vmem:[#allocation5 + $0x8] sm:$0xff] %vm958, %v1696
    %1771 = vst.msk [vmem:[#allocation5 + $0x10] sm:$0xff] %vm958, %v1701
    %1772 = vst.msk [vmem:[#allocation5 + $0x18] sm:$0xff] %vm958, %v1706
    %1777 = vrot.lane.b32.xlu0 %v1711, 8
    %v1778 = vpop.permute.xlu0 %1777
    %1779 = vrot.lane.b32.xlu0 %v1716, 8
    %v1780 = vpop.permute.xlu0 %1779
    %1781 = vrot.lane.b32.xlu0 %v1721, 8
    %v1782 = vpop.permute.xlu0 %1781
    %1783 = vrot.lane.b32.xlu0 %v1726, 8
    %v1784 = vpop.permute.xlu0 %1783
    %vm1789 = vcmask 130112
    %1790 = vst.msk [vmem:[#allocation5] sm:$0xff] %vm1789, %v1778
    %1791 = vst.msk [vmem:[#allocation5 + $0x8] sm:$0xff] %vm1789, %v1780
    %1792 = vst.msk [vmem:[#allocation5 + $0x10] sm:$0xff] %vm1789, %v1782
    %1793 = vst.msk [vmem:[#allocation5 + $0x18] sm:$0xff] %vm1789, %v1784
    %1798 = vrot.lane.b32.xlu0 %v1731, 16
    %v1799 = vpop.permute.xlu0 %1798
    %1800 = vrot.lane.b32.xlu0 %v1736, 16
    %v1801 = vpop.permute.xlu0 %1800
    %1802 = vrot.lane.b32.xlu0 %v1741, 16
    %v1803 = vpop.permute.xlu0 %1802
    %1804 = vrot.lane.b32.xlu0 %v1746, 16
    %v1805 = vpop.permute.xlu0 %1804
    %vm1810 = vcmask 195712
    %1811 = vst.msk [vmem:[#allocation5] sm:$0xff] %vm1810, %v1799
    %1812 = vst.msk [vmem:[#allocation5 + $0x8] sm:$0xff] %vm1810, %v1801
    %1813 = vst.msk [vmem:[#allocation5 + $0x10] sm:$0xff] %vm1810, %v1803
    %1814 = vst.msk [vmem:[#allocation5 + $0x18] sm:$0xff] %vm1810, %v1805
    %1819 = vrot.lane.b32.xlu0 %v1751, 24
    %v1820 = vpop.permute.xlu0 %1819
    %1821 = vrot.lane.b32.xlu0 %v1756, 24
    %v1822 = vpop.permute.xlu0 %1821
    %1823 = vrot.lane.b32.xlu0 %v1761, 24
    %v1824 = vpop.permute.xlu0 %1823
    %1825 = vrot.lane.b32.xlu0 %v1766, 24
    %v1826 = vpop.permute.xlu0 %1825
    %vm1831 = vcmask 261312
    %1832 = vst.msk [vmem:[#allocation5] sm:$0xff] %vm1831, %v1820
    %1833 = vst.msk [vmem:[#allocation5 + $0x8] sm:$0xff] %vm1831, %v1822
    %1834 = vst.msk [vmem:[#allocation5 + $0x10] sm:$0xff] %vm1831, %v1824
    %1835 = vst.msk [vmem:[#allocation5 + $0x18] sm:$0xff] %vm1831, %v1826
    %v1836 = vld [vmem:[#allocation5] sm:$0xff]
    %v1837 = vld [vmem:[#allocation5 + $0x8] sm:$0xff]
    %v1838 = vld [vmem:[#allocation5 + $0x10] sm:$0xff]
    %v1839 = vld [vmem:[#allocation5 + $0x18] sm:$0xff]
    %s1840 = scalar_lea.vmem [#allocation6], 32
    %v1841 = vld [vmem:[%s1840] sm:$0xff]
    %v1842 = vld [vmem:[%s1840 + $0x8] sm:$0xff]
    %v1843 = vld [vmem:[%s1840 + $0x10] sm:$0xff]
    %v1844 = vld [vmem:[%s1840 + $0x18] sm:$0xff]
    %s1845 = scalar_lea.vmem %s4, 1
    %v1846 = vld [vmem:[%s1845] sm:$0x1]
    %v1848 = vlaneseq
    %v1849 = vshrl.u32 %v1848, 7
    %v1850 = vsub.s32 0, %v1849
    %v1851 = vrot.slane %v1846, %v1850
    %v1854 = vsel %vm864, %v1836, 0
    %v1857 = vsel %vm864, %v1837, 0
    %v1860 = vsel %vm864, %v1838, 0
    %v1863 = vsel %vm864, %v1839, 0
    %1865 = vmatprep.subr.mxu0 0.0
    %1866 = vmatpush1.msra.mxu0 %v1841
    %1867 = vmatprep.subr.mxu0 0.0
    %1868 = vmatpush1.msra.mxu0 %v1842
    %1869 = vmatprep.subr.mxu0 0.0
    %1870 = vmatpush1.msra.mxu0 %v1843
    %1871 = vmatprep.subr.mxu0 0.0
    %1872 = vmatpush1.msra.mxu0 %v1844
    %1873 = vmatprep.subr.mxu0 0.0
    %1874 = vmatpush1.msra.mxu0 0.0
    %1875 = vmatprep.subr.mxu0 0.0
    %1876 = vmatpush1.msra.mxu0 0.0
    %1877 = vmatprep.subr.mxu0 0.0
    %1878 = vmatpush1.msra.mxu0 0.0
    %1879 = vmatprep.subr.mxu0 0.0
    %1880 = vmatpush1.msra.mxu0 0.0
    %1881 = vmatprep.subr.mxu0 0.0
    %1882 = vmatpush1.msra.mxu0 0.0
    %1883 = vmatprep.subr.mxu0 0.0
    %1884 = vmatpush1.msra.mxu0 0.0
    %1885 = vmatprep.subr.mxu0 0.0
    %1886 = vmatpush1.msra.mxu0 0.0
    %1887 = vmatprep.subr.mxu0 0.0
    %1888 = vmatpush1.msra.mxu0 0.0
    %1889 = vmatprep.subr.mxu0 0.0
    %1890 = vmatpush1.msra.mxu0 0.0
    %1891 = vmatprep.subr.mxu0 0.0
    %1892 = vmatpush1.msra.mxu0 0.0
    %1893 = vmatprep.subr.mxu0 0.0
    %1894 = vmatpush1.msra.mxu0 0.0
    %1895 = vmatprep.subr.mxu0 0.0
    %1896 = vmatpush1.msra.mxu0 0.0
    %1897 = vmatprep.subr.mxu0 0.0
    %1898 = vmatpush1.msra.mxu0 0.0
    %1899 = vmatprep.subr.mxu0 0.0
    %1900 = vmatpush1.msra.mxu0 0.0
    %1901 = vmatprep.subr.mxu0 0.0
    %1902 = vmatpush1.msra.mxu0 0.0
    %1903 = vmatprep.subr.mxu0 0.0
    %1904 = vmatpush1.msra.mxu0 0.0
    %1905 = vmatprep.subr.mxu0 0.0
    %1906 = vmatpush1.msra.mxu0 0.0
    %1907 = vmatprep.subr.mxu0 0.0
    %1908 = vmatpush1.msra.mxu0 0.0
    %1909 = vmatprep.subr.mxu0 0.0
    %1910 = vmatpush1.msra.mxu0 0.0
    %1911 = vmatprep.subr.mxu0 0.0
    %1912 = vmatpush1.msra.mxu0 0.0
    %1913 = vmatprep.subr.mxu0 0.0
    %1914 = vmatpush1.msra.mxu0 0.0
    %1915 = vmatprep.subr.mxu0 0.0
    %1916 = vmatpush1.msra.mxu0 0.0
    %1917 = vmatprep.subr.mxu0 0.0
    %1918 = vmatpush1.msra.mxu0 0.0
    %1919 = vmatprep.subr.mxu0 0.0
    %1920 = vmatpush1.msra.mxu0 0.0
    %1921 = vmatprep.subr.mxu0 0.0
    %1922 = vmatpush1.msra.mxu0 0.0
    %1923 = vmatprep.subr.mxu0 0.0
    %1924 = vmatpush1.msra.mxu0 0.0
    %1925 = vmatprep.subr.mxu0 0.0
    %1926 = vmatpush1.msra.mxu0 0.0
    %1927 = vmatprep.subr.mxu0 0.0
    %1928 = vmatpush1.msra.mxu0 0.0
    %1929 = vmatprep.mubr.f32.mxu0 0.0
    %1930 = vmatmul.mubr.f32.gmra.mrb[0].mxu0 %v1854
    %v1931 = vpop.f32.mrb[0].mxu0
    %v1932 = vadd.f32 %v1851, %v1931
    %v1933 = vpop.f32.mrb[0].mxu0
    %1934 = vmatprep.mubr.f32.mxu0 0.0
    %1935 = vmatmul.mubr.f32.gmra.mrb[0].mxu0 %v1857
    %v1936 = vpop.f32.mrb[0].mxu0
    %v1937 = vadd.f32 %v1851, %v1936
    %v1938 = vpop.f32.mrb[0].mxu0
    %1939 = vmatprep.mubr.f32.mxu0 0.0
    %1940 = vmatmul.mubr.f32.gmra.mrb[0].mxu0 %v1860
    %v1941 = vpop.f32.mrb[0].mxu0
    %v1942 = vadd.f32 %v1851, %v1941
    %v1943 = vpop.f32.mrb[0].mxu0
    %1944 = vmatprep.mubr.f32.mxu0 0.0
    %1945 = vmatmul.mubr.f32.gmra.mrb[0].mxu0 %v1863
    %v1946 = vpop.f32.mrb[0].mxu0
    %v1947 = vadd.f32 %v1851, %v1946
    %v1948 = vpop.f32.mrb[0].mxu0
    %1949 = vdwg.mxu0
    %1950 = vst.msk [vmem:[#allocation2] sm:$0xff] %vm958, %v1932
    %1951 = vst.msk [vmem:[#allocation2 + $0x8] sm:$0xff] %vm958, %v1937
    %1952 = vst.msk [vmem:[#allocation2 + $0x10] sm:$0xff] %vm958, %v1942
    %1953 = vst.msk [vmem:[#allocation2 + $0x18] sm:$0xff] %vm958, %v1947
    %1958 = vrot.lane.b32.xlu0 %v1932, 96
    %v1959 = vpop.permute.xlu0 %1958
    %1960 = vrot.lane.b32.xlu0 %v1937, 96
    %v1961 = vpop.permute.xlu0 %1960
    %1962 = vrot.lane.b32.xlu0 %v1942, 96
    %v1963 = vpop.permute.xlu0 %1962
    %1964 = vrot.lane.b32.xlu0 %v1947, 96
    %v1965 = vpop.permute.xlu0 %1964
    %1970 = vst.msk [vmem:[#allocation3] sm:$0xff] %vm958, %v1959
    %1971 = vst.msk [vmem:[#allocation3 + $0x8] sm:$0xff] %vm958, %v1961
    %1972 = vst.msk [vmem:[#allocation3 + $0x10] sm:$0xff] %vm958, %v1963
    %1973 = vst.msk [vmem:[#allocation3 + $0x18] sm:$0xff] %vm958, %v1965
    %1974 = vrot.lane.b32.xlu0 %v1932, 64
    %v1975 = vpop.permute.xlu0 %1974
    %1976 = vrot.lane.b32.xlu0 %v1937, 64
    %v1977 = vpop.permute.xlu0 %1976
    %1978 = vrot.lane.b32.xlu0 %v1942, 64
    %v1979 = vpop.permute.xlu0 %1978
    %1980 = vrot.lane.b32.xlu0 %v1947, 64
    %v1981 = vpop.permute.xlu0 %1980
    %1986 = vst.msk [vmem:[#allocation4] sm:$0xff] %vm958, %v1975
    %1987 = vst.msk [vmem:[#allocation4 + $0x8] sm:$0xff] %vm958, %v1977
    %1988 = vst.msk [vmem:[#allocation4 + $0x10] sm:$0xff] %vm958, %v1979
    %1989 = vst.msk [vmem:[#allocation4 + $0x18] sm:$0xff] %vm958, %v1981
    %1990 = vrot.lane.b32.xlu0 %v1932, 120
    %v1991 = vpop.permute.xlu0 %1990
    %1992 = vrot.lane.b32.xlu0 %v1937, 120
    %v1993 = vpop.permute.xlu0 %1992
    %1994 = vrot.lane.b32.xlu0 %v1942, 120
    %v1995 = vpop.permute.xlu0 %1994
    %1996 = vrot.lane.b32.xlu0 %v1947, 120
    %v1997 = vpop.permute.xlu0 %1996
    %2002 = vst.msk [vmem:[#allocation2 + $0x20] sm:$0xff] %vm958, %v1991
    %2003 = vst.msk [vmem:[#allocation2 + $0x28] sm:$0xff] %vm958, %v1993
    %2004 = vst.msk [vmem:[#allocation2 + $0x30] sm:$0xff] %vm958, %v1995
    %2005 = vst.msk [vmem:[#allocation2 + $0x38] sm:$0xff] %vm958, %v1997
    %2006 = vrot.lane.b32.xlu0 %v1932, 88
    %v2007 = vpop.permute.xlu0 %2006
    %2008 = vrot.lane.b32.xlu0 %v1937, 88
    %v2009 = vpop.permute.xlu0 %2008
    %2010 = vrot.lane.b32.xlu0 %v1942, 88
    %v2011 = vpop.permute.xlu0 %2010
    %2012 = vrot.lane.b32.xlu0 %v1947, 88
    %v2013 = vpop.permute.xlu0 %2012
    %2018 = vst.msk [vmem:[#allocation3 + $0x20] sm:$0xff] %vm958, %v2007
    %2019 = vst.msk [vmem:[#allocation3 + $0x28] sm:$0xff] %vm958, %v2009
    %2020 = vst.msk [vmem:[#allocation3 + $0x30] sm:$0xff] %vm958, %v2011
    %2021 = vst.msk [vmem:[#allocation3 + $0x38] sm:$0xff] %vm958, %v2013
    %2022 = vrot.lane.b32.xlu0 %v1932, 56
    %v2023 = vpop.permute.xlu0 %2022
    %2024 = vrot.lane.b32.xlu0 %v1937, 56
    %v2025 = vpop.permute.xlu0 %2024
    %2026 = vrot.lane.b32.xlu0 %v1942, 56
    %v2027 = vpop.permute.xlu0 %2026
    %2028 = vrot.lane.b32.xlu0 %v1947, 56
    %v2029 = vpop.permute.xlu0 %2028
    %2034 = vst.msk [vmem:[#allocation4 + $0x20] sm:$0xff] %vm958, %v2023
    %2035 = vst.msk [vmem:[#allocation4 + $0x28] sm:$0xff] %vm958, %v2025
    %2036 = vst.msk [vmem:[#allocation4 + $0x30] sm:$0xff] %vm958, %v2027
    %2037 = vst.msk [vmem:[#allocation4 + $0x38] sm:$0xff] %vm958, %v2029
    %2038 = vrot.lane.b32.xlu0 %v1932, 112
    %v2039 = vpop.permute.xlu0 %2038
    %2040 = vrot.lane.b32.xlu0 %v1937, 112
    %v2041 = vpop.permute.xlu0 %2040
    %2042 = vrot.lane.b32.xlu0 %v1942, 112
    %v2043 = vpop.permute.xlu0 %2042
    %2044 = vrot.lane.b32.xlu0 %v1947, 112
    %v2045 = vpop.permute.xlu0 %2044
    %2050 = vst.msk [vmem:[#allocation2 + $0x40] sm:$0xff] %vm958, %v2039
    %2051 = vst.msk [vmem:[#allocation2 + $0x48] sm:$0xff] %vm958, %v2041
    %2052 = vst.msk [vmem:[#allocation2 + $0x50] sm:$0xff] %vm958, %v2043
    %2053 = vst.msk [vmem:[#allocation2 + $0x58] sm:$0xff] %vm958, %v2045
    %2054 = vrot.lane.b32.xlu0 %v1932, 80
    %v2055 = vpop.permute.xlu0 %2054
    %2056 = vrot.lane.b32.xlu0 %v1937, 80
    %v2057 = vpop.permute.xlu0 %2056
    %2058 = vrot.lane.b32.xlu0 %v1942, 80
    %v2059 = vpop.permute.xlu0 %2058
    %2060 = vrot.lane.b32.xlu0 %v1947, 80
    %v2061 = vpop.permute.xlu0 %2060
    %2066 = vst.msk [vmem:[#allocation3 + $0x40] sm:$0xff] %vm958, %v2055
    %2067 = vst.msk [vmem:[#allocation3 + $0x48] sm:$0xff] %vm958, %v2057
    %2068 = vst.msk [vmem:[#allocation3 + $0x50] sm:$0xff] %vm958, %v2059
    %2069 = vst.msk [vmem:[#allocation3 + $0x58] sm:$0xff] %vm958, %v2061
    %2070 = vrot.lane.b32.xlu0 %v1932, 48
    %v2071 = vpop.permute.xlu0 %2070
    %2072 = vrot.lane.b32.xlu0 %v1937, 48
    %v2073 = vpop.permute.xlu0 %2072
    %2074 = vrot.lane.b32.xlu0 %v1942, 48
    %v2075 = vpop.permute.xlu0 %2074
    %2076 = vrot.lane.b32.xlu0 %v1947, 48
    %v2077 = vpop.permute.xlu0 %2076
    %2082 = vst.msk [vmem:[#allocation4 + $0x40] sm:$0xff] %vm958, %v2071
    %2083 = vst.msk [vmem:[#allocation4 + $0x48] sm:$0xff] %vm958, %v2073
    %2084 = vst.msk [vmem:[#allocation4 + $0x50] sm:$0xff] %vm958, %v2075
    %2085 = vst.msk [vmem:[#allocation4 + $0x58] sm:$0xff] %vm958, %v2077
    %2086 = vrot.lane.b32.xlu0 %v1932, 104
    %v2087 = vpop.permute.xlu0 %2086
    %2088 = vrot.lane.b32.xlu0 %v1937, 104
    %v2089 = vpop.permute.xlu0 %2088
    %2090 = vrot.lane.b32.xlu0 %v1942, 104
    %v2091 = vpop.permute.xlu0 %2090
    %2092 = vrot.lane.b32.xlu0 %v1947, 104
    %v2093 = vpop.permute.xlu0 %2092
    %2098 = vst.msk [vmem:[#allocation2 + $0x60] sm:$0xff] %vm958, %v2087
    %2099 = vst.msk [vmem:[#allocation2 + $0x68] sm:$0xff] %vm958, %v2089
    %2100 = vst.msk [vmem:[#allocation2 + $0x70] sm:$0xff] %vm958, %v2091
    %2101 = vst.msk [vmem:[#allocation2 + $0x78] sm:$0xff] %vm958, %v2093
    %2102 = vrot.lane.b32.xlu0 %v1932, 72
    %v2103 = vpop.permute.xlu0 %2102
    %2104 = vrot.lane.b32.xlu0 %v1937, 72
    %v2105 = vpop.permute.xlu0 %2104
    %2106 = vrot.lane.b32.xlu0 %v1942, 72
    %v2107 = vpop.permute.xlu0 %2106
    %2108 = vrot.lane.b32.xlu0 %v1947, 72
    %v2109 = vpop.permute.xlu0 %2108
    %2114 = vst.msk [vmem:[#allocation3 + $0x60] sm:$0xff] %vm958, %v2103
    %2115 = vst.msk [vmem:[#allocation3 + $0x68] sm:$0xff] %vm958, %v2105
    %2116 = vst.msk [vmem:[#allocation3 + $0x70] sm:$0xff] %vm958, %v2107
    %2117 = vst.msk [vmem:[#allocation3 + $0x78] sm:$0xff] %vm958, %v2109
    %2118 = vrot.lane.b32.xlu0 %v1932, 40
    %v2119 = vpop.permute.xlu0 %2118
    %2120 = vrot.lane.b32.xlu0 %v1937, 40
    %v2121 = vpop.permute.xlu0 %2120
    %2122 = vrot.lane.b32.xlu0 %v1942, 40
    %v2123 = vpop.permute.xlu0 %2122
    %2124 = vrot.lane.b32.xlu0 %v1947, 40
    %v2125 = vpop.permute.xlu0 %2124
    %2130 = vst.msk [vmem:[#allocation4 + $0x60] sm:$0xff] %vm958, %v2119
    %2131 = vst.msk [vmem:[#allocation4 + $0x68] sm:$0xff] %vm958, %v2121
    %2132 = vst.msk [vmem:[#allocation4 + $0x70] sm:$0xff] %vm958, %v2123
    %2133 = vst.msk [vmem:[#allocation4 + $0x78] sm:$0xff] %vm958, %v2125
    %v2134 = vld [vmem:[#allocation2] sm:$0xff]
    %v2135 = vld [vmem:[#allocation2 + $0x8] sm:$0xff]
    %v2136 = vld [vmem:[#allocation2 + $0x10] sm:$0xff]
    %v2137 = vld [vmem:[#allocation2 + $0x18] sm:$0xff]
    %v2138 = vld [vmem:[#allocation2 + $0x20] sm:$0xff]
    %v2139 = vld [vmem:[#allocation2 + $0x28] sm:$0xff]
    %v2140 = vld [vmem:[#allocation2 + $0x30] sm:$0xff]
    %v2141 = vld [vmem:[#allocation2 + $0x38] sm:$0xff]
    %v2142 = vld [vmem:[#allocation2 + $0x40] sm:$0xff]
    %v2143 = vld [vmem:[#allocation2 + $0x48] sm:$0xff]
    %v2144 = vld [vmem:[#allocation2 + $0x50] sm:$0xff]
    %v2145 = vld [vmem:[#allocation2 + $0x58] sm:$0xff]
    %v2146 = vld [vmem:[#allocation2 + $0x60] sm:$0xff]
    %v2147 = vld [vmem:[#allocation2 + $0x68] sm:$0xff]
    %v2148 = vld [vmem:[#allocation2 + $0x70] sm:$0xff]
    %v2149 = vld [vmem:[#allocation2 + $0x78] sm:$0xff]
    %v2150 = vld [vmem:[#allocation3] sm:$0xff]
    %v2151 = vld [vmem:[#allocation3 + $0x8] sm:$0xff]
    %v2152 = vld [vmem:[#allocation3 + $0x10] sm:$0xff]
    %v2153 = vld [vmem:[#allocation3 + $0x18] sm:$0xff]
    %v2154 = vld [vmem:[#allocation3 + $0x20] sm:$0xff]
    %v2155 = vld [vmem:[#allocation3 + $0x28] sm:$0xff]
    %v2156 = vld [vmem:[#allocation3 + $0x30] sm:$0xff]
    %v2157 = vld [vmem:[#allocation3 + $0x38] sm:$0xff]
    %v2158 = vld [vmem:[#allocation3 + $0x40] sm:$0xff]
    %v2159 = vld [vmem:[#allocation3 + $0x48] sm:$0xff]
    %v2160 = vld [vmem:[#allocation3 + $0x50] sm:$0xff]
    %v2161 = vld [vmem:[#allocation3 + $0x58] sm:$0xff]
    %v2162 = vld [vmem:[#allocation3 + $0x60] sm:$0xff]
    %v2163 = vld [vmem:[#allocation3 + $0x68] sm:$0xff]
    %v2164 = vld [vmem:[#allocation3 + $0x70] sm:$0xff]
    %v2165 = vld [vmem:[#allocation3 + $0x78] sm:$0xff]
    %v2166 = vld [vmem:[#allocation4] sm:$0xff]
    %v2167 = vld [vmem:[#allocation4 + $0x8] sm:$0xff]
    %v2168 = vld [vmem:[#allocation4 + $0x10] sm:$0xff]
    %v2169 = vld [vmem:[#allocation4 + $0x18] sm:$0xff]
    %v2170 = vld [vmem:[#allocation4 + $0x20] sm:$0xff]
    %v2171 = vld [vmem:[#allocation4 + $0x28] sm:$0xff]
    %v2172 = vld [vmem:[#allocation4 + $0x30] sm:$0xff]
    %v2173 = vld [vmem:[#allocation4 + $0x38] sm:$0xff]
    %v2174 = vld [vmem:[#allocation4 + $0x40] sm:$0xff]
    %v2175 = vld [vmem:[#allocation4 + $0x48] sm:$0xff]
    %v2176 = vld [vmem:[#allocation4 + $0x50] sm:$0xff]
    %v2177 = vld [vmem:[#allocation4 + $0x58] sm:$0xff]
    %v2178 = vld [vmem:[#allocation4 + $0x60] sm:$0xff]
    %v2179 = vld [vmem:[#allocation4 + $0x68] sm:$0xff]
    %v2180 = vld [vmem:[#allocation4 + $0x70] sm:$0xff]
    %v2181 = vld [vmem:[#allocation4 + $0x78] sm:$0xff]
    %v2183 = vsel %vm958, %v2134, 0
    %v2186 = vsel %vm958, %v2135, 0
    %v2189 = vsel %vm958, %v2136, 0
    %v2192 = vsel %vm958, %v2137, 0
    %v2195 = vsel %vm958, %v2138, 0
    %v2198 = vsel %vm958, %v2139, 0
    %v2201 = vsel %vm958, %v2140, 0
    %v2204 = vsel %vm958, %v2141, 0
    %v2207 = vsel %vm958, %v2142, 0
    %v2210 = vsel %vm958, %v2143, 0
    %v2213 = vsel %vm958, %v2144, 0
    %v2216 = vsel %vm958, %v2145, 0
    %v2219 = vsel %vm958, %v2146, 0
    %v2222 = vsel %vm958, %v2147, 0
    %v2225 = vsel %vm958, %v2148, 0
    %v2228 = vsel %vm958, %v2149, 0
    %v2231 = vsel %vm958, %v2150, 0
    %v2234 = vsel %vm958, %v2151, 0
    %v2237 = vsel %vm958, %v2152, 0
    %v2240 = vsel %vm958, %v2153, 0
    %v2243 = vsel %vm958, %v2154, 0
    %v2246 = vsel %vm958, %v2155, 0
    %v2249 = vsel %vm958, %v2156, 0
    %v2252 = vsel %vm958, %v2157, 0
    %v2255 = vsel %vm958, %v2158, 0
    %v2258 = vsel %vm958, %v2159, 0
    %v2261 = vsel %vm958, %v2160, 0
    %v2264 = vsel %vm958, %v2161, 0
    %v2267 = vsel %vm958, %v2162, 0
    %v2270 = vsel %vm958, %v2163, 0
    %v2273 = vsel %vm958, %v2164, 0
    %v2276 = vsel %vm958, %v2165, 0
    %2278 = vmatprep.subr.mxu0 0.0
    %2279 = vmatpush1.xpose.msra.mxu0 %v2231
    %2280 = vmatprep.subr.mxu0 0.0
    %2281 = vmatpush1.xpose.msra.mxu0 %v2234
    %2282 = vmatprep.subr.mxu0 0.0
    %2283 = vmatpush1.xpose.msra.mxu0 %v2237
    %2284 = vmatprep.subr.mxu0 0.0
    %2285 = vmatpush1.xpose.msra.mxu0 %v2240
    %2286 = vmatprep.subr.mxu0 0.0
    %2287 = vmatpush1.xpose.msra.mxu0 %v2243
    %2288 = vmatprep.subr.mxu0 0.0
    %2289 = vmatpush1.xpose.msra.mxu0 %v2246
    %2290 = vmatprep.subr.mxu0 0.0
    %2291 = vmatpush1.xpose.msra.mxu0 %v2249
    %2292 = vmatprep.subr.mxu0 0.0
    %2293 = vmatpush1.xpose.msra.mxu0 %v2252
    %2294 = vmatprep.subr.mxu0 0.0
    %2295 = vmatpush1.xpose.msra.mxu0 %v2255
    %2296 = vmatprep.subr.mxu0 0.0
    %2297 = vmatpush1.xpose.msra.mxu0 %v2258
    %2298 = vmatprep.subr.mxu0 0.0
    %2299 = vmatpush1.xpose.msra.mxu0 %v2261
    %2300 = vmatprep.subr.mxu0 0.0
    %2301 = vmatpush1.xpose.msra.mxu0 %v2264
    %2302 = vmatprep.subr.mxu0 0.0
    %2303 = vmatpush1.xpose.msra.mxu0 %v2267
    %2304 = vmatprep.subr.mxu0 0.0
    %2305 = vmatpush1.xpose.msra.mxu0 %v2270
    %2306 = vmatprep.subr.mxu0 0.0
    %2307 = vmatpush1.xpose.msra.mxu0 %v2273
    %2308 = vmatprep.subr.mxu0 0.0
    %2309 = vmatpush1.xpose.msra.mxu0 %v2276
    %2310 = vmatprep.subr.mxu0 0.0
    %2311 = vmatpush1.xpose.msra.mxu0 0.0
    %2312 = vmatprep.subr.mxu0 0.0
    %2313 = vmatpush1.xpose.msra.mxu0 0.0
    %2314 = vmatprep.subr.mxu0 0.0
    %2315 = vmatpush1.xpose.msra.mxu0 0.0
    %2316 = vmatprep.subr.mxu0 0.0
    %2317 = vmatpush1.xpose.msra.mxu0 0.0
    %2318 = vmatprep.subr.mxu0 0.0
    %2319 = vmatpush1.xpose.msra.mxu0 0.0
    %2320 = vmatprep.subr.mxu0 0.0
    %2321 = vmatpush1.xpose.msra.mxu0 0.0
    %2322 = vmatprep.subr.mxu0 0.0
    %2323 = vmatpush1.xpose.msra.mxu0 0.0
    %2324 = vmatprep.subr.mxu0 0.0
    %2325 = vmatpush1.xpose.msra.mxu0 0.0
    %2326 = vmatprep.subr.mxu0 0.0
    %2327 = vmatpush1.xpose.msra.mxu0 0.0
    %2328 = vmatprep.subr.mxu0 0.0
    %2329 = vmatpush1.xpose.msra.mxu0 0.0
    %2330 = vmatprep.subr.mxu0 0.0
    %2331 = vmatpush1.xpose.msra.mxu0 0.0
    %2332 = vmatprep.subr.mxu0 0.0
    %2333 = vmatpush1.xpose.msra.mxu0 0.0
    %2334 = vmatprep.subr.mxu0 0.0
    %2335 = vmatpush1.xpose.msra.mxu0 0.0
    %2336 = vmatprep.subr.mxu0 0.0
    %2337 = vmatpush1.xpose.msra.mxu0 0.0
    %2338 = vmatprep.subr.mxu0 0.0
    %2339 = vmatpush1.xpose.msra.mxu0 0.0
    %2340 = vmatprep.subr.mxu0 0.0
    %2341 = vmatpush1.xpose.msra.mxu0 0.0
    %2342 = vmatprep.mubr.f32.mxu0 0.0
    %2343 = vmatmul.mubr.f32.gmra.mrb[0].mxu0 %v2183
    %v2344 = vpop.f32.mrb[0].mxu0
    %v2345 = vadd.f32 %v825, %v2344
    %v2346 = vpop.f32.mrb[0].mxu0
    %2347 = vmatprep.mubr.f32.mxu0 0.0
    %2348 = vmatmul.mubr.f32.gmra.mrb[0].mxu0 %v2186
    %v2349 = vpop.f32.mrb[0].mxu0
    %v2350 = vadd.f32 %v826, %v2349
    %v2351 = vpop.f32.mrb[0].mxu0
    %2352 = vmatprep.mubr.f32.mxu0 0.0
    %2353 = vmatmul.mubr.f32.gmra.mrb[0].mxu0 %v2189
    %v2354 = vpop.f32.mrb[0].mxu0
    %v2355 = vadd.f32 %v827, %v2354
    %v2356 = vpop.f32.mrb[0].mxu0
    %2357 = vmatprep.mubr.f32.mxu0 0.0
    %2358 = vmatmul.mubr.f32.gmra.mrb[0].mxu0 %v2192
    %v2359 = vpop.f32.mrb[0].mxu0
    %v2360 = vadd.f32 %v828, %v2359
    %v2361 = vpop.f32.mrb[0].mxu0
    %2362 = vmatprep.mubr.f32.mxu0 0.0
    %2363 = vmatmul.mubr.f32.gmra.mrb[0].mxu0 %v2195
    %v2364 = vpop.f32.mrb[0].mxu0
    %v2365 = vadd.f32 %v829, %v2364
    %v2366 = vpop.f32.mrb[0].mxu0
    %2367 = vmatprep.mubr.f32.mxu0 0.0
    %2368 = vmatmul.mubr.f32.gmra.mrb[0].mxu0 %v2198
    %v2369 = vpop.f32.mrb[0].mxu0
    %v2370 = vadd.f32 %v830, %v2369
    %v2371 = vpop.f32.mrb[0].mxu0
    %2372 = vmatprep.mubr.f32.mxu0 0.0
    %2373 = vmatmul.mubr.f32.gmra.mrb[0].mxu0 %v2201
    %v2374 = vpop.f32.mrb[0].mxu0
    %v2375 = vadd.f32 %v831, %v2374
    %v2376 = vpop.f32.mrb[0].mxu0
    %2377 = vmatprep.mubr.f32.mxu0 0.0
    %2378 = vmatmul.mubr.f32.gmra.mrb[0].mxu0 %v2204
    %v2379 = vpop.f32.mrb[0].mxu0
    %v2380 = vadd.f32 %v832, %v2379
    %v2381 = vpop.f32.mrb[0].mxu0
    %2382 = vmatprep.mubr.f32.mxu0 0.0
    %2383 = vmatmul.mubr.f32.gmra.mrb[0].mxu0 %v2207
    %v2384 = vpop.f32.mrb[0].mxu0
    %v2385 = vadd.f32 %v833, %v2384
    %v2386 = vpop.f32.mrb[0].mxu0
    %2387 = vmatprep.mubr.f32.mxu0 0.0
    %2388 = vmatmul.mubr.f32.gmra.mrb[0].mxu0 %v2210
    %v2389 = vpop.f32.mrb[0].mxu0
    %v2390 = vadd.f32 %v834, %v2389
    %v2391 = vpop.f32.mrb[0].mxu0
    %2392 = vmatprep.mubr.f32.mxu0 0.0
    %2393 = vmatmul.mubr.f32.gmra.mrb[0].mxu0 %v2213
    %v2394 = vpop.f32.mrb[0].mxu0
    %v2395 = vadd.f32 %v835, %v2394
    %v2396 = vpop.f32.mrb[0].mxu0
    %2397 = vmatprep.mubr.f32.mxu0 0.0
    %2398 = vmatmul.mubr.f32.gmra.mrb[0].mxu0 %v2216
    %v2399 = vpop.f32.mrb[0].mxu0
    %v2400 = vadd.f32 %v836, %v2399
    %v2401 = vpop.f32.mrb[0].mxu0
    %2402 = vmatprep.mubr.f32.mxu0 0.0
    %2403 = vmatmul.mubr.f32.gmra.mrb[0].mxu0 %v2219
    %v2404 = vpop.f32.mrb[0].mxu0
    %v2405 = vadd.f32 %v837, %v2404
    %v2406 = vpop.f32.mrb[0].mxu0
    %2407 = vmatprep.mubr.f32.mxu0 0.0
    %2408 = vmatmul.mubr.f32.gmra.mrb[0].mxu0 %v2222
    %v2409 = vpop.f32.mrb[0].mxu0
    %v2410 = vadd.f32 %v838, %v2409
    %v2411 = vpop.f32.mrb[0].mxu0
    %2412 = vmatprep.mubr.f32.mxu0 0.0
    %2413 = vmatmul.mubr.f32.gmra.mrb[0].mxu0 %v2225
    %v2414 = vpop.f32.mrb[0].mxu0
    %v2415 = vadd.f32 %v839, %v2414
    %v2416 = vpop.f32.mrb[0].mxu0
    %2417 = vmatprep.mubr.f32.mxu0 0.0
    %2418 = vmatmul.mubr.f32.gmra.mrb[0].mxu0 %v2228
    %v2419 = vpop.f32.mrb[0].mxu0
    %v2420 = vadd.f32 %v840, %v2419
    %v2421 = vpop.f32.mrb[0].mxu0
    %2422 = vdwg.mxu0
    %2423 = vmax.xlane.f32.xlu0 %v2345
    %v2424 = vpop.xlane.xlu0 %2423
    %2425 = vmax.xlane.f32.xlu0 %v2350
    %v2426 = vpop.xlane.xlu0 %2425
    %2427 = vmax.xlane.f32.xlu0 %v2355
    %v2428 = vpop.xlane.xlu0 %2427
    %2429 = vmax.xlane.f32.xlu0 %v2360
    %v2430 = vpop.xlane.xlu0 %2429
    %2431 = vmax.xlane.f32.xlu0 %v2365
    %v2432 = vpop.xlane.xlu0 %2431
    %2433 = vmax.xlane.f32.xlu0 %v2370
    %v2434 = vpop.xlane.xlu0 %2433
    %2435 = vmax.xlane.f32.xlu0 %v2375
    %v2436 = vpop.xlane.xlu0 %2435
    %2437 = vmax.xlane.f32.xlu0 %v2380
    %v2438 = vpop.xlane.xlu0 %2437
    %2439 = vmax.xlane.f32.xlu0 %v2385
    %v2440 = vpop.xlane.xlu0 %2439
    %2441 = vmax.xlane.f32.xlu0 %v2390
    %v2442 = vpop.xlane.xlu0 %2441
    %2443 = vmax.xlane.f32.xlu0 %v2395
    %v2444 = vpop.xlane.xlu0 %2443
    %2445 = vmax.xlane.f32.xlu0 %v2400
    %v2446 = vpop.xlane.xlu0 %2445
    %2447 = vmax.xlane.f32.xlu0 %v2405
    %v2448 = vpop.xlane.xlu0 %2447
    %2449 = vmax.xlane.f32.xlu0 %v2410
    %v2450 = vpop.xlane.xlu0 %2449
    %2451 = vmax.xlane.f32.xlu0 %v2415
    %v2452 = vpop.xlane.xlu0 %2451
    %2453 = vmax.xlane.f32.xlu0 %v2420
    %v2454 = vpop.xlane.xlu0 %2453
    %v2455 = vsub.f32 %v2345, %v2424
    %v2456 = vsub.f32 %v2350, %v2426
    %v2457 = vsub.f32 %v2355, %v2428
    %v2458 = vsub.f32 %v2360, %v2430
    %v2459 = vsub.f32 %v2365, %v2432
    %v2460 = vsub.f32 %v2370, %v2434
    %v2461 = vsub.f32 %v2375, %v2436
    %v2462 = vsub.f32 %v2380, %v2438
    %v2463 = vsub.f32 %v2385, %v2440
    %v2464 = vsub.f32 %v2390, %v2442
    %v2465 = vsub.f32 %v2395, %v2444
    %v2466 = vsub.f32 %v2400, %v2446
    %v2467 = vsub.f32 %v2405, %v2448
    %v2468 = vsub.f32 %v2410, %v2450
    %v2469 = vsub.f32 %v2415, %v2452
    %v2470 = vsub.f32 %v2420, %v2454
    %v2471 = vmul.f32 %v2455, 1.442695
    %v2472 = vpow.pop %v2471
    %v2473 = vmul.f32 %v2456, 1.442695
    %v2474 = vpow.pop %v2473
    %v2475 = vmul.f32 %v2457, 1.442695
    %v2476 = vpow.pop %v2475
    %v2477 = vmul.f32 %v2458, 1.442695
    %v2478 = vpow.pop %v2477
    %v2479 = vmul.f32 %v2459, 1.442695
    %v2480 = vpow.pop %v2479
    %v2481 = vmul.f32 %v2460, 1.442695
    %v2482 = vpow.pop %v2481
    %v2483 = vmul.f32 %v2461, 1.442695
    %v2484 = vpow.pop %v2483
    %v2485 = vmul.f32 %v2462, 1.442695
    %v2486 = vpow.pop %v2485
    %v2487 = vmul.f32 %v2463, 1.442695
    %v2488 = vpow.pop %v2487
    %v2489 = vmul.f32 %v2464, 1.442695
    %v2490 = vpow.pop %v2489
    %v2491 = vmul.f32 %v2465, 1.442695
    %v2492 = vpow.pop %v2491
    %v2493 = vmul.f32 %v2466, 1.442695
    %v2494 = vpow.pop %v2493
    %v2495 = vmul.f32 %v2467, 1.442695
    %v2496 = vpow.pop %v2495
    %v2497 = vmul.f32 %v2468, 1.442695
    %v2498 = vpow.pop %v2497
    %v2499 = vmul.f32 %v2469, 1.442695
    %v2500 = vpow.pop %v2499
    %v2501 = vmul.f32 %v2470, 1.442695
    %v2502 = vpow.pop %v2501
    %2503 = vadd.xlane.f32.xlu0 %v2472
    %v2504 = vpop.xlane.xlu0 %2503
    %2505 = vadd.xlane.f32.xlu0 %v2474
    %v2506 = vpop.xlane.xlu0 %2505
    %2507 = vadd.xlane.f32.xlu0 %v2476
    %v2508 = vpop.xlane.xlu0 %2507
    %2509 = vadd.xlane.f32.xlu0 %v2478
    %v2510 = vpop.xlane.xlu0 %2509
    %2511 = vadd.xlane.f32.xlu0 %v2480
    %v2512 = vpop.xlane.xlu0 %2511
    %2513 = vadd.xlane.f32.xlu0 %v2482
    %v2514 = vpop.xlane.xlu0 %2513
    %2515 = vadd.xlane.f32.xlu0 %v2484
    %v2516 = vpop.xlane.xlu0 %2515
    %2517 = vadd.xlane.f32.xlu0 %v2486
    %v2518 = vpop.xlane.xlu0 %2517
    %2519 = vadd.xlane.f32.xlu0 %v2488
    %v2520 = vpop.xlane.xlu0 %2519
    %2521 = vadd.xlane.f32.xlu0 %v2490
    %v2522 = vpop.xlane.xlu0 %2521
    %2523 = vadd.xlane.f32.xlu0 %v2492
    %v2524 = vpop.xlane.xlu0 %2523
    %2525 = vadd.xlane.f32.xlu0 %v2494
    %v2526 = vpop.xlane.xlu0 %2525
    %2527 = vadd.xlane.f32.xlu0 %v2496
    %v2528 = vpop.xlane.xlu0 %2527
    %2529 = vadd.xlane.f32.xlu0 %v2498
    %v2530 = vpop.xlane.xlu0 %2529
    %2531 = vadd.xlane.f32.xlu0 %v2500
    %v2532 = vpop.xlane.xlu0 %2531
    %2533 = vadd.xlane.f32.xlu0 %v2502
    %v2534 = vpop.xlane.xlu0 %2533
    %v2535 = vrcp.pop %v2504
    %v2536 = vrcp.pop %v2506
    %v2537 = vrcp.pop %v2508
    %v2538 = vrcp.pop %v2510
    %v2539 = vrcp.pop %v2512
    %v2540 = vrcp.pop %v2514
    %v2541 = vrcp.pop %v2516
    %v2542 = vrcp.pop %v2518
    %v2543 = vrcp.pop %v2520
    %v2544 = vrcp.pop %v2522
    %v2545 = vrcp.pop %v2524
    %v2546 = vrcp.pop %v2526
    %v2547 = vrcp.pop %v2528
    %v2548 = vrcp.pop %v2530
    %v2549 = vrcp.pop %v2532
    %v2550 = vrcp.pop %v2534
    %v2551 = vmul.f32 %v2504, %v2535
    %v2552 = vmul.f32 %v2506, %v2536
    %v2553 = vmul.f32 %v2508, %v2537
    %v2554 = vmul.f32 %v2510, %v2538
    %v2555 = vmul.f32 %v2512, %v2539
    %v2556 = vmul.f32 %v2514, %v2540
    %v2557 = vmul.f32 %v2516, %v2541
    %v2558 = vmul.f32 %v2518, %v2542
    %v2559 = vmul.f32 %v2520, %v2543
    %v2560 = vmul.f32 %v2522, %v2544
    %v2561 = vmul.f32 %v2524, %v2545
    %v2562 = vmul.f32 %v2526, %v2546
    %v2563 = vmul.f32 %v2528, %v2547
    %v2564 = vmul.f32 %v2530, %v2548
    %v2565 = vmul.f32 %v2532, %v2549
    %v2566 = vmul.f32 %v2534, %v2550
    %v2567 = vsub.f32 2.0, %v2551
    %v2568 = vsub.f32 2.0, %v2552
    %v2569 = vsub.f32 2.0, %v2553
    %v2570 = vsub.f32 2.0, %v2554
    %v2571 = vsub.f32 2.0, %v2555
    %v2572 = vsub.f32 2.0, %v2556
    %v2573 = vsub.f32 2.0, %v2557
    %v2574 = vsub.f32 2.0, %v2558
    %v2575 = vsub.f32 2.0, %v2559
    %v2576 = vsub.f32 2.0, %v2560
    %v2577 = vsub.f32 2.0, %v2561
    %v2578 = vsub.f32 2.0, %v2562
    %v2579 = vsub.f32 2.0, %v2563
    %v2580 = vsub.f32 2.0, %v2564
    %v2581 = vsub.f32 2.0, %v2565
    %v2582 = vsub.f32 2.0, %v2566
    %v2583 = vmul.f32 %v2535, %v2567
    %v2584 = vmul.f32 %v2536, %v2568
    %v2585 = vmul.f32 %v2537, %v2569
    %v2586 = vmul.f32 %v2538, %v2570
    %v2587 = vmul.f32 %v2539, %v2571
    %v2588 = vmul.f32 %v2540, %v2572
    %v2589 = vmul.f32 %v2541, %v2573
    %v2590 = vmul.f32 %v2542, %v2574
    %v2591 = vmul.f32 %v2543, %v2575
    %v2592 = vmul.f32 %v2544, %v2576
    %v2593 = vmul.f32 %v2545, %v2577
    %v2594 = vmul.f32 %v2546, %v2578
    %v2595 = vmul.f32 %v2547, %v2579
    %v2596 = vmul.f32 %v2548, %v2580
    %v2597 = vmul.f32 %v2549, %v2581
    %v2598 = vmul.f32 %v2550, %v2582
    %v2599 = vmul.f32 %v2472, %v2583
    %v2600 = vmul.f32 %v2474, %v2584
    %v2601 = vmul.f32 %v2476, %v2585
    %v2602 = vmul.f32 %v2478, %v2586
    %v2603 = vmul.f32 %v2480, %v2587
    %v2604 = vmul.f32 %v2482, %v2588
    %v2605 = vmul.f32 %v2484, %v2589
    %v2606 = vmul.f32 %v2486, %v2590
    %v2607 = vmul.f32 %v2488, %v2591
    %v2608 = vmul.f32 %v2490, %v2592
    %v2609 = vmul.f32 %v2492, %v2593
    %v2610 = vmul.f32 %v2494, %v2594
    %v2611 = vmul.f32 %v2496, %v2595
    %v2612 = vmul.f32 %v2498, %v2596
    %v2613 = vmul.f32 %v2500, %v2597
    %v2614 = vmul.f32 %v2502, %v2598
    %2615 = vmatprep.subr.mxu0 0.0
    %2616 = vmatpush1.msra.mxu0 %v2166
    %2617 = vmatprep.subr.mxu0 0.0
    %2618 = vmatpush1.msra.mxu0 %v2167
    %2619 = vmatprep.subr.mxu0 0.0
    %2620 = vmatpush1.msra.mxu0 %v2168
    %2621 = vmatprep.subr.mxu0 0.0
    %2622 = vmatpush1.msra.mxu0 %v2169
    %2623 = vmatprep.subr.mxu0 0.0
    %2624 = vmatpush1.msra.mxu0 %v2170
    %2625 = vmatprep.subr.mxu0 0.0
    %2626 = vmatpush1.msra.mxu0 %v2171
    %2627 = vmatprep.subr.mxu0 0.0
    %2628 = vmatpush1.msra.mxu0 %v2172
    %2629 = vmatprep.subr.mxu0 0.0
    %2630 = vmatpush1.msra.mxu0 %v2173
    %2631 = vmatprep.subr.mxu0 0.0
    %2632 = vmatpush1.msra.mxu0 %v2174
    %2633 = vmatprep.subr.mxu0 0.0
    %2634 = vmatpush1.msra.mxu0 %v2175
    %2635 = vmatprep.subr.mxu0 0.0
    %2636 = vmatpush1.msra.mxu0 %v2176
    %2637 = vmatprep.subr.mxu0 0.0
    %2638 = vmatpush1.msra.mxu0 %v2177
    %2639 = vmatprep.subr.mxu0 0.0
    %2640 = vmatpush1.msra.mxu0 %v2178
    %2641 = vmatprep.subr.mxu0 0.0
    %2642 = vmatpush1.msra.mxu0 %v2179
    %2643 = vmatprep.subr.mxu0 0.0
    %2644 = vmatpush1.msra.mxu0 %v2180
    %2645 = vmatprep.subr.mxu0 0.0
    %2646 = vmatpush1.msra.mxu0 %v2181
    %2647 = vmatprep.subr.mxu0 0.0
    %2648 = vmatpush1.msra.mxu0 0.0
    %2649 = vmatprep.subr.mxu0 0.0
    %2650 = vmatpush1.msra.mxu0 0.0
    %2651 = vmatprep.subr.mxu0 0.0
    %2652 = vmatpush1.msra.mxu0 0.0
    %2653 = vmatprep.subr.mxu0 0.0
    %2654 = vmatpush1.msra.mxu0 0.0
    %2655 = vmatprep.subr.mxu0 0.0
    %2656 = vmatpush1.msra.mxu0 0.0
    %2657 = vmatprep.subr.mxu0 0.0
    %2658 = vmatpush1.msra.mxu0 0.0
    %2659 = vmatprep.subr.mxu0 0.0
    %2660 = vmatpush1.msra.mxu0 0.0
    %2661 = vmatprep.subr.mxu0 0.0
    %2662 = vmatpush1.msra.mxu0 0.0
    %2663 = vmatprep.subr.mxu0 0.0
    %2664 = vmatpush1.msra.mxu0 0.0
    %2665 = vmatprep.subr.mxu0 0.0
    %2666 = vmatpush1.msra.mxu0 0.0
    %2667 = vmatprep.subr.mxu0 0.0
    %2668 = vmatpush1.msra.mxu0 0.0
    %2669 = vmatprep.subr.mxu0 0.0
    %2670 = vmatpush1.msra.mxu0 0.0
    %2671 = vmatprep.subr.mxu0 0.0
    %2672 = vmatpush1.msra.mxu0 0.0
    %2673 = vmatprep.subr.mxu0 0.0
    %2674 = vmatpush1.msra.mxu0 0.0
    %2675 = vmatprep.subr.mxu0 0.0
    %2676 = vmatpush1.msra.mxu0 0.0
    %2677 = vmatprep.subr.mxu0 0.0
    %2678 = vmatpush1.msra.mxu0 0.0
    %2679 = vmatprep.mubr.f32.mxu0 0.0
    %2680 = vmatmul.mubr.f32.gmra.mrb[0].mxu0 %v2599
    %v2681 = vpop.f32.mrb[0].mxu0
    %v2682 = vadd.f32 0.0, %v2681
    %v2683 = vpop.f32.mrb[0].mxu0
    %2684 = vmatprep.mubr.f32.mxu0 0.0
    %2685 = vmatmul.mubr.f32.gmra.mrb[0].mxu0 %v2600
    %v2686 = vpop.f32.mrb[0].mxu0
    %v2687 = vadd.f32 0.0, %v2686
    %v2688 = vpop.f32.mrb[0].mxu0
    %2689 = vmatprep.mubr.f32.mxu0 0.0
    %2690 = vmatmul.mubr.f32.gmra.mrb[0].mxu0 %v2601
    %v2691 = vpop.f32.mrb[0].mxu0
    %v2692 = vadd.f32 0.0, %v2691
    %v2693 = vpop.f32.mrb[0].mxu0
    %2694 = vmatprep.mubr.f32.mxu0 0.0
    %2695 = vmatmul.mubr.f32.gmra.mrb[0].mxu0 %v2602
    %v2696 = vpop.f32.mrb[0].mxu0
    %v2697 = vadd.f32 0.0, %v2696
    %v2698 = vpop.f32.mrb[0].mxu0
    %2699 = vmatprep.mubr.f32.mxu0 0.0
    %2700 = vmatmul.mubr.f32.gmra.mrb[0].mxu0 %v2603
    %v2701 = vpop.f32.mrb[0].mxu0
    %v2702 = vadd.f32 0.0, %v2701
    %v2703 = vpop.f32.mrb[0].mxu0
    %2704 = vmatprep.mubr.f32.mxu0 0.0
    %2705 = vmatmul.mubr.f32.gmra.mrb[0].mxu0 %v2604
    %v2706 = vpop.f32.mrb[0].mxu0
    %v2707 = vadd.f32 0.0, %v2706
    %v2708 = vpop.f32.mrb[0].mxu0
    %2709 = vmatprep.mubr.f32.mxu0 0.0
    %2710 = vmatmul.mubr.f32.gmra.mrb[0].mxu0 %v2605
    %v2711 = vpop.f32.mrb[0].mxu0
    %v2712 = vadd.f32 0.0, %v2711
    %v2713 = vpop.f32.mrb[0].mxu0
    %2714 = vmatprep.mubr.f32.mxu0 0.0
    %2715 = vmatmul.mubr.f32.gmra.mrb[0].mxu0 %v2606
    %v2716 = vpop.f32.mrb[0].mxu0
    %v2717 = vadd.f32 0.0, %v2716
    %v2718 = vpop.f32.mrb[0].mxu0
    %2719 = vmatprep.mubr.f32.mxu0 0.0
    %2720 = vmatmul.mubr.f32.gmra.mrb[0].mxu0 %v2607
    %v2721 = vpop.f32.mrb[0].mxu0
    %v2722 = vadd.f32 0.0, %v2721
    %v2723 = vpop.f32.mrb[0].mxu0
    %2724 = vmatprep.mubr.f32.mxu0 0.0
    %2725 = vmatmul.mubr.f32.gmra.mrb[0].mxu0 %v2608
    %v2726 = vpop.f32.mrb[0].mxu0
    %v2727 = vadd.f32 0.0, %v2726
    %v2728 = vpop.f32.mrb[0].mxu0
    %2729 = vmatprep.mubr.f32.mxu0 0.0
    %2730 = vmatmul.mubr.f32.gmra.mrb[0].mxu0 %v2609
    %v2731 = vpop.f32.mrb[0].mxu0
    %v2732 = vadd.f32 0.0, %v2731
    %v2733 = vpop.f32.mrb[0].mxu0
    %2734 = vmatprep.mubr.f32.mxu0 0.0
    %2735 = vmatmul.mubr.f32.gmra.mrb[0].mxu0 %v2610
    %v2736 = vpop.f32.mrb[0].mxu0
    %v2737 = vadd.f32 0.0, %v2736
    %v2738 = vpop.f32.mrb[0].mxu0
    %2739 = vmatprep.mubr.f32.mxu0 0.0
    %2740 = vmatmul.mubr.f32.gmra.mrb[0].mxu0 %v2611
    %v2741 = vpop.f32.mrb[0].mxu0
    %v2742 = vadd.f32 0.0, %v2741
    %v2743 = vpop.f32.mrb[0].mxu0
    %2744 = vmatprep.mubr.f32.mxu0 0.0
    %2745 = vmatmul.mubr.f32.gmra.mrb[0].mxu0 %v2612
    %v2746 = vpop.f32.mrb[0].mxu0
    %v2747 = vadd.f32 0.0, %v2746
    %v2748 = vpop.f32.mrb[0].mxu0
    %2749 = vmatprep.mubr.f32.mxu0 0.0
    %2750 = vmatmul.mubr.f32.gmra.mrb[0].mxu0 %v2613
    %v2751 = vpop.f32.mrb[0].mxu0
    %v2752 = vadd.f32 0.0, %v2751
    %v2753 = vpop.f32.mrb[0].mxu0
    %2754 = vmatprep.mubr.f32.mxu0 0.0
    %2755 = vmatmul.mubr.f32.gmra.mrb[0].mxu0 %v2614
    %v2756 = vpop.f32.mrb[0].mxu0
    %v2757 = vadd.f32 0.0, %v2756
    %v2758 = vpop.f32.mrb[0].mxu0
    %2759 = vdwg.mxu0
    %2760 = vst.msk [vmem:[#allocation5] sm:$0xff] %vm958, %v2682
    %2761 = vst.msk [vmem:[#allocation5 + $0x8] sm:$0xff] %vm958, %v2687
    %2762 = vst.msk [vmem:[#allocation5 + $0x10] sm:$0xff] %vm958, %v2692
    %2763 = vst.msk [vmem:[#allocation5 + $0x18] sm:$0xff] %vm958, %v2697
    %2768 = vrot.lane.b32.xlu0 %v2702, 8
    %v2769 = vpop.permute.xlu0 %2768
    %2770 = vrot.lane.b32.xlu0 %v2707, 8
    %v2771 = vpop.permute.xlu0 %2770
    %2772 = vrot.lane.b32.xlu0 %v2712, 8
    %v2773 = vpop.permute.xlu0 %2772
    %2774 = vrot.lane.b32.xlu0 %v2717, 8
    %v2775 = vpop.permute.xlu0 %2774
    %2780 = vst.msk [vmem:[#allocation5] sm:$0xff] %vm1789, %v2769
    %2781 = vst.msk [vmem:[#allocation5 + $0x8] sm:$0xff] %vm1789, %v2771
    %2782 = vst.msk [vmem:[#allocation5 + $0x10] sm:$0xff] %vm1789, %v2773
    %2783 = vst.msk [vmem:[#allocation5 + $0x18] sm:$0xff] %vm1789, %v2775
    %2788 = vrot.lane.b32.xlu0 %v2722, 16
    %v2789 = vpop.permute.xlu0 %2788
    %2790 = vrot.lane.b32.xlu0 %v2727, 16
    %v2791 = vpop.permute.xlu0 %2790
    %2792 = vrot.lane.b32.xlu0 %v2732, 16
    %v2793 = vpop.permute.xlu0 %2792
    %2794 = vrot.lane.b32.xlu0 %v2737, 16
    %v2795 = vpop.permute.xlu0 %2794
    %2800 = vst.msk [vmem:[#allocation5] sm:$0xff] %vm1810, %v2789
    %2801 = vst.msk [vmem:[#allocation5 + $0x8] sm:$0xff] %vm1810, %v2791
    %2802 = vst.msk [vmem:[#allocation5 + $0x10] sm:$0xff] %vm1810, %v2793
    %2803 = vst.msk [vmem:[#allocation5 + $0x18] sm:$0xff] %vm1810, %v2795
    %2808 = vrot.lane.b32.xlu0 %v2742, 24
    %v2809 = vpop.permute.xlu0 %2808
    %2810 = vrot.lane.b32.xlu0 %v2747, 24
    %v2811 = vpop.permute.xlu0 %2810
    %2812 = vrot.lane.b32.xlu0 %v2752, 24
    %v2813 = vpop.permute.xlu0 %2812
    %2814 = vrot.lane.b32.xlu0 %v2757, 24
    %v2815 = vpop.permute.xlu0 %2814
    %2820 = vst.msk [vmem:[#allocation5] sm:$0xff] %vm1831, %v2809
    %2821 = vst.msk [vmem:[#allocation5 + $0x8] sm:$0xff] %vm1831, %v2811
    %2822 = vst.msk [vmem:[#allocation5 + $0x10] sm:$0xff] %vm1831, %v2813
    %2823 = vst.msk [vmem:[#allocation5 + $0x18] sm:$0xff] %vm1831, %v2815
    %v2824 = vld [vmem:[#allocation5] sm:$0xff]
    %v2825 = vld [vmem:[#allocation5 + $0x8] sm:$0xff]
    %v2826 = vld [vmem:[#allocation5 + $0x10] sm:$0xff]
    %v2827 = vld [vmem:[#allocation5 + $0x18] sm:$0xff]
    %v2832 = vcombine.high %v2824, %v2824
    %v2833 = vcombine.high %v2825, %v2825
    %v2834 = vcombine.high %v2826, %v2826
    %v2835 = vcombine.high %v2827, %v2827
    %v2836 = vld [vmem:[%s5] sm:$0xff]
    %v2837 = vld [vmem:[%s5 + $0x8] sm:$0xff]
    %v2838 = vld [vmem:[%s5 + $0x10] sm:$0xff]
    %v2839 = vld [vmem:[%s5 + $0x18] sm:$0xff]
    %v2840 = vld [vmem:[%s5 + $0x20] sm:$0xff]
    %v2841 = vld [vmem:[%s5 + $0x28] sm:$0xff]
    %v2842 = vld [vmem:[%s5 + $0x30] sm:$0xff]
    %v2843 = vld [vmem:[%s5 + $0x38] sm:$0xff]
    %v2844 = vld [vmem:[%s5 + $0x40] sm:$0xff]
    %v2845 = vld [vmem:[%s5 + $0x48] sm:$0xff]
    %v2846 = vld [vmem:[%s5 + $0x50] sm:$0xff]
    %v2847 = vld [vmem:[%s5 + $0x58] sm:$0xff]
    %v2848 = vld [vmem:[%s5 + $0x60] sm:$0xff]
    %v2849 = vld [vmem:[%s5 + $0x68] sm:$0xff]
    %v2850 = vld [vmem:[%s5 + $0x70] sm:$0xff]
    %v2851 = vld [vmem:[%s5 + $0x78] sm:$0xff]
    %v2852 = vld [vmem:[%s5 + $0x80] sm:$0xff]
    %v2853 = vld [vmem:[%s5 + $0x88] sm:$0xff]
    %v2854 = vld [vmem:[%s5 + $0x90] sm:$0xff]
    %v2855 = vld [vmem:[%s5 + $0x98] sm:$0xff]
    %v2856 = vld [vmem:[%s5 + $0xa0] sm:$0xff]
    %v2857 = vld [vmem:[%s5 + $0xa8] sm:$0xff]
    %v2858 = vld [vmem:[%s5 + $0xb0] sm:$0xff]
    %v2859 = vld [vmem:[%s5 + $0xb8] sm:$0xff]
    %v2860 = vld [vmem:[%s5 + $0xc0] sm:$0xff]
    %v2861 = vld [vmem:[%s5 + $0xc8] sm:$0xff]
    %v2862 = vld [vmem:[%s5 + $0xd0] sm:$0xff]
    %v2863 = vld [vmem:[%s5 + $0xd8] sm:$0xff]
    %v2864 = vld [vmem:[%s5 + $0xe0] sm:$0xff]
    %v2865 = vld [vmem:[%s5 + $0xe8] sm:$0xff]
    %v2866 = vld [vmem:[%s5 + $0xf0] sm:$0xff]
    %v2867 = vld [vmem:[%s5 + $0xf8] sm:$0xff]
    %v2868 = vld [vmem:[%s6] sm:$0xff]
    %v2869 = vld [vmem:[%s6 + $0x8] sm:$0xff]
    %v2870 = vld [vmem:[%s6 + $0x10] sm:$0xff]
    %v2871 = vld [vmem:[%s6 + $0x18] sm:$0xff]
    %2873 = vset.pattern.permute.xlu0 0
    %2874 = vperm.xlu0 %2873, %v2868
    %v2875 = vpop.permute.xlu0 %2874
    %2878 = vset.pattern.permute.xlu0 0
    %2879 = vperm.xlu0 %2878, %v2869
    %v2880 = vpop.permute.xlu0 %2879
    %2883 = vset.pattern.permute.xlu0 0
    %2884 = vperm.xlu0 %2883, %v2870
    %v2885 = vpop.permute.xlu0 %2884
    %2888 = vset.pattern.permute.xlu0 0
    %2889 = vperm.xlu0 %2888, %v2871
    %v2890 = vpop.permute.xlu0 %2889
    %v2893 = vsel %vm864, %v2836, 0
    %v2896 = vsel %vm864, %v2837, 0
    %v2899 = vsel %vm864, %v2838, 0
    %v2902 = vsel %vm864, %v2839, 0
    %v2904 = vsel %vm864, %v2824, 0
    %2906 = vmatprep.subr.mxu0 0.0
    %2907 = vmatpush1.xpose.msra.mxu0 %v2904
    %2908 = vmatprep.subr.mxu0 0.0
    %2909 = vmatpush1.xpose.msra.mxu0 0.0
    %2910 = vmatprep.subr.mxu0 0.0
    %2911 = vmatpush1.xpose.msra.mxu0 0.0
    %2912 = vmatprep.subr.mxu0 0.0
    %2913 = vmatpush1.xpose.msra.mxu0 0.0
    %2914 = vmatprep.subr.mxu0 0.0
    %2915 = vmatpush1.xpose.msra.mxu0 0.0
    %2916 = vmatprep.subr.mxu0 0.0
    %2917 = vmatpush1.xpose.msra.mxu0 0.0
    %2918 = vmatprep.subr.mxu0 0.0
    %2919 = vmatpush1.xpose.msra.mxu0 0.0
    %2920 = vmatprep.subr.mxu0 0.0
    %2921 = vmatpush1.xpose.msra.mxu0 0.0
    %2922 = vmatprep.subr.mxu0 0.0
    %2923 = vmatpush1.xpose.msra.mxu0 0.0
    %2924 = vmatprep.subr.mxu0 0.0
    %2925 = vmatpush1.xpose.msra.mxu0 0.0
    %2926 = vmatprep.subr.mxu0 0.0
    %2927 = vmatpush1.xpose.msra.mxu0 0.0
    %2928 = vmatprep.subr.mxu0 0.0
    %2929 = vmatpush1.xpose.msra.mxu0 0.0
    %2930 = vmatprep.subr.mxu0 0.0
    %2931 = vmatpush1.xpose.msra.mxu0 0.0
    %2932 = vmatprep.subr.mxu0 0.0
    %2933 = vmatpush1.xpose.msra.mxu0 0.0
    %2934 = vmatprep.subr.mxu0 0.0
    %2935 = vmatpush1.xpose.msra.mxu0 0.0
    %2936 = vmatprep.subr.mxu0 0.0
    %2937 = vmatpush1.xpose.msra.mxu0 0.0
    %2938 = vmatprep.subr.mxu0 0.0
    %2939 = vmatpush1.xpose.msra.mxu0 0.0
    %2940 = vmatprep.subr.mxu0 0.0
    %2941 = vmatpush1.xpose.msra.mxu0 0.0
    %2942 = vmatprep.subr.mxu0 0.0
    %2943 = vmatpush1.xpose.msra.mxu0 0.0
    %2944 = vmatprep.subr.mxu0 0.0
    %2945 = vmatpush1.xpose.msra.mxu0 0.0
    %2946 = vmatprep.subr.mxu0 0.0
    %2947 = vmatpush1.xpose.msra.mxu0 0.0
    %2948 = vmatprep.subr.mxu0 0.0
    %2949 = vmatpush1.xpose.msra.mxu0 0.0
    %2950 = vmatprep.subr.mxu0 0.0
    %2951 = vmatpush1.xpose.msra.mxu0 0.0
    %2952 = vmatprep.subr.mxu0 0.0
    %2953 = vmatpush1.xpose.msra.mxu0 0.0
    %2954 = vmatprep.subr.mxu0 0.0
    %2955 = vmatpush1.xpose.msra.mxu0 0.0
    %2956 = vmatprep.subr.mxu0 0.0
    %2957 = vmatpush1.xpose.msra.mxu0 0.0
    %2958 = vmatprep.subr.mxu0 0.0
    %2959 = vmatpush1.xpose.msra.mxu0 0.0
    %2960 = vmatprep.subr.mxu0 0.0
    %2961 = vmatpush1.xpose.msra.mxu0 0.0
    %2962 = vmatprep.subr.mxu0 0.0
    %2963 = vmatpush1.xpose.msra.mxu0 0.0
    %2964 = vmatprep.subr.mxu0 0.0
    %2965 = vmatpush1.xpose.msra.mxu0 0.0
    %2966 = vmatprep.subr.mxu0 0.0
    %2967 = vmatpush1.xpose.msra.mxu0 0.0
    %2968 = vmatprep.subr.mxu0 0.0
    %2969 = vmatpush1.xpose.msra.mxu0 0.0
    %2970 = vmatprep.mubr.f32.mxu0 0.0
    %2971 = vmatmul.mubr.f32.gmra.mrb[0].mxu0 %v2893
    %v2972 = vpop.f32.mrb[0].mxu0
    %v2973 = vadd.f32 %v2875, %v2972
    %v2974 = vpop.f32.mrb[0].mxu0
    %2975 = vmatprep.mubr.f32.mxu0 0.0
    %2976 = vmatmul.mubr.f32.gmra.mrb[0].mxu0 %v2896
    %v2977 = vpop.f32.mrb[0].mxu0
    %v2978 = vadd.f32 %v2880, %v2977
    %v2979 = vpop.f32.mrb[0].mxu0
    %2980 = vmatprep.mubr.f32.mxu0 0.0
    %2981 = vmatmul.mubr.f32.gmra.mrb[0].mxu0 %v2899
    %v2982 = vpop.f32.mrb[0].mxu0
    %v2983 = vadd.f32 %v2885, %v2982
    %v2984 = vpop.f32.mrb[0].mxu0
    %2985 = vmatprep.mubr.f32.mxu0 0.0
    %2986 = vmatmul.mubr.f32.gmra.mrb[0].mxu0 %v2902
    %v2987 = vpop.f32.mrb[0].mxu0
    %v2988 = vadd.f32 %v2890, %v2987
    %v2989 = vpop.f32.mrb[0].mxu0
    %2990 = vdwg.mxu0
    %v2992 = vsel %vm864, %v2840, 0
    %v2995 = vsel %vm864, %v2841, 0
    %v2998 = vsel %vm864, %v2842, 0
    %v3001 = vsel %vm864, %v2843, 0
    %v3003 = vsel %vm864, %v2832, 0
    %3005 = vmatprep.subr.mxu0 0.0
    %3006 = vmatpush1.xpose.msra.mxu0 %v3003
    %3007 = vmatprep.subr.mxu0 0.0
    %3008 = vmatpush1.xpose.msra.mxu0 0.0
    %3009 = vmatprep.subr.mxu0 0.0
    %3010 = vmatpush1.xpose.msra.mxu0 0.0
    %3011 = vmatprep.subr.mxu0 0.0
    %3012 = vmatpush1.xpose.msra.mxu0 0.0
    %3013 = vmatprep.subr.mxu0 0.0
    %3014 = vmatpush1.xpose.msra.mxu0 0.0
    %3015 = vmatprep.subr.mxu0 0.0
    %3016 = vmatpush1.xpose.msra.mxu0 0.0
    %3017 = vmatprep.subr.mxu0 0.0
    %3018 = vmatpush1.xpose.msra.mxu0 0.0
    %3019 = vmatprep.subr.mxu0 0.0
    %3020 = vmatpush1.xpose.msra.mxu0 0.0
    %3021 = vmatprep.subr.mxu0 0.0
    %3022 = vmatpush1.xpose.msra.mxu0 0.0
    %3023 = vmatprep.subr.mxu0 0.0
    %3024 = vmatpush1.xpose.msra.mxu0 0.0
    %3025 = vmatprep.subr.mxu0 0.0
    %3026 = vmatpush1.xpose.msra.mxu0 0.0
    %3027 = vmatprep.subr.mxu0 0.0
    %3028 = vmatpush1.xpose.msra.mxu0 0.0
    %3029 = vmatprep.subr.mxu0 0.0
    %3030 = vmatpush1.xpose.msra.mxu0 0.0
    %3031 = vmatprep.subr.mxu0 0.0
    %3032 = vmatpush1.xpose.msra.mxu0 0.0
    %3033 = vmatprep.subr.mxu0 0.0
    %3034 = vmatpush1.xpose.msra.mxu0 0.0
    %3035 = vmatprep.subr.mxu0 0.0
    %3036 = vmatpush1.xpose.msra.mxu0 0.0
    %3037 = vmatprep.subr.mxu0 0.0
    %3038 = vmatpush1.xpose.msra.mxu0 0.0
    %3039 = vmatprep.subr.mxu0 0.0
    %3040 = vmatpush1.xpose.msra.mxu0 0.0
    %3041 = vmatprep.subr.mxu0 0.0
    %3042 = vmatpush1.xpose.msra.mxu0 0.0
    %3043 = vmatprep.subr.mxu0 0.0
    %3044 = vmatpush1.xpose.msra.mxu0 0.0
    %3045 = vmatprep.subr.mxu0 0.0
    %3046 = vmatpush1.xpose.msra.mxu0 0.0
    %3047 = vmatprep.subr.mxu0 0.0
    %3048 = vmatpush1.xpose.msra.mxu0 0.0
    %3049 = vmatprep.subr.mxu0 0.0
    %3050 = vmatpush1.xpose.msra.mxu0 0.0
    %3051 = vmatprep.subr.mxu0 0.0
    %3052 = vmatpush1.xpose.msra.mxu0 0.0
    %3053 = vmatprep.subr.mxu0 0.0
    %3054 = vmatpush1.xpose.msra.mxu0 0.0
    %3055 = vmatprep.subr.mxu0 0.0
    %3056 = vmatpush1.xpose.msra.mxu0 0.0
    %3057 = vmatprep.subr.mxu0 0.0
    %3058 = vmatpush1.xpose.msra.mxu0 0.0
    %3059 = vmatprep.subr.mxu0 0.0
    %3060 = vmatpush1.xpose.msra.mxu0 0.0
    %3061 = vmatprep.subr.mxu0 0.0
    %3062 = vmatpush1.xpose.msra.mxu0 0.0
    %3063 = vmatprep.subr.mxu0 0.0
    %3064 = vmatpush1.xpose.msra.mxu0 0.0
    %3065 = vmatprep.subr.mxu0 0.0
    %3066 = vmatpush1.xpose.msra.mxu0 0.0
    %3067 = vmatprep.subr.mxu0 0.0
    %3068 = vmatpush1.xpose.msra.mxu0 0.0
    %3069 = vmatprep.mubr.f32.mxu0 0.0
    %3070 = vmatmul.mubr.f32.gmra.mrb[0].mxu0 %v2992
    %v3071 = vpop.f32.mrb[0].mxu0
    %v3072 = vadd.f32 %v2875, %v3071
    %v3073 = vpop.f32.mrb[0].mxu0
    %3074 = vmatprep.mubr.f32.mxu0 0.0
    %3075 = vmatmul.mubr.f32.gmra.mrb[0].mxu0 %v2995
    %v3076 = vpop.f32.mrb[0].mxu0
    %v3077 = vadd.f32 %v2880, %v3076
    %v3078 = vpop.f32.mrb[0].mxu0
    %3079 = vmatprep.mubr.f32.mxu0 0.0
    %3080 = vmatmul.mubr.f32.gmra.mrb[0].mxu0 %v2998
    %v3081 = vpop.f32.mrb[0].mxu0
    %v3082 = vadd.f32 %v2885, %v3081
    %v3083 = vpop.f32.mrb[0].mxu0
    %3084 = vmatprep.mubr.f32.mxu0 0.0
    %3085 = vmatmul.mubr.f32.gmra.mrb[0].mxu0 %v3001
    %v3086 = vpop.f32.mrb[0].mxu0
    %v3087 = vadd.f32 %v2890, %v3086
    %v3088 = vpop.f32.mrb[0].mxu0
    %3089 = vdwg.mxu0
    %v3091 = vsel %vm864, %v2844, 0
    %v3094 = vsel %vm864, %v2845, 0
    %v3097 = vsel %vm864, %v2846, 0
    %v3100 = vsel %vm864, %v2847, 0
    %v3102 = vsel %vm864, %v2825, 0
    %3104 = vmatprep.subr.mxu0 0.0
    %3105 = vmatpush1.xpose.msra.mxu0 %v3102
    %3106 = vmatprep.subr.mxu0 0.0
    %3107 = vmatpush1.xpose.msra.mxu0 0.0
    %3108 = vmatprep.subr.mxu0 0.0
    %3109 = vmatpush1.xpose.msra.mxu0 0.0
    %3110 = vmatprep.subr.mxu0 0.0
    %3111 = vmatpush1.xpose.msra.mxu0 0.0
    %3112 = vmatprep.subr.mxu0 0.0
    %3113 = vmatpush1.xpose.msra.mxu0 0.0
    %3114 = vmatprep.subr.mxu0 0.0
    %3115 = vmatpush1.xpose.msra.mxu0 0.0
    %3116 = vmatprep.subr.mxu0 0.0
    %3117 = vmatpush1.xpose.msra.mxu0 0.0
    %3118 = vmatprep.subr.mxu0 0.0
    %3119 = vmatpush1.xpose.msra.mxu0 0.0
    %3120 = vmatprep.subr.mxu0 0.0
    %3121 = vmatpush1.xpose.msra.mxu0 0.0
    %3122 = vmatprep.subr.mxu0 0.0
    %3123 = vmatpush1.xpose.msra.mxu0 0.0
    %3124 = vmatprep.subr.mxu0 0.0
    %3125 = vmatpush1.xpose.msra.mxu0 0.0
    %3126 = vmatprep.subr.mxu0 0.0
    %3127 = vmatpush1.xpose.msra.mxu0 0.0
    %3128 = vmatprep.subr.mxu0 0.0
    %3129 = vmatpush1.xpose.msra.mxu0 0.0
    %3130 = vmatprep.subr.mxu0 0.0
    %3131 = vmatpush1.xpose.msra.mxu0 0.0
    %3132 = vmatprep.subr.mxu0 0.0
    %3133 = vmatpush1.xpose.msra.mxu0 0.0
    %3134 = vmatprep.subr.mxu0 0.0
    %3135 = vmatpush1.xpose.msra.mxu0 0.0
    %3136 = vmatprep.subr.mxu0 0.0
    %3137 = vmatpush1.xpose.msra.mxu0 0.0
    %3138 = vmatprep.subr.mxu0 0.0
    %3139 = vmatpush1.xpose.msra.mxu0 0.0
    %3140 = vmatprep.subr.mxu0 0.0
    %3141 = vmatpush1.xpose.msra.mxu0 0.0
    %3142 = vmatprep.subr.mxu0 0.0
    %3143 = vmatpush1.xpose.msra.mxu0 0.0
    %3144 = vmatprep.subr.mxu0 0.0
    %3145 = vmatpush1.xpose.msra.mxu0 0.0
    %3146 = vmatprep.subr.mxu0 0.0
    %3147 = vmatpush1.xpose.msra.mxu0 0.0
    %3148 = vmatprep.subr.mxu0 0.0
    %3149 = vmatpush1.xpose.msra.mxu0 0.0
    %3150 = vmatprep.subr.mxu0 0.0
    %3151 = vmatpush1.xpose.msra.mxu0 0.0
    %3152 = vmatprep.subr.mxu0 0.0
    %3153 = vmatpush1.xpose.msra.mxu0 0.0
    %3154 = vmatprep.subr.mxu0 0.0
    %3155 = vmatpush1.xpose.msra.mxu0 0.0
    %3156 = vmatprep.subr.mxu0 0.0
    %3157 = vmatpush1.xpose.msra.mxu0 0.0
    %3158 = vmatprep.subr.mxu0 0.0
    %3159 = vmatpush1.xpose.msra.mxu0 0.0
    %3160 = vmatprep.subr.mxu0 0.0
    %3161 = vmatpush1.xpose.msra.mxu0 0.0
    %3162 = vmatprep.subr.mxu0 0.0
    %3163 = vmatpush1.xpose.msra.mxu0 0.0
    %3164 = vmatprep.subr.mxu0 0.0
    %3165 = vmatpush1.xpose.msra.mxu0 0.0
    %3166 = vmatprep.subr.mxu0 0.0
    %3167 = vmatpush1.xpose.msra.mxu0 0.0
    %3168 = vmatprep.mubr.f32.mxu0 0.0
    %3169 = vmatmul.mubr.f32.gmra.mrb[0].mxu0 %v3091
    %v3170 = vpop.f32.mrb[0].mxu0
    %v3171 = vadd.f32 %v2875, %v3170
    %v3172 = vpop.f32.mrb[0].mxu0
    %3173 = vmatprep.mubr.f32.mxu0 0.0
    %3174 = vmatmul.mubr.f32.gmra.mrb[0].mxu0 %v3094
    %v3175 = vpop.f32.mrb[0].mxu0
    %v3176 = vadd.f32 %v2880, %v3175
    %v3177 = vpop.f32.mrb[0].mxu0
    %3178 = vmatprep.mubr.f32.mxu0 0.0
    %3179 = vmatmul.mubr.f32.gmra.mrb[0].mxu0 %v3097
    %v3180 = vpop.f32.mrb[0].mxu0
    %v3181 = vadd.f32 %v2885, %v3180
    %v3182 = vpop.f32.mrb[0].mxu0
    %3183 = vmatprep.mubr.f32.mxu0 0.0
    %3184 = vmatmul.mubr.f32.gmra.mrb[0].mxu0 %v3100
    %v3185 = vpop.f32.mrb[0].mxu0
    %v3186 = vadd.f32 %v2890, %v3185
    %v3187 = vpop.f32.mrb[0].mxu0
    %3188 = vdwg.mxu0
    %v3190 = vsel %vm864, %v2848, 0
    %v3193 = vsel %vm864, %v2849, 0
    %v3196 = vsel %vm864, %v2850, 0
    %v3199 = vsel %vm864, %v2851, 0
    %v3201 = vsel %vm864, %v2833, 0
    %3203 = vmatprep.subr.mxu0 0.0
    %3204 = vmatpush1.xpose.msra.mxu0 %v3201
    %3205 = vmatprep.subr.mxu0 0.0
    %3206 = vmatpush1.xpose.msra.mxu0 0.0
    %3207 = vmatprep.subr.mxu0 0.0
    %3208 = vmatpush1.xpose.msra.mxu0 0.0
    %3209 = vmatprep.subr.mxu0 0.0
    %3210 = vmatpush1.xpose.msra.mxu0 0.0
    %3211 = vmatprep.subr.mxu0 0.0
    %3212 = vmatpush1.xpose.msra.mxu0 0.0
    %3213 = vmatprep.subr.mxu0 0.0
    %3214 = vmatpush1.xpose.msra.mxu0 0.0
    %3215 = vmatprep.subr.mxu0 0.0
    %3216 = vmatpush1.xpose.msra.mxu0 0.0
    %3217 = vmatprep.subr.mxu0 0.0
    %3218 = vmatpush1.xpose.msra.mxu0 0.0
    %3219 = vmatprep.subr.mxu0 0.0
    %3220 = vmatpush1.xpose.msra.mxu0 0.0
    %3221 = vmatprep.subr.mxu0 0.0
    %3222 = vmatpush1.xpose.msra.mxu0 0.0
    %3223 = vmatprep.subr.mxu0 0.0
    %3224 = vmatpush1.xpose.msra.mxu0 0.0
    %3225 = vmatprep.subr.mxu0 0.0
    %3226 = vmatpush1.xpose.msra.mxu0 0.0
    %3227 = vmatprep.subr.mxu0 0.0
    %3228 = vmatpush1.xpose.msra.mxu0 0.0
    %3229 = vmatprep.subr.mxu0 0.0
    %3230 = vmatpush1.xpose.msra.mxu0 0.0
    %3231 = vmatprep.subr.mxu0 0.0
    %3232 = vmatpush1.xpose.msra.mxu0 0.0
    %3233 = vmatprep.subr.mxu0 0.0
    %3234 = vmatpush1.xpose.msra.mxu0 0.0
    %3235 = vmatprep.subr.mxu0 0.0
    %3236 = vmatpush1.xpose.msra.mxu0 0.0
    %3237 = vmatprep.subr.mxu0 0.0
    %3238 = vmatpush1.xpose.msra.mxu0 0.0
    %3239 = vmatprep.subr.mxu0 0.0
    %3240 = vmatpush1.xpose.msra.mxu0 0.0
    %3241 = vmatprep.subr.mxu0 0.0
    %3242 = vmatpush1.xpose.msra.mxu0 0.0
    %3243 = vmatprep.subr.mxu0 0.0
    %3244 = vmatpush1.xpose.msra.mxu0 0.0
    %3245 = vmatprep.subr.mxu0 0.0
    %3246 = vmatpush1.xpose.msra.mxu0 0.0
    %3247 = vmatprep.subr.mxu0 0.0
    %3248 = vmatpush1.xpose.msra.mxu0 0.0
    %3249 = vmatprep.subr.mxu0 0.0
    %3250 = vmatpush1.xpose.msra.mxu0 0.0
    %3251 = vmatprep.subr.mxu0 0.0
    %3252 = vmatpush1.xpose.msra.mxu0 0.0
    %3253 = vmatprep.subr.mxu0 0.0
    %3254 = vmatpush1.xpose.msra.mxu0 0.0
    %3255 = vmatprep.subr.mxu0 0.0
    %3256 = vmatpush1.xpose.msra.mxu0 0.0
    %3257 = vmatprep.subr.mxu0 0.0
    %3258 = vmatpush1.xpose.msra.mxu0 0.0
    %3259 = vmatprep.subr.mxu0 0.0
    %3260 = vmatpush1.xpose.msra.mxu0 0.0
    %3261 = vmatprep.subr.mxu0 0.0
    %3262 = vmatpush1.xpose.msra.mxu0 0.0
    %3263 = vmatprep.subr.mxu0 0.0
    %3264 = vmatpush1.xpose.msra.mxu0 0.0
    %3265 = vmatprep.subr.mxu0 0.0
    %3266 = vmatpush1.xpose.msra.mxu0 0.0
    %3267 = vmatprep.mubr.f32.mxu0 0.0
    %3268 = vmatmul.mubr.f32.gmra.mrb[0].mxu0 %v3190
    %v3269 = vpop.f32.mrb[0].mxu0
    %v3270 = vadd.f32 %v2875, %v3269
    %v3271 = vpop.f32.mrb[0].mxu0
    %3272 = vmatprep.mubr.f32.mxu0 0.0
    %3273 = vmatmul.mubr.f32.gmra.mrb[0].mxu0 %v3193
    %v3274 = vpop.f32.mrb[0].mxu0
    %v3275 = vadd.f32 %v2880, %v3274
    %v3276 = vpop.f32.mrb[0].mxu0
    %3277 = vmatprep.mubr.f32.mxu0 0.0
    %3278 = vmatmul.mubr.f32.gmra.mrb[0].mxu0 %v3196
    %v3279 = vpop.f32.mrb[0].mxu0
    %v3280 = vadd.f32 %v2885, %v3279
    %v3281 = vpop.f32.mrb[0].mxu0
    %3282 = vmatprep.mubr.f32.mxu0 0.0
    %3283 = vmatmul.mubr.f32.gmra.mrb[0].mxu0 %v3199
    %v3284 = vpop.f32.mrb[0].mxu0
    %v3285 = vadd.f32 %v2890, %v3284
    %v3286 = vpop.f32.mrb[0].mxu0
    %3287 = vdwg.mxu0
    %v3289 = vsel %vm864, %v2852, 0
    %v3292 = vsel %vm864, %v2853, 0
    %v3295 = vsel %vm864, %v2854, 0
    %v3298 = vsel %vm864, %v2855, 0
    %v3300 = vsel %vm864, %v2826, 0
    %3302 = vmatprep.subr.mxu0 0.0
    %3303 = vmatpush1.xpose.msra.mxu0 %v3300
    %3304 = vmatprep.subr.mxu0 0.0
    %3305 = vmatpush1.xpose.msra.mxu0 0.0
    %3306 = vmatprep.subr.mxu0 0.0
    %3307 = vmatpush1.xpose.msra.mxu0 0.0
    %3308 = vmatprep.subr.mxu0 0.0
    %3309 = vmatpush1.xpose.msra.mxu0 0.0
    %3310 = vmatprep.subr.mxu0 0.0
    %3311 = vmatpush1.xpose.msra.mxu0 0.0
    %3312 = vmatprep.subr.mxu0 0.0
    %3313 = vmatpush1.xpose.msra.mxu0 0.0
    %3314 = vmatprep.subr.mxu0 0.0
    %3315 = vmatpush1.xpose.msra.mxu0 0.0
    %3316 = vmatprep.subr.mxu0 0.0
    %3317 = vmatpush1.xpose.msra.mxu0 0.0
    %3318 = vmatprep.subr.mxu0 0.0
    %3319 = vmatpush1.xpose.msra.mxu0 0.0
    %3320 = vmatprep.subr.mxu0 0.0
    %3321 = vmatpush1.xpose.msra.mxu0 0.0
    %3322 = vmatprep.subr.mxu0 0.0
    %3323 = vmatpush1.xpose.msra.mxu0 0.0
    %3324 = vmatprep.subr.mxu0 0.0
    %3325 = vmatpush1.xpose.msra.mxu0 0.0
    %3326 = vmatprep.subr.mxu0 0.0
    %3327 = vmatpush1.xpose.msra.mxu0 0.0
    %3328 = vmatprep.subr.mxu0 0.0
    %3329 = vmatpush1.xpose.msra.mxu0 0.0
    %3330 = vmatprep.subr.mxu0 0.0
    %3331 = vmatpush1.xpose.msra.mxu0 0.0
    %3332 = vmatprep.subr.mxu0 0.0
    %3333 = vmatpush1.xpose.msra.mxu0 0.0
    %3334 = vmatprep.subr.mxu0 0.0
    %3335 = vmatpush1.xpose.msra.mxu0 0.0
    %3336 = vmatprep.subr.mxu0 0.0
    %3337 = vmatpush1.xpose.msra.mxu0 0.0
    %3338 = vmatprep.subr.mxu0 0.0
    %3339 = vmatpush1.xpose.msra.mxu0 0.0
    %3340 = vmatprep.subr.mxu0 0.0
    %3341 = vmatpush1.xpose.msra.mxu0 0.0
    %3342 = vmatprep.subr.mxu0 0.0
    %3343 = vmatpush1.xpose.msra.mxu0 0.0
    %3344 = vmatprep.subr.mxu0 0.0
    %3345 = vmatpush1.xpose.msra.mxu0 0.0
    %3346 = vmatprep.subr.mxu0 0.0
    %3347 = vmatpush1.xpose.msra.mxu0 0.0
    %3348 = vmatprep.subr.mxu0 0.0
    %3349 = vmatpush1.xpose.msra.mxu0 0.0
    %3350 = vmatprep.subr.mxu0 0.0
    %3351 = vmatpush1.xpose.msra.mxu0 0.0
    %3352 = vmatprep.subr.mxu0 0.0
    %3353 = vmatpush1.xpose.msra.mxu0 0.0
    %3354 = vmatprep.subr.mxu0 0.0
    %3355 = vmatpush1.xpose.msra.mxu0 0.0
    %3356 = vmatprep.subr.mxu0 0.0
    %3357 = vmatpush1.xpose.msra.mxu0 0.0
    %3358 = vmatprep.subr.mxu0 0.0
    %3359 = vmatpush1.xpose.msra.mxu0 0.0
    %3360 = vmatprep.subr.mxu0 0.0
    %3361 = vmatpush1.xpose.msra.mxu0 0.0
    %3362 = vmatprep.subr.mxu0 0.0
    %3363 = vmatpush1.xpose.msra.mxu0 0.0
    %3364 = vmatprep.subr.mxu0 0.0
    %3365 = vmatpush1.xpose.msra.mxu0 0.0
    %3366 = vmatprep.mubr.f32.mxu0 0.0
    %3367 = vmatmul.mubr.f32.gmra.mrb[0].mxu0 %v3289
    %v3368 = vpop.f32.mrb[0].mxu0
    %v3369 = vadd.f32 %v2875, %v3368
    %v3370 = vpop.f32.mrb[0].mxu0
    %3371 = vmatprep.mubr.f32.mxu0 0.0
    %3372 = vmatmul.mubr.f32.gmra.mrb[0].mxu0 %v3292
    %v3373 = vpop.f32.mrb[0].mxu0
    %v3374 = vadd.f32 %v2880, %v3373
    %v3375 = vpop.f32.mrb[0].mxu0
    %3376 = vmatprep.mubr.f32.mxu0 0.0
    %3377 = vmatmul.mubr.f32.gmra.mrb[0].mxu0 %v3295
    %v3378 = vpop.f32.mrb[0].mxu0
    %v3379 = vadd.f32 %v2885, %v3378
    %v3380 = vpop.f32.mrb[0].mxu0
    %3381 = vmatprep.mubr.f32.mxu0 0.0
    %3382 = vmatmul.mubr.f32.gmra.mrb[0].mxu0 %v3298
    %v3383 = vpop.f32.mrb[0].mxu0
    %v3384 = vadd.f32 %v2890, %v3383
    %v3385 = vpop.f32.mrb[0].mxu0
    %3386 = vdwg.mxu0
    %v3388 = vsel %vm864, %v2856, 0
    %v3391 = vsel %vm864, %v2857, 0
    %v3394 = vsel %vm864, %v2858, 0
    %v3397 = vsel %vm864, %v2859, 0
    %v3399 = vsel %vm864, %v2834, 0
    %3401 = vmatprep.subr.mxu0 0.0
    %3402 = vmatpush1.xpose.msra.mxu0 %v3399
    %3403 = vmatprep.subr.mxu0 0.0
    %3404 = vmatpush1.xpose.msra.mxu0 0.0
    %3405 = vmatprep.subr.mxu0 0.0
    %3406 = vmatpush1.xpose.msra.mxu0 0.0
    %3407 = vmatprep.subr.mxu0 0.0
    %3408 = vmatpush1.xpose.msra.mxu0 0.0
    %3409 = vmatprep.subr.mxu0 0.0
    %3410 = vmatpush1.xpose.msra.mxu0 0.0
    %3411 = vmatprep.subr.mxu0 0.0
    %3412 = vmatpush1.xpose.msra.mxu0 0.0
    %3413 = vmatprep.subr.mxu0 0.0
    %3414 = vmatpush1.xpose.msra.mxu0 0.0
    %3415 = vmatprep.subr.mxu0 0.0
    %3416 = vmatpush1.xpose.msra.mxu0 0.0
    %3417 = vmatprep.subr.mxu0 0.0
    %3418 = vmatpush1.xpose.msra.mxu0 0.0
    %3419 = vmatprep.subr.mxu0 0.0
    %3420 = vmatpush1.xpose.msra.mxu0 0.0
    %3421 = vmatprep.subr.mxu0 0.0
    %3422 = vmatpush1.xpose.msra.mxu0 0.0
    %3423 = vmatprep.subr.mxu0 0.0
    %3424 = vmatpush1.xpose.msra.mxu0 0.0
    %3425 = vmatprep.subr.mxu0 0.0
    %3426 = vmatpush1.xpose.msra.mxu0 0.0
    %3427 = vmatprep.subr.mxu0 0.0
    %3428 = vmatpush1.xpose.msra.mxu0 0.0
    %3429 = vmatprep.subr.mxu0 0.0
    %3430 = vmatpush1.xpose.msra.mxu0 0.0
    %3431 = vmatprep.subr.mxu0 0.0
    %3432 = vmatpush1.xpose.msra.mxu0 0.0
    %3433 = vmatprep.subr.mxu0 0.0
    %3434 = vmatpush1.xpose.msra.mxu0 0.0
    %3435 = vmatprep.subr.mxu0 0.0
    %3436 = vmatpush1.xpose.msra.mxu0 0.0
    %3437 = vmatprep.subr.mxu0 0.0
    %3438 = vmatpush1.xpose.msra.mxu0 0.0
    %3439 = vmatprep.subr.mxu0 0.0
    %3440 = vmatpush1.xpose.msra.mxu0 0.0
    %3441 = vmatprep.subr.mxu0 0.0
    %3442 = vmatpush1.xpose.msra.mxu0 0.0
    %3443 = vmatprep.subr.mxu0 0.0
    %3444 = vmatpush1.xpose.msra.mxu0 0.0
    %3445 = vmatprep.subr.mxu0 0.0
    %3446 = vmatpush1.xpose.msra.mxu0 0.0
    %3447 = vmatprep.subr.mxu0 0.0
    %3448 = vmatpush1.xpose.msra.mxu0 0.0
    %3449 = vmatprep.subr.mxu0 0.0
    %3450 = vmatpush1.xpose.msra.mxu0 0.0
    %3451 = vmatprep.subr.mxu0 0.0
    %3452 = vmatpush1.xpose.msra.mxu0 0.0
    %3453 = vmatprep.subr.mxu0 0.0
    %3454 = vmatpush1.xpose.msra.mxu0 0.0
    %3455 = vmatprep.subr.mxu0 0.0
    %3456 = vmatpush1.xpose.msra.mxu0 0.0
    %3457 = vmatprep.subr.mxu0 0.0
    %3458 = vmatpush1.xpose.msra.mxu0 0.0
    %3459 = vmatprep.subr.mxu0 0.0
    %3460 = vmatpush1.xpose.msra.mxu0 0.0
    %3461 = vmatprep.subr.mxu0 0.0
    %3462 = vmatpush1.xpose.msra.mxu0 0.0
    %3463 = vmatprep.subr.mxu0 0.0
    %3464 = vmatpush1.xpose.msra.mxu0 0.0
    %3465 = vmatprep.mubr.f32.mxu0 0.0
    %3466 = vmatmul.mubr.f32.gmra.mrb[0].mxu0 %v3388
    %v3467 = vpop.f32.mrb[0].mxu0
    %v3468 = vadd.f32 %v2875, %v3467
    %v3469 = vpop.f32.mrb[0].mxu0
    %3470 = vmatprep.mubr.f32.mxu0 0.0
    %3471 = vmatmul.mubr.f32.gmra.mrb[0].mxu0 %v3391
    %v3472 = vpop.f32.mrb[0].mxu0
    %v3473 = vadd.f32 %v2880, %v3472
    %v3474 = vpop.f32.mrb[0].mxu0
    %3475 = vmatprep.mubr.f32.mxu0 0.0
    %3476 = vmatmul.mubr.f32.gmra.mrb[0].mxu0 %v3394
    %v3477 = vpop.f32.mrb[0].mxu0
    %v3478 = vadd.f32 %v2885, %v3477
    %v3479 = vpop.f32.mrb[0].mxu0
    %3480 = vmatprep.mubr.f32.mxu0 0.0
    %3481 = vmatmul.mubr.f32.gmra.mrb[0].mxu0 %v3397
    %v3482 = vpop.f32.mrb[0].mxu0
    %v3483 = vadd.f32 %v2890, %v3482
    %v3484 = vpop.f32.mrb[0].mxu0
    %3485 = vdwg.mxu0
    %v3487 = vsel %vm864, %v2860, 0
    %v3490 = vsel %vm864, %v2861, 0
    %v3493 = vsel %vm864, %v2862, 0
    %v3496 = vsel %vm864, %v2863, 0
    %v3498 = vsel %vm864, %v2827, 0
    %3500 = vmatprep.subr.mxu0 0.0
    %3501 = vmatpush1.xpose.msra.mxu0 %v3498
    %3502 = vmatprep.subr.mxu0 0.0
    %3503 = vmatpush1.xpose.msra.mxu0 0.0
    %3504 = vmatprep.subr.mxu0 0.0
    %3505 = vmatpush1.xpose.msra.mxu0 0.0
    %3506 = vmatprep.subr.mxu0 0.0
    %3507 = vmatpush1.xpose.msra.mxu0 0.0
    %3508 = vmatprep.subr.mxu0 0.0
    %3509 = vmatpush1.xpose.msra.mxu0 0.0
    %3510 = vmatprep.subr.mxu0 0.0
    %3511 = vmatpush1.xpose.msra.mxu0 0.0
    %3512 = vmatprep.subr.mxu0 0.0
    %3513 = vmatpush1.xpose.msra.mxu0 0.0
    %3514 = vmatprep.subr.mxu0 0.0
    %3515 = vmatpush1.xpose.msra.mxu0 0.0
    %3516 = vmatprep.subr.mxu0 0.0
    %3517 = vmatpush1.xpose.msra.mxu0 0.0
    %3518 = vmatprep.subr.mxu0 0.0
    %3519 = vmatpush1.xpose.msra.mxu0 0.0
    %3520 = vmatprep.subr.mxu0 0.0
    %3521 = vmatpush1.xpose.msra.mxu0 0.0
    %3522 = vmatprep.subr.mxu0 0.0
    %3523 = vmatpush1.xpose.msra.mxu0 0.0
    %3524 = vmatprep.subr.mxu0 0.0
    %3525 = vmatpush1.xpose.msra.mxu0 0.0
    %3526 = vmatprep.subr.mxu0 0.0
    %3527 = vmatpush1.xpose.msra.mxu0 0.0
    %3528 = vmatprep.subr.mxu0 0.0
    %3529 = vmatpush1.xpose.msra.mxu0 0.0
    %3530 = vmatprep.subr.mxu0 0.0
    %3531 = vmatpush1.xpose.msra.mxu0 0.0
    %3532 = vmatprep.subr.mxu0 0.0
    %3533 = vmatpush1.xpose.msra.mxu0 0.0
    %3534 = vmatprep.subr.mxu0 0.0
    %3535 = vmatpush1.xpose.msra.mxu0 0.0
    %3536 = vmatprep.subr.mxu0 0.0
    %3537 = vmatpush1.xpose.msra.mxu0 0.0
    %3538 = vmatprep.subr.mxu0 0.0
    %3539 = vmatpush1.xpose.msra.mxu0 0.0
    %3540 = vmatprep.subr.mxu0 0.0
    %3541 = vmatpush1.xpose.msra.mxu0 0.0
    %3542 = vmatprep.subr.mxu0 0.0
    %3543 = vmatpush1.xpose.msra.mxu0 0.0
    %3544 = vmatprep.subr.mxu0 0.0
    %3545 = vmatpush1.xpose.msra.mxu0 0.0
    %3546 = vmatprep.subr.mxu0 0.0
    %3547 = vmatpush1.xpose.msra.mxu0 0.0
    %3548 = vmatprep.subr.mxu0 0.0
    %3549 = vmatpush1.xpose.msra.mxu0 0.0
    %3550 = vmatprep.subr.mxu0 0.0
    %3551 = vmatpush1.xpose.msra.mxu0 0.0
    %3552 = vmatprep.subr.mxu0 0.0
    %3553 = vmatpush1.xpose.msra.mxu0 0.0
    %3554 = vmatprep.subr.mxu0 0.0
    %3555 = vmatpush1.xpose.msra.mxu0 0.0
    %3556 = vmatprep.subr.mxu0 0.0
    %3557 = vmatpush1.xpose.msra.mxu0 0.0
    %3558 = vmatprep.subr.mxu0 0.0
    %3559 = vmatpush1.xpose.msra.mxu0 0.0
    %3560 = vmatprep.subr.mxu0 0.0
    %3561 = vmatpush1.xpose.msra.mxu0 0.0
    %3562 = vmatprep.subr.mxu0 0.0
    %3563 = vmatpush1.xpose.msra.mxu0 0.0
    %3564 = vmatprep.mubr.f32.mxu0 0.0
    %3565 = vmatmul.mubr.f32.gmra.mrb[0].mxu0 %v3487
    %v3566 = vpop.f32.mrb[0].mxu0
    %v3567 = vadd.f32 %v2875, %v3566
    %v3568 = vpop.f32.mrb[0].mxu0
    %3569 = vmatprep.mubr.f32.mxu0 0.0
    %3570 = vmatmul.mubr.f32.gmra.mrb[0].mxu0 %v3490
    %v3571 = vpop.f32.mrb[0].mxu0
    %v3572 = vadd.f32 %v2880, %v3571
    %v3573 = vpop.f32.mrb[0].mxu0
    %3574 = vmatprep.mubr.f32.mxu0 0.0
    %3575 = vmatmul.mubr.f32.gmra.mrb[0].mxu0 %v3493
    %v3576 = vpop.f32.mrb[0].mxu0
    %v3577 = vadd.f32 %v2885, %v3576
    %v3578 = vpop.f32.mrb[0].mxu0
    %3579 = vmatprep.mubr.f32.mxu0 0.0
    %3580 = vmatmul.mubr.f32.gmra.mrb[0].mxu0 %v3496
    %v3581 = vpop.f32.mrb[0].mxu0
    %v3582 = vadd.f32 %v2890, %v3581
    %v3583 = vpop.f32.mrb[0].mxu0
    %3584 = vdwg.mxu0
    %v3586 = vsel %vm864, %v2864, 0
    %v3589 = vsel %vm864, %v2865, 0
    %v3592 = vsel %vm864, %v2866, 0
    %v3595 = vsel %vm864, %v2867, 0
    %v3597 = vsel %vm864, %v2835, 0
    %3599 = vmatprep.subr.mxu0 0.0
    %3600 = vmatpush1.xpose.msra.mxu0 %v3597
    %3601 = vmatprep.subr.mxu0 0.0
    %3602 = vmatpush1.xpose.msra.mxu0 0.0
    %3603 = vmatprep.subr.mxu0 0.0
    %3604 = vmatpush1.xpose.msra.mxu0 0.0
    %3605 = vmatprep.subr.mxu0 0.0
    %3606 = vmatpush1.xpose.msra.mxu0 0.0
    %3607 = vmatprep.subr.mxu0 0.0
    %3608 = vmatpush1.xpose.msra.mxu0 0.0
    %3609 = vmatprep.subr.mxu0 0.0
    %3610 = vmatpush1.xpose.msra.mxu0 0.0
    %3611 = vmatprep.subr.mxu0 0.0
    %3612 = vmatpush1.xpose.msra.mxu0 0.0
    %3613 = vmatprep.subr.mxu0 0.0
    %3614 = vmatpush1.xpose.msra.mxu0 0.0
    %3615 = vmatprep.subr.mxu0 0.0
    %3616 = vmatpush1.xpose.msra.mxu0 0.0
    %3617 = vmatprep.subr.mxu0 0.0
    %3618 = vmatpush1.xpose.msra.mxu0 0.0
    %3619 = vmatprep.subr.mxu0 0.0
    %3620 = vmatpush1.xpose.msra.mxu0 0.0
    %3621 = vmatprep.subr.mxu0 0.0
    %3622 = vmatpush1.xpose.msra.mxu0 0.0
    %3623 = vmatprep.subr.mxu0 0.0
    %3624 = vmatpush1.xpose.msra.mxu0 0.0
    %3625 = vmatprep.subr.mxu0 0.0
    %3626 = vmatpush1.xpose.msra.mxu0 0.0
    %3627 = vmatprep.subr.mxu0 0.0
    %3628 = vmatpush1.xpose.msra.mxu0 0.0
    %3629 = vmatprep.subr.mxu0 0.0
    %3630 = vmatpush1.xpose.msra.mxu0 0.0
    %3631 = vmatprep.subr.mxu0 0.0
    %3632 = vmatpush1.xpose.msra.mxu0 0.0
    %3633 = vmatprep.subr.mxu0 0.0
    %3634 = vmatpush1.xpose.msra.mxu0 0.0
    %3635 = vmatprep.subr.mxu0 0.0
    %3636 = vmatpush1.xpose.msra.mxu0 0.0
    %3637 = vmatprep.subr.mxu0 0.0
    %3638 = vmatpush1.xpose.msra.mxu0 0.0
    %3639 = vmatprep.subr.mxu0 0.0
    %3640 = vmatpush1.xpose.msra.mxu0 0.0
    %3641 = vmatprep.subr.mxu0 0.0
    %3642 = vmatpush1.xpose.msra.mxu0 0.0
    %3643 = vmatprep.subr.mxu0 0.0
    %3644 = vmatpush1.xpose.msra.mxu0 0.0
    %3645 = vmatprep.subr.mxu0 0.0
    %3646 = vmatpush1.xpose.msra.mxu0 0.0
    %3647 = vmatprep.subr.mxu0 0.0
    %3648 = vmatpush1.xpose.msra.mxu0 0.0
    %3649 = vmatprep.subr.mxu0 0.0
    %3650 = vmatpush1.xpose.msra.mxu0 0.0
    %3651 = vmatprep.subr.mxu0 0.0
    %3652 = vmatpush1.xpose.msra.mxu0 0.0
    %3653 = vmatprep.subr.mxu0 0.0
    %3654 = vmatpush1.xpose.msra.mxu0 0.0
    %3655 = vmatprep.subr.mxu0 0.0
    %3656 = vmatpush1.xpose.msra.mxu0 0.0
    %3657 = vmatprep.subr.mxu0 0.0
    %3658 = vmatpush1.xpose.msra.mxu0 0.0
    %3659 = vmatprep.subr.mxu0 0.0
    %3660 = vmatpush1.xpose.msra.mxu0 0.0
    %3661 = vmatprep.subr.mxu0 0.0
    %3662 = vmatpush1.xpose.msra.mxu0 0.0
    %3663 = vmatprep.mubr.f32.mxu0 0.0
    %3664 = vmatmul.mubr.f32.gmra.mrb[0].mxu0 %v3586
    %v3665 = vpop.f32.mrb[0].mxu0
    %v3666 = vadd.f32 %v2875, %v3665
    %v3667 = vpop.f32.mrb[0].mxu0
    %3668 = vmatprep.mubr.f32.mxu0 0.0
    %3669 = vmatmul.mubr.f32.gmra.mrb[0].mxu0 %v3589
    %v3670 = vpop.f32.mrb[0].mxu0
    %v3671 = vadd.f32 %v2880, %v3670
    %v3672 = vpop.f32.mrb[0].mxu0
    %3673 = vmatprep.mubr.f32.mxu0 0.0
    %3674 = vmatmul.mubr.f32.gmra.mrb[0].mxu0 %v3592
    %v3675 = vpop.f32.mrb[0].mxu0
    %v3676 = vadd.f32 %v2885, %v3675
    %v3677 = vpop.f32.mrb[0].mxu0
    %3678 = vmatprep.mubr.f32.mxu0 0.0
    %3679 = vmatmul.mubr.f32.gmra.mrb[0].mxu0 %v3595
    %v3680 = vpop.f32.mrb[0].mxu0
    %v3681 = vadd.f32 %v2890, %v3680
    %v3682 = vpop.f32.mrb[0].mxu0
    %3683 = vdwg.mxu0
    %v3684 = vadd.f32 %v2973, %v75
    %v3685 = vadd.f32 %v2978, %v75
    %v3686 = vadd.f32 %v2983, %v75
    %v3687 = vadd.f32 %v2988, %v75
    %v3688 = vadd.f32 %v3072, %v79
    %v3689 = vadd.f32 %v3077, %v79
    %v3690 = vadd.f32 %v3082, %v79
    %v3691 = vadd.f32 %v3087, %v79
    %v3692 = vadd.f32 %v3171, %v83
    %v3693 = vadd.f32 %v3176, %v83
    %v3694 = vadd.f32 %v3181, %v83
    %v3695 = vadd.f32 %v3186, %v83
    %v3696 = vadd.f32 %v3270, %v87
    %v3697 = vadd.f32 %v3275, %v87
    %v3698 = vadd.f32 %v3280, %v87
    %v3699 = vadd.f32 %v3285, %v87
    %v3700 = vadd.f32 %v3369, %v91
    %v3701 = vadd.f32 %v3374, %v91
    %v3702 = vadd.f32 %v3379, %v91
    %v3703 = vadd.f32 %v3384, %v91
    %v3704 = vadd.f32 %v3468, %v95
    %v3705 = vadd.f32 %v3473, %v95
    %v3706 = vadd.f32 %v3478, %v95
    %v3707 = vadd.f32 %v3483, %v95
    %v3708 = vadd.f32 %v3567, %v99
    %v3709 = vadd.f32 %v3572, %v99
    %v3710 = vadd.f32 %v3577, %v99
    %v3711 = vadd.f32 %v3582, %v99
    %v3712 = vadd.f32 %v3666, %v103
    %v3713 = vadd.f32 %v3671, %v103
    %v3714 = vadd.f32 %v3676, %v103
    %v3715 = vadd.f32 %v3681, %v103
    %3716 = vst.msk [vmem:[%s7] sm:$0xff] %vm144, %v3684
    %3717 = vst.msk [vmem:[%s7 + $0x8] sm:$0xff] %vm144, %v3685
    %3718 = vst.msk [vmem:[%s7 + $0x10] sm:$0xff] %vm144, %v3686
    %3719 = vst.msk [vmem:[%s7 + $0x18] sm:$0xff] %vm144, %v3687
    %3720 = vst.msk [vmem:[%s7 + $0x20] sm:$0xff] %vm144, %v3688
    %3721 = vst.msk [vmem:[%s7 + $0x28] sm:$0xff] %vm144, %v3689
    %3722 = vst.msk [vmem:[%s7 + $0x30] sm:$0xff] %vm144, %v3690
    %3723 = vst.msk [vmem:[%s7 + $0x38] sm:$0xff] %vm144, %v3691
    %3724 = vst.msk [vmem:[%s7 + $0x40] sm:$0xff] %vm144, %v3692
    %3725 = vst.msk [vmem:[%s7 + $0x48] sm:$0xff] %vm144, %v3693
    %3726 = vst.msk [vmem:[%s7 + $0x50] sm:$0xff] %vm144, %v3694
    %3727 = vst.msk [vmem:[%s7 + $0x58] sm:$0xff] %vm144, %v3695
    %3728 = vst.msk [vmem:[%s7 + $0x60] sm:$0xff] %vm144, %v3696
    %3729 = vst.msk [vmem:[%s7 + $0x68] sm:$0xff] %vm144, %v3697
    %3730 = vst.msk [vmem:[%s7 + $0x70] sm:$0xff] %vm144, %v3698
    %3731 = vst.msk [vmem:[%s7 + $0x78] sm:$0xff] %vm144, %v3699
    %3732 = vst.msk [vmem:[%s7 + $0x80] sm:$0xff] %vm144, %v3700
    %3733 = vst.msk [vmem:[%s7 + $0x88] sm:$0xff] %vm144, %v3701
    %3734 = vst.msk [vmem:[%s7 + $0x90] sm:$0xff] %vm144, %v3702
    %3735 = vst.msk [vmem:[%s7 + $0x98] sm:$0xff] %vm144, %v3703
    %3736 = vst.msk [vmem:[%s7 + $0xa0] sm:$0xff] %vm144, %v3704
    %3737 = vst.msk [vmem:[%s7 + $0xa8] sm:$0xff] %vm144, %v3705
    %3738 = vst.msk [vmem:[%s7 + $0xb0] sm:$0xff] %vm144, %v3706
    %3739 = vst.msk [vmem:[%s7 + $0xb8] sm:$0xff] %vm144, %v3707
    %3740 = vst.msk [vmem:[%s7 + $0xc0] sm:$0xff] %vm144, %v3708
    %3741 = vst.msk [vmem:[%s7 + $0xc8] sm:$0xff] %vm144, %v3709
    %3742 = vst.msk [vmem:[%s7 + $0xd0] sm:$0xff] %vm144, %v3710
    %3743 = vst.msk [vmem:[%s7 + $0xd8] sm:$0xff] %vm144, %v3711
    %3744 = vst.msk [vmem:[%s7 + $0xe0] sm:$0xff] %vm144, %v3712
    %3745 = vst.msk [vmem:[%s7 + $0xe8] sm:$0xff] %vm144, %v3713
    %3746 = vst.msk [vmem:[%s7 + $0xf0] sm:$0xff] %vm144, %v3714
    %3747 = vst.msk [vmem:[%s7 + $0xf8] sm:$0xff] %vm144, %v3715
    // Predicated region
    $region34: #{transformers_forward.1} parent=1 // pred_check
      _
    $region35: #{transformers_forward.1} parent=1 // pred_check_branch
      %3749 = sbr.rel (0) target = $region37
    $region36: #{transformers_forward.1} parent=1 // pred_region
      _
    $region37: #{transformers_forward.1} parent=1 // pred_fallthru
      _
    // Predicated region
    $region38: #{transformers_forward.1} parent=1 // pred_check
      _
    $region39: #{transformers_forward.1} parent=1 // pred_check_branch
      %3751 = sbr.rel (0) target = $region41
    $region40: #{transformers_forward.1} parent=1 // pred_region
      _
    $region41: #{transformers_forward.1} parent=1 // pred_fallthru
      _
    %3752 = vsyncpa [#allocation7], 1

</llo_original>
